<compile_context>
chip_gen: v7x
topology: tpu7x:2x2x1
jax: 0.10.0
libtpu: 0.0.40
codegen_flags: <defaults>
</compile_context>

<pallas_src>
import functools

import jax
import jax.numpy as jnp
from jax.experimental import pallas as pl
from jax.experimental.pallas import tpu as pltpu

USE_BF16_MATMUL = True                                   # bf16 MXU operands, f32 accumulation
CDT = jnp.bfloat16 if USE_BF16_MATMUL else jnp.float32   # matmul operand / activation dtype


def _round_up(x, m):
    return (x + m - 1) // m * m


# ----------------------------------------------------------------------------
# Kernel 1: fused dense-contraction conv + bias + ReLU + 2x2/2 max-pool.
# ----------------------------------------------------------------------------
def _conv_relu_pool_kernel(x_ref, w_ref, b_ref, o_ref, acc_ref, vm_ref, *, wo, pp, n_chunks):
    """One image.

    x_ref  : (1, Ho*Wo, Kc)   im2col'd input, row = h*Wo + w, lanes (kh,kw,cin) zero-padded
    w_ref  : (Kc, 128)        weight rows (kh,kw,cin), cols = Cout zero-padded to 128
    b_ref  : (1, 128)         bias (f32), zero-padded
    o_ref  : (1, Po*Qo, 128)  pooled output, row = ph*Qo + pw, lanes = Cout (zero-padded)
    acc_ref: VMEM (2*pp*wo, 128) f32   chunk-local conv accumulator
    vm_ref : VMEM (pp*wo, 128) f32     vertical-max intermediate
    """
    qo = wo // 2
    rows = 2 * pp * wo            # conv rows per chunk: 2*pp conv output rows of width wo
    out_rows = pp * qo            # pooled rows * pooled width per chunk
    w = w_ref[...]                                                     # resident across chunks
    bias = jnp.broadcast_to(b_ref[...], (out_rows, 128))               # hoisted out of the loop

    for t in range(n_chunks):
        # One lane-dense matmul for this chunk (contraction = 128/256, all real taps).
        acc_ref[pl.ds(0, rows), :] = jnp.dot(
            x_ref[0, pl.ds(t * rows, rows), :], w,
            preferred_element_type=jnp.float32)
        # Vertical 2x1 max of conv-row pairs: contiguous reads.
        for j in range(pp):
            vm_ref[pl.ds(j * wo, wo), :] = jnp.maximum(
                acc_ref[pl.ds((2 * j) * wo, wo), :],
                acc_ref[pl.ds((2 * j + 1) * wo, wo), :])
        # Horizontal 1x2 max: a single stride-2 decimation pass.
        m = jnp.maximum(vm_ref[pl.ds(0, out_rows, 2), :],
                        vm_ref[pl.ds(1, out_rows, 2), :])
        # Bias + ReLU on the pooled values (valid: +bias and ReLU are monotone).
        o_ref[0, pl.ds(t * out_rows, out_rows), :] = (
            jnp.maximum(m + bias, 0.0).astype(o_ref.dtype))


def conv_relu_pool(x_cols, w, b, *, wo, pp, out_dtype):
    """x_cols: (B, Ho*Wo, Kc) im2col'd; returns (B, (Ho//2)*(Wo//2), 128)."""
    B, n_rows, kc = x_cols.shape
    ho = n_rows // wo
    po, qo = ho // 2, wo // 2
    assert ho % (2 * pp) == 0 and wo % 2 == 0
    n_chunks = ho // (2 * pp)
    kernel = functools.partial(_conv_relu_pool_kernel, wo=wo, pp=pp, n_chunks=n_chunks)
    return pl.pallas_call(
        kernel,
        out_shape=jax.ShapeDtypeStruct((B, po * qo, 128), out_dtype),
        grid=(B,),
        in_specs=[
            pl.BlockSpec((1, n_rows, kc), lambda bb: (bb, 0, 0)),
            pl.BlockSpec((kc, 128), lambda bb: (0, 0)),
            pl.BlockSpec((1, 128), lambda bb: (0, 0)),
        ],
        out_specs=pl.BlockSpec((1, po * qo, 128), lambda bb: (bb, 0, 0)),
        scratch_shapes=[
            pltpu.VMEM((_round_up(2 * pp * wo, 8), 128), jnp.float32),
            pltpu.VMEM((_round_up(pp * wo, 8), 128), jnp.float32),
        ],
        compiler_params=pltpu.CompilerParams(dimension_semantics=("parallel",)),
    )(x_cols, w, b)


# ----------------------------------------------------------------------------
# Kernel 2: fused fc1 -> ReLU -> fc2 -> ReLU -> fc3 (weights VMEM-resident).
# ----------------------------------------------------------------------------
def _fc_stack_kernel(x_ref, w1_ref, b1_ref, w2_ref, b2_ref, w3_ref, b3_ref, o_ref):
    def dense(h, w_ref, b_ref, relu):
        y = jnp.dot(h.astype(w_ref.dtype), w_ref[...],
                    preferred_element_type=jnp.float32) + b_ref[...]
        return jnp.maximum(y, 0.0) if relu else y

    h = dense(x_ref[...], w1_ref, b1_ref, True)
    h = dense(h, w2_ref, b2_ref, True)
    o_ref[...] = dense(h, w3_ref, b3_ref, False).astype(o_ref.dtype)


def fc_stack(x, w1, b1, w2, b2, w3, b3):
    B, kin = x.shape
    bm = min(128, _round_up(B, 8))          # never a whole-batch block for large B
    bp = _round_up(B, bm)
    if bp != B:
        x = jnp.pad(x, ((0, bp - B), (0, 0)))
    out = pl.pallas_call(
        _fc_stack_kernel,
        out_shape=jax.ShapeDtypeStruct((bp, 128), jnp.float32),
        grid=(bp // bm,),
        in_specs=[
            pl.BlockSpec((bm, kin), lambda i: (i, 0)),
            pl.BlockSpec((kin, 128), lambda i: (0, 0)),
            pl.BlockSpec((1, 128), lambda i: (0, 0)),
            pl.BlockSpec((128, 128), lambda i: (0, 0)),
            pl.BlockSpec((1, 128), lambda i: (0, 0)),
            pl.BlockSpec((128, 128), lambda i: (0, 0)),
            pl.BlockSpec((1, 128), lambda i: (0, 0)),
        ],
        out_specs=pl.BlockSpec((bm, 128), lambda i: (i, 0)),
        compiler_params=pltpu.CompilerParams(dimension_semantics=("parallel",)),
    )(x, w1, b1, w2, b2, w3, b3)
    return out[:B]


# ----------------------------------------------------------------------------
# Parameter init (PyTorch default layout / init) and one-time re-layout.
# ----------------------------------------------------------------------------
def init_params(key):
    ks = jax.random.split(key, 10)

    def unif(k, shape, fan_in):
        bound = 1.0 / jnp.sqrt(fan_in)
        return jax.random.uniform(k, shape, jnp.float32, -bound, bound)

    return {
        "conv1_w": unif(ks[0], (6, 3, 5, 5), 3 * 5 * 5),
        "conv1_b": unif(ks[1], (6,), 3 * 5 * 5),
        "conv2_w": unif(ks[2], (16, 6, 5, 5), 6 * 5 * 5),
        "conv2_b": unif(ks[3], (16,), 6 * 5 * 5),
        "fc1_w": unif(ks[4], (120, 400), 400),       # PyTorch (out, in)
        "fc1_b": unif(ks[5], (120,), 400),
        "fc2_w": unif(ks[6], (84, 120), 120),
        "fc2_b": unif(ks[7], (84,), 120),
        "fc3_w": unif(ks[8], (10, 84), 84),
        "fc3_b": unif(ks[9], (10,), 84),
    }


def prepare_params(p):
    """One-time PyTorch-layout -> kernel-layout conversion (done OUTSIDE jit)."""
    def pbias(b):
        return jnp.pad(b, (0, 128 - b.shape[0])).reshape(1, 128).astype(jnp.float32)

    # conv1: (Cout=6,Cin=3,5,5) -> rows (kh,kw,cin)=75 pad 128, cols Cout pad 128.
    c1 = jnp.transpose(p["conv1_w"], (2, 3, 1, 0)).reshape(75, 6)
    c1 = jnp.pad(c1, ((0, 128 - 75), (0, 128 - 6)))

    # conv2: (16,6,5,5) -> rows (kh,kw,c8)=200 pad 256, cols Cout=16 pad 128.
    c2 = jnp.transpose(p["conv2_w"], (2, 3, 1, 0))                       # (5,5,6,16)
    c2 = jnp.pad(c2, ((0, 0), (0, 0), (0, 2), (0, 128 - 16))).reshape(200, 128)
    c2 = jnp.pad(c2, ((0, 256 - 200), (0, 0)))

    # fc1: fold torch.flatten(NCHW): torch in-index c*25 + h*5 + w ->
    # our activation index (h*5 + w)*16 + c;  pad 400 -> 512, 120 -> 128.
    f1 = p["fc1_w"].reshape(120, 16, 5, 5)
    f1 = jnp.transpose(f1, (2, 3, 1, 0)).reshape(400, 120)
    f1 = jnp.pad(f1, ((0, 512 - 400), (0, 128 - 120)))
    f2 = jnp.pad(p["fc2_w"].T, ((0, 128 - 120), (0, 128 - 84)))
    f3 = jnp.pad(p["fc3_w"].T, ((0, 128 - 84), (0, 128 - 10)))

    return {
        "c1_w": c1.astype(CDT), "c1_b": pbias(p["conv1_b"]),
        "c2_w": c2.astype(CDT), "c2_b": pbias(p["conv2_b"]),
        "f1_w": f1.astype(CDT), "f1_b": pbias(p["fc1_b"]),
        "f2_w": f2.astype(CDT), "f2_b": pbias(p["fc2_b"]),
        "f3_w": f3.astype(CDT), "f3_b": pbias(p["fc3_b"]),
    }


# ----------------------------------------------------------------------------
# Forward pass (matches Net.forward)
# ----------------------------------------------------------------------------
def _im2col(x_nhwc, k, lanes):
    """Valid-conv im2col: (B,H,W,C) -> (B, Ho*Wo, lanes) with row = h*Wo + w and
    lane order (kh, kw, c), zero-padded to `lanes`.  Plain XLA, tiny tensors."""
    B, H, W, C = x_nhwc.shape
    ho, wo = H - k + 1, W - k + 1
    cols = jnp.concatenate(
        [x_nhwc[:, kh:kh + ho, kw:kw + wo, :] for kh in range(k) for kw in range(k)],
        axis=-1).reshape(B, ho * wo, k * k * C)
    return jnp.pad(cols, ((0, 0), (0, 0), (0, lanes - k * k * C)))


@jax.jit
def net_forward(prep, x_nchw):
    B = x_nchw.shape[0]
    x = jnp.transpose(x_nchw, (0, 2, 3, 1)).astype(CDT)                      # (B,32,32,3)

    # conv1 + ReLU + pool : contraction 75 -> 128, output 28x28 -> 14x14
    x = _im2col(x, 5, 128)                                                   # (B,784,128)
    x = conv_relu_pool(x, prep["c1_w"], prep["c1_b"], wo=28, pp=2, out_dtype=CDT)
    x = x.reshape(B, 14, 14, 128)[..., :8]                                   # (B,14,14,8)

    # conv2 + ReLU + pool : contraction 150 -> 256, output 10x10 -> 5x5
    x = _im2col(x, 5, 256)                                                   # (B,100,256)
    x = conv_relu_pool(x, prep["c2_w"], prep["c2_b"], wo=10, pp=5, out_dtype=jnp.float32)
    x = x[:, :, :16].reshape(B, 400)                                         # row = h*5+w, lane = c

    # fc1 -> ReLU -> fc2 -> ReLU -> fc3 (flatten already folded into f1_w)
    x = jnp.pad(x, ((0, 0), (0, 512 - 400))).astype(CDT)                     # (B,512)
    logits = fc_stack(x, prep["f1_w"], prep["f1_b"], prep["f2_w"], prep["f2_b"],
                      prep["f3_w"], prep["f3_b"])                            # (B,128) f32
    return logits[:, :10]


# ----------------------------------------------------------------------------
# Pure-JAX reference (mirrors the PyTorch module) for a self-check.
# ----------------------------------------------------------------------------
def _reference_forward(p, x):
    def conv_relu(x, w, b):
        y = jax.lax.conv_general_dilated(
            x, w, window_strides=(1, 1), padding="VALID",
            dimension_numbers=("NCHW", "OIHW", "NCHW"))
        return jnp.maximum(y + b[None, :, None, None], 0.0)

    def pool(x):
        B, C, H, W = x.shape
        return x.reshape(B, C, H // 2, 2, W // 2, 2).max(axis=(3, 5))

    x = pool(conv_relu(x, p["conv1_w"], p["conv1_b"]))
    x = pool(conv_relu(x, p["conv2_w"], p["conv2_b"]))
    x = x.reshape(x.shape[0], -1)
    x = jnp.maximum(x @ p["fc1_w"].T + p["fc1_b"], 0.0)
    x = jnp.maximum(x @ p["fc2_w"].T + p["fc2_b"], 0.0)
    return x @ p["fc3_w"].T + p["fc3_b"]


if __name__ == "__main__":
    key = jax.random.PRNGKey(0)
    pkey, xkey = jax.random.split(key)
    raw_params = init_params(pkey)
    prep = prepare_params(raw_params)     # one-time weight re-layout / bf16 pre-cast

    # fc1 = Linear(16*5*5, ...) forces 32x32 spatial input (CIFAR size).
    x = jax.random.normal(xkey, (2, 3, 32, 32), dtype=jnp.float32)

    out = jax.block_until_ready(net_forward(prep, x))
    assert out.shape == (2, 10) and out.dtype == jnp.float32

    ref = _reference_forward(raw_params, x)
    err = float(jnp.max(jnp.abs(out - ref)))
    assert err < 3e-2, f"max abs error vs reference: {err}"   # bf16-operand tolerance

    print("KERNEL_OK")
</pallas_src>

<mosaic_0001>
module attributes {stable_mosaic.version = 11 : i64} {
  func.func @_conv_relu_pool_kernel(%arg0: i32, %arg1: memref<1x784x128xbf16, #tpu.memory_space<vmem>>, %arg2: memref<128x128xbf16, #tpu.memory_space<vmem>>, %arg3: memref<1x128xf32, #tpu.memory_space<vmem>>, %arg4: memref<1x196x128xbf16, #tpu.memory_space<vmem>>, %arg5: memref<112x128xf32, #tpu.memory_space<vmem>>, %arg6: memref<56x128xf32, #tpu.memory_space<vmem>>) attributes {dimension_semantics = [#tpu.dimension_semantics<parallel>], iteration_bounds = array<i64: 2>, scalar_prefetch = 0 : i64, scratch_operands = 2 : i64, tpu.core_type = #tpu.core_type<tc>, window_params = [{transform_indices = @transform_0, window_bounds = array<i64: 1, 784, 128>}, {pipeline_mode = #tpu.pipeline_mode<synchronous>, transform_indices = @transform_1, window_bounds = array<i64: 128, 128>}, {pipeline_mode = #tpu.pipeline_mode<synchronous>, transform_indices = @transform_2, window_bounds = array<i64: 1, 128>}, {transform_indices = @transform_3, window_bounds = array<i64: 1, 196, 128>}]} {
    %c0 = arith.constant 0 : index
    %c0_0 = arith.constant 0 : index
    %0 = vector.load %arg2[%c0, %c0_0] : memref<128x128xbf16, #tpu.memory_space<vmem>>, vector<128x128xbf16>
    %c0_1 = arith.constant 0 : index
    %c0_2 = arith.constant 0 : index
    %1 = vector.load %arg3[%c0_1, %c0_2] : memref<1x128xf32, #tpu.memory_space<vmem>>, vector<1x128xf32>
    %2 = vector.shape_cast %1 : vector<1x128xf32> to vector<1x128xf32>
    %3 = vector.broadcast %2 : vector<1x128xf32> to vector<28x128xf32>
    %c0_3 = arith.constant 0 : index
    %c0_4 = arith.constant 0 : index
    %c0_5 = arith.constant 0 : index
    %4 = vector.load %arg1[%c0_3, %c0_4, %c0_5] : memref<1x784x128xbf16, #tpu.memory_space<vmem>>, vector<1x112x128xbf16>
    %5 = vector.shape_cast %4 : vector<1x112x128xbf16> to vector<112x128xbf16>
    %cst = arith.constant dense<0.000000e+00> : vector<112x128xf32>
    %6 = tpu.matmul %5, %0, %cst {dimension_numbers = #tpu.dot_dimension_numbers<[1], [0], [0], [1], [0, 0, 1, 1], [], []>} : vector<112x128xbf16>, vector<128x128xbf16>, vector<112x128xf32> -> vector<112x128xf32>
    %c0_6 = arith.constant 0 : index
    %c0_7 = arith.constant 0 : index
    %7 = vector.load %arg5[%c0_6, %c0_7] : memref<112x128xf32, #tpu.memory_space<vmem>>, vector<112x128xf32>
    tpu.vector_store %arg5[%c0_6, %c0_7], %6 {strides = array<i32>} : memref<112x128xf32, #tpu.memory_space<vmem>>, vector<112x128xf32>,
    %c0_8 = arith.constant 0 : index
    %c0_9 = arith.constant 0 : index
    %8 = vector.load %arg5[%c0_8, %c0_9] : memref<112x128xf32, #tpu.memory_space<vmem>>, vector<28x128xf32>
    %c28 = arith.constant 28 : index
    %c0_10 = arith.constant 0 : index
    %9 = vector.load %arg5[%c28, %c0_10] : memref<112x128xf32, #tpu.memory_space<vmem>>, vector<28x128xf32>
    %10 = arith.maximumf %8, %9 : vector<28x128xf32>
    %c0_11 = arith.constant 0 : index
    %c0_12 = arith.constant 0 : index
    %11 = vector.load %arg6[%c0_11, %c0_12] : memref<56x128xf32, #tpu.memory_space<vmem>>, vector<28x128xf32>
    tpu.vector_store %arg6[%c0_11, %c0_12], %10 {strides = array<i32>} : memref<56x128xf32, #tpu.memory_space<vmem>>, vector<28x128xf32>,
    %c56 = arith.constant 56 : index
    %c0_13 = arith.constant 0 : index
    %12 = vector.load %arg5[%c56, %c0_13] : memref<112x128xf32, #tpu.memory_space<vmem>>, vector<28x128xf32>
    %c84 = arith.constant 84 : index
    %c0_14 = arith.constant 0 : index
    %13 = vector.load %arg5[%c84, %c0_14] : memref<112x128xf32, #tpu.memory_space<vmem>>, vector<28x128xf32>
    %14 = arith.maximumf %12, %13 : vector<28x128xf32>
    %c28_15 = arith.constant 28 : index
    %c0_16 = arith.constant 0 : index
    %15 = vector.load %arg6[%c28_15, %c0_16] : memref<56x128xf32, #tpu.memory_space<vmem>>, vector<28x128xf32>
    tpu.vector_store %arg6[%c28_15, %c0_16], %14 {strides = array<i32>} : memref<56x128xf32, #tpu.memory_space<vmem>>, vector<28x128xf32>,
    %c0_17 = arith.constant 0 : index
    %c0_18 = arith.constant 0 : index
    %16 = tpu.strided_load %arg6[%c0_17, %c0_18] {strides = array<i32: 2, 1>} : memref<56x128xf32, #tpu.memory_space<vmem>>, vector<28x128xf32>
    %c1 = arith.constant 1 : index
    %c0_19 = arith.constant 0 : index
    %17 = tpu.strided_load %arg6[%c1, %c0_19] {strides = array<i32: 2, 1>} : memref<56x128xf32, #tpu.memory_space<vmem>>, vector<28x128xf32>
    %18 = arith.maximumf %16, %17 : vector<28x128xf32>
    %19 = arith.addf %18, %3 : vector<28x128xf32>
    %cst_20 = arith.constant 0.000000e+00 : f32
    %20 = vector.broadcast %cst_20 : f32 to vector<28x128xf32>
    %21 = arith.maximumf %19, %20 : vector<28x128xf32>
    %22 = arith.truncf %21 : vector<28x128xf32> to vector<28x128xbf16>
    %c0_21 = arith.constant 0 : index
    %c0_22 = arith.constant 0 : index
    %c0_23 = arith.constant 0 : index
    %23 = vector.load %arg4[%c0_21, %c0_22, %c0_23] : memref<1x196x128xbf16, #tpu.memory_space<vmem>>, vector<1x28x128xbf16>
    %24 = vector.shape_cast %23 : vector<1x28x128xbf16> to vector<28x128xbf16>
    %25 = vector.shape_cast %22 : vector<28x128xbf16> to vector<1x28x128xbf16>
    tpu.vector_store %arg4[%c0_21, %c0_22, %c0_23], %25 {strides = array<i32>} : memref<1x196x128xbf16, #tpu.memory_space<vmem>>, vector<1x28x128xbf16>,
    %c0_24 = arith.constant 0 : index
    %c112 = arith.constant 112 : index
    %c0_25 = arith.constant 0 : index
    %26 = vector.load %arg1[%c0_24, %c112, %c0_25] : memref<1x784x128xbf16, #tpu.memory_space<vmem>>, vector<1x112x128xbf16>
    %27 = vector.shape_cast %26 : vector<1x112x128xbf16> to vector<112x128xbf16>
    %cst_26 = arith.constant dense<0.000000e+00> : vector<112x128xf32>
    %28 = tpu.matmul %27, %0, %cst_26 {dimension_numbers = #tpu.dot_dimension_numbers<[1], [0], [0], [1], [0, 0, 1, 1], [], []>} : vector<112x128xbf16>, vector<128x128xbf16>, vector<112x128xf32> -> vector<112x128xf32>
    %c0_27 = arith.constant 0 : index
    %c0_28 = arith.constant 0 : index
    %29 = vector.load %arg5[%c0_27, %c0_28] : memref<112x128xf32, #tpu.memory_space<vmem>>, vector<112x128xf32>
    tpu.vector_store %arg5[%c0_27, %c0_28], %28 {strides = array<i32>} : memref<112x128xf32, #tpu.memory_space<vmem>>, vector<112x128xf32>,
    %c0_29 = arith.constant 0 : index
    %c0_30 = arith.constant 0 : index
    %30 = vector.load %arg5[%c0_29, %c0_30] : memref<112x128xf32, #tpu.memory_space<vmem>>, vector<28x128xf32>
    %c28_31 = arith.constant 28 : index
    %c0_32 = arith.constant 0 : index
    %31 = vector.load %arg5[%c28_31, %c0_32] : memref<112x128xf32, #tpu.memory_space<vmem>>, vector<28x128xf32>
    %32 = arith.maximumf %30, %31 : vector<28x128xf32>
    %c0_33 = arith.constant 0 : index
    %c0_34 = arith.constant 0 : index
    %33 = vector.load %arg6[%c0_33, %c0_34] : memref<56x128xf32, #tpu.memory_space<vmem>>, vector<28x128xf32>
    tpu.vector_store %arg6[%c0_33, %c0_34], %32 {strides = array<i32>} : memref<56x128xf32, #tpu.memory_space<vmem>>, vector<28x128xf32>,
    %c56_35 = arith.constant 56 : index
    %c0_36 = arith.constant 0 : index
    %34 = vector.load %arg5[%c56_35, %c0_36] : memref<112x128xf32, #tpu.memory_space<vmem>>, vector<28x128xf32>
    %c84_37 = arith.constant 84 : index
    %c0_38 = arith.constant 0 : index
    %35 = vector.load %arg5[%c84_37, %c0_38] : memref<112x128xf32, #tpu.memory_space<vmem>>, vector<28x128xf32>
    %36 = arith.maximumf %34, %35 : vector<28x128xf32>
    %c28_39 = arith.constant 28 : index
    %c0_40 = arith.constant 0 : index
    %37 = vector.load %arg6[%c28_39, %c0_40] : memref<56x128xf32, #tpu.memory_space<vmem>>, vector<28x128xf32>
    tpu.vector_store %arg6[%c28_39, %c0_40], %36 {strides = array<i32>} : memref<56x128xf32, #tpu.memory_space<vmem>>, vector<28x128xf32>,
    %c0_41 = arith.constant 0 : index
    %c0_42 = arith.constant 0 : index
    %38 = tpu.strided_load %arg6[%c0_41, %c0_42] {strides = array<i32: 2, 1>} : memref<56x128xf32, #tpu.memory_space<vmem>>, vector<28x128xf32>
    %c1_43 = arith.constant 1 : index
    %c0_44 = arith.constant 0 : index
    %39 = tpu.strided_load %arg6[%c1_43, %c0_44] {strides = array<i32: 2, 1>} : memref<56x128xf32, #tpu.memory_space<vmem>>, vector<28x128xf32>
    %40 = arith.maximumf %38, %39 : vector<28x128xf32>
    %41 = arith.addf %40, %3 : vector<28x128xf32>
    %cst_45 = arith.constant 0.000000e+00 : f32
    %42 = vector.broadcast %cst_45 : f32 to vector<28x128xf32>
    %43 = arith.maximumf %41, %42 : vector<28x128xf32>
    %44 = arith.truncf %43 : vector<28x128xf32> to vector<28x128xbf16>
    %c0_46 = arith.constant 0 : index
    %c28_47 = arith.constant 28 : index
    %c0_48 = arith.constant 0 : index
    %45 = vector.load %arg4[%c0_46, %c28_47, %c0_48] : memref<1x196x128xbf16, #tpu.memory_space<vmem>>, vector<1x28x128xbf16>
    %46 = vector.shape_cast %45 : vector<1x28x128xbf16> to vector<28x128xbf16>
    %47 = vector.shape_cast %44 : vector<28x128xbf16> to vector<1x28x128xbf16>
    tpu.vector_store %arg4[%c0_46, %c28_47, %c0_48], %47 {strides = array<i32>} : memref<1x196x128xbf16, #tpu.memory_space<vmem>>, vector<1x28x128xbf16>,
    %c0_49 = arith.constant 0 : index
    %c224 = arith.constant 224 : index
    %c0_50 = arith.constant 0 : index
    %48 = vector.load %arg1[%c0_49, %c224, %c0_50] : memref<1x784x128xbf16, #tpu.memory_space<vmem>>, vector<1x112x128xbf16>
    %49 = vector.shape_cast %48 : vector<1x112x128xbf16> to vector<112x128xbf16>
    %cst_51 = arith.constant dense<0.000000e+00> : vector<112x128xf32>
    %50 = tpu.matmul %49, %0, %cst_51 {dimension_numbers = #tpu.dot_dimension_numbers<[1], [0], [0], [1], [0, 0, 1, 1], [], []>} : vector<112x128xbf16>, vector<128x128xbf16>, vector<112x128xf32> -> vector<112x128xf32>
    %c0_52 = arith.constant 0 : index
    %c0_53 = arith.constant 0 : index
    %51 = vector.load %arg5[%c0_52, %c0_53] : memref<112x128xf32, #tpu.memory_space<vmem>>, vector<112x128xf32>
    tpu.vector_store %arg5[%c0_52, %c0_53], %50 {strides = array<i32>} : memref<112x128xf32, #tpu.memory_space<vmem>>, vector<112x128xf32>,
    %c0_54 = arith.constant 0 : index
    %c0_55 = arith.constant 0 : index
    %52 = vector.load %arg5[%c0_54, %c0_55] : memref<112x128xf32, #tpu.memory_space<vmem>>, vector<28x128xf32>
    %c28_56 = arith.constant 28 : index
    %c0_57 = arith.constant 0 : index
    %53 = vector.load %arg5[%c28_56, %c0_57] : memref<112x128xf32, #tpu.memory_space<vmem>>, vector<28x128xf32>
    %54 = arith.maximumf %52, %53 : vector<28x128xf32>
    %c0_58 = arith.constant 0 : index
    %c0_59 = arith.constant 0 : index
    %55 = vector.load %arg6[%c0_58, %c0_59] : memref<56x128xf32, #tpu.memory_space<vmem>>, vector<28x128xf32>
    tpu.vector_store %arg6[%c0_58, %c0_59], %54 {strides = array<i32>} : memref<56x128xf32, #tpu.memory_space<vmem>>, vector<28x128xf32>,
    %c56_60 = arith.constant 56 : index
    %c0_61 = arith.constant 0 : index
    %56 = vector.load %arg5[%c56_60, %c0_61] : memref<112x128xf32, #tpu.memory_space<vmem>>, vector<28x128xf32>
    %c84_62 = arith.constant 84 : index
    %c0_63 = arith.constant 0 : index
    %57 = vector.load %arg5[%c84_62, %c0_63] : memref<112x128xf32, #tpu.memory_space<vmem>>, vector<28x128xf32>
    %58 = arith.maximumf %56, %57 : vector<28x128xf32>
    %c28_64 = arith.constant 28 : index
    %c0_65 = arith.constant 0 : index
    %59 = vector.load %arg6[%c28_64, %c0_65] : memref<56x128xf32, #tpu.memory_space<vmem>>, vector<28x128xf32>
    tpu.vector_store %arg6[%c28_64, %c0_65], %58 {strides = array<i32>} : memref<56x128xf32, #tpu.memory_space<vmem>>, vector<28x128xf32>,
    %c0_66 = arith.constant 0 : index
    %c0_67 = arith.constant 0 : index
    %60 = tpu.strided_load %arg6[%c0_66, %c0_67] {strides = array<i32: 2, 1>} : memref<56x128xf32, #tpu.memory_space<vmem>>, vector<28x128xf32>
    %c1_68 = arith.constant 1 : index
    %c0_69 = arith.constant 0 : index
    %61 = tpu.strided_load %arg6[%c1_68, %c0_69] {strides = array<i32: 2, 1>} : memref<56x128xf32, #tpu.memory_space<vmem>>, vector<28x128xf32>
    %62 = arith.maximumf %60, %61 : vector<28x128xf32>
    %63 = arith.addf %62, %3 : vector<28x128xf32>
    %cst_70 = arith.constant 0.000000e+00 : f32
    %64 = vector.broadcast %cst_70 : f32 to vector<28x128xf32>
    %65 = arith.maximumf %63, %64 : vector<28x128xf32>
    %66 = arith.truncf %65 : vector<28x128xf32> to vector<28x128xbf16>
    %c0_71 = arith.constant 0 : index
    %c56_72 = arith.constant 56 : index
    %c0_73 = arith.constant 0 : index
    %67 = vector.load %arg4[%c0_71, %c56_72, %c0_73] : memref<1x196x128xbf16, #tpu.memory_space<vmem>>, vector<1x28x128xbf16>
    %68 = vector.shape_cast %67 : vector<1x28x128xbf16> to vector<28x128xbf16>
    %69 = vector.shape_cast %66 : vector<28x128xbf16> to vector<1x28x128xbf16>
    tpu.vector_store %arg4[%c0_71, %c56_72, %c0_73], %69 {strides = array<i32>} : memref<1x196x128xbf16, #tpu.memory_space<vmem>>, vector<1x28x128xbf16>,
    %c0_74 = arith.constant 0 : index
    %c336 = arith.constant 336 : index
    %c0_75 = arith.constant 0 : index
    %70 = vector.load %arg1[%c0_74, %c336, %c0_75] : memref<1x784x128xbf16, #tpu.memory_space<vmem>>, vector<1x112x128xbf16>
    %71 = vector.shape_cast %70 : vector<1x112x128xbf16> to vector<112x128xbf16>
    %cst_76 = arith.constant dense<0.000000e+00> : vector<112x128xf32>
    %72 = tpu.matmul %71, %0, %cst_76 {dimension_numbers = #tpu.dot_dimension_numbers<[1], [0], [0], [1], [0, 0, 1, 1], [], []>} : vector<112x128xbf16>, vector<128x128xbf16>, vector<112x128xf32> -> vector<112x128xf32>
    %c0_77 = arith.constant 0 : index
    %c0_78 = arith.constant 0 : index
    %73 = vector.load %arg5[%c0_77, %c0_78] : memref<112x128xf32, #tpu.memory_space<vmem>>, vector<112x128xf32>
    tpu.vector_store %arg5[%c0_77, %c0_78], %72 {strides = array<i32>} : memref<112x128xf32, #tpu.memory_space<vmem>>, vector<112x128xf32>,
    %c0_79 = arith.constant 0 : index
    %c0_80 = arith.constant 0 : index
    %74 = vector.load %arg5[%c0_79, %c0_80] : memref<112x128xf32, #tpu.memory_space<vmem>>, vector<28x128xf32>
    %c28_81 = arith.constant 28 : index
    %c0_82 = arith.constant 0 : index
    %75 = vector.load %arg5[%c28_81, %c0_82] : memref<112x128xf32, #tpu.memory_space<vmem>>, vector<28x128xf32>
    %76 = arith.maximumf %74, %75 : vector<28x128xf32>
    %c0_83 = arith.constant 0 : index
    %c0_84 = arith.constant 0 : index
    %77 = vector.load %arg6[%c0_83, %c0_84] : memref<56x128xf32, #tpu.memory_space<vmem>>, vector<28x128xf32>
    tpu.vector_store %arg6[%c0_83, %c0_84], %76 {strides = array<i32>} : memref<56x128xf32, #tpu.memory_space<vmem>>, vector<28x128xf32>,
    %c56_85 = arith.constant 56 : index
    %c0_86 = arith.constant 0 : index
    %78 = vector.load %arg5[%c56_85, %c0_86] : memref<112x128xf32, #tpu.memory_space<vmem>>, vector<28x128xf32>
    %c84_87 = arith.constant 84 : index
    %c0_88 = arith.constant 0 : index
    %79 = vector.load %arg5[%c84_87, %c0_88] : memref<112x128xf32, #tpu.memory_space<vmem>>, vector<28x128xf32>
    %80 = arith.maximumf %78, %79 : vector<28x128xf32>
    %c28_89 = arith.constant 28 : index
    %c0_90 = arith.constant 0 : index
    %81 = vector.load %arg6[%c28_89, %c0_90] : memref<56x128xf32, #tpu.memory_space<vmem>>, vector<28x128xf32>
    tpu.vector_store %arg6[%c28_89, %c0_90], %80 {strides = array<i32>} : memref<56x128xf32, #tpu.memory_space<vmem>>, vector<28x128xf32>,
    %c0_91 = arith.constant 0 : index
    %c0_92 = arith.constant 0 : index
    %82 = tpu.strided_load %arg6[%c0_91, %c0_92] {strides = array<i32: 2, 1>} : memref<56x128xf32, #tpu.memory_space<vmem>>, vector<28x128xf32>
    %c1_93 = arith.constant 1 : index
    %c0_94 = arith.constant 0 : index
    %83 = tpu.strided_load %arg6[%c1_93, %c0_94] {strides = array<i32: 2, 1>} : memref<56x128xf32, #tpu.memory_space<vmem>>, vector<28x128xf32>
    %84 = arith.maximumf %82, %83 : vector<28x128xf32>
    %85 = arith.addf %84, %3 : vector<28x128xf32>
    %cst_95 = arith.constant 0.000000e+00 : f32
    %86 = vector.broadcast %cst_95 : f32 to vector<28x128xf32>
    %87 = arith.maximumf %85, %86 : vector<28x128xf32>
    %88 = arith.truncf %87 : vector<28x128xf32> to vector<28x128xbf16>
    %c0_96 = arith.constant 0 : index
    %c84_97 = arith.constant 84 : index
    %c0_98 = arith.constant 0 : index
    %89 = vector.load %arg4[%c0_96, %c84_97, %c0_98] : memref<1x196x128xbf16, #tpu.memory_space<vmem>>, vector<1x28x128xbf16>
    %90 = vector.shape_cast %89 : vector<1x28x128xbf16> to vector<28x128xbf16>
    %91 = vector.shape_cast %88 : vector<28x128xbf16> to vector<1x28x128xbf16>
    tpu.vector_store %arg4[%c0_96, %c84_97, %c0_98], %91 {strides = array<i32>} : memref<1x196x128xbf16, #tpu.memory_space<vmem>>, vector<1x28x128xbf16>,
    %c0_99 = arith.constant 0 : index
    %c448 = arith.constant 448 : index
    %c0_100 = arith.constant 0 : index
    %92 = vector.load %arg1[%c0_99, %c448, %c0_100] : memref<1x784x128xbf16, #tpu.memory_space<vmem>>, vector<1x112x128xbf16>
    %93 = vector.shape_cast %92 : vector<1x112x128xbf16> to vector<112x128xbf16>
    %cst_101 = arith.constant dense<0.000000e+00> : vector<112x128xf32>
    %94 = tpu.matmul %93, %0, %cst_101 {dimension_numbers = #tpu.dot_dimension_numbers<[1], [0], [0], [1], [0, 0, 1, 1], [], []>} : vector<112x128xbf16>, vector<128x128xbf16>, vector<112x128xf32> -> vector<112x128xf32>
    %c0_102 = arith.constant 0 : index
    %c0_103 = arith.constant 0 : index
    %95 = vector.load %arg5[%c0_102, %c0_103] : memref<112x128xf32, #tpu.memory_space<vmem>>, vector<112x128xf32>
    tpu.vector_store %arg5[%c0_102, %c0_103], %94 {strides = array<i32>} : memref<112x128xf32, #tpu.memory_space<vmem>>, vector<112x128xf32>,
    %c0_104 = arith.constant 0 : index
    %c0_105 = arith.constant 0 : index
    %96 = vector.load %arg5[%c0_104, %c0_105] : memref<112x128xf32, #tpu.memory_space<vmem>>, vector<28x128xf32>
    %c28_106 = arith.constant 28 : index
    %c0_107 = arith.constant 0 : index
    %97 = vector.load %arg5[%c28_106, %c0_107] : memref<112x128xf32, #tpu.memory_space<vmem>>, vector<28x128xf32>
    %98 = arith.maximumf %96, %97 : vector<28x128xf32>
    %c0_108 = arith.constant 0 : index
    %c0_109 = arith.constant 0 : index
    %99 = vector.load %arg6[%c0_108, %c0_109] : memref<56x128xf32, #tpu.memory_space<vmem>>, vector<28x128xf32>
    tpu.vector_store %arg6[%c0_108, %c0_109], %98 {strides = array<i32>} : memref<56x128xf32, #tpu.memory_space<vmem>>, vector<28x128xf32>,
    %c56_110 = arith.constant 56 : index
    %c0_111 = arith.constant 0 : index
    %100 = vector.load %arg5[%c56_110, %c0_111] : memref<112x128xf32, #tpu.memory_space<vmem>>, vector<28x128xf32>
    %c84_112 = arith.constant 84 : index
    %c0_113 = arith.constant 0 : index
    %101 = vector.load %arg5[%c84_112, %c0_113] : memref<112x128xf32, #tpu.memory_space<vmem>>, vector<28x128xf32>
    %102 = arith.maximumf %100, %101 : vector<28x128xf32>
    %c28_114 = arith.constant 28 : index
    %c0_115 = arith.constant 0 : index
    %103 = vector.load %arg6[%c28_114, %c0_115] : memref<56x128xf32, #tpu.memory_space<vmem>>, vector<28x128xf32>
    tpu.vector_store %arg6[%c28_114, %c0_115], %102 {strides = array<i32>} : memref<56x128xf32, #tpu.memory_space<vmem>>, vector<28x128xf32>,
    %c0_116 = arith.constant 0 : index
    %c0_117 = arith.constant 0 : index
    %104 = tpu.strided_load %arg6[%c0_116, %c0_117] {strides = array<i32: 2, 1>} : memref<56x128xf32, #tpu.memory_space<vmem>>, vector<28x128xf32>
    %c1_118 = arith.constant 1 : index
    %c0_119 = arith.constant 0 : index
    %105 = tpu.strided_load %arg6[%c1_118, %c0_119] {strides = array<i32: 2, 1>} : memref<56x128xf32, #tpu.memory_space<vmem>>, vector<28x128xf32>
    %106 = arith.maximumf %104, %105 : vector<28x128xf32>
    %107 = arith.addf %106, %3 : vector<28x128xf32>
    %cst_120 = arith.constant 0.000000e+00 : f32
    %108 = vector.broadcast %cst_120 : f32 to vector<28x128xf32>
    %109 = arith.maximumf %107, %108 : vector<28x128xf32>
    %110 = arith.truncf %109 : vector<28x128xf32> to vector<28x128xbf16>
    %c0_121 = arith.constant 0 : index
    %c112_122 = arith.constant 112 : index
    %c0_123 = arith.constant 0 : index
    %111 = vector.load %arg4[%c0_121, %c112_122, %c0_123] : memref<1x196x128xbf16, #tpu.memory_space<vmem>>, vector<1x28x128xbf16>
    %112 = vector.shape_cast %111 : vector<1x28x128xbf16> to vector<28x128xbf16>
    %113 = vector.shape_cast %110 : vector<28x128xbf16> to vector<1x28x128xbf16>
    tpu.vector_store %arg4[%c0_121, %c112_122, %c0_123], %113 {strides = array<i32>} : memref<1x196x128xbf16, #tpu.memory_space<vmem>>, vector<1x28x128xbf16>,
    %c0_124 = arith.constant 0 : index
    %c560 = arith.constant 560 : index
    %c0_125 = arith.constant 0 : index
    %114 = vector.load %arg1[%c0_124, %c560, %c0_125] : memref<1x784x128xbf16, #tpu.memory_space<vmem>>, vector<1x112x128xbf16>
    %115 = vector.shape_cast %114 : vector<1x112x128xbf16> to vector<112x128xbf16>
    %cst_126 = arith.constant dense<0.000000e+00> : vector<112x128xf32>
    %116 = tpu.matmul %115, %0, %cst_126 {dimension_numbers = #tpu.dot_dimension_numbers<[1], [0], [0], [1], [0, 0, 1, 1], [], []>} : vector<112x128xbf16>, vector<128x128xbf16>, vector<112x128xf32> -> vector<112x128xf32>
    %c0_127 = arith.constant 0 : index
    %c0_128 = arith.constant 0 : index
    %117 = vector.load %arg5[%c0_127, %c0_128] : memref<112x128xf32, #tpu.memory_space<vmem>>, vector<112x128xf32>
    tpu.vector_store %arg5[%c0_127, %c0_128], %116 {strides = array<i32>} : memref<112x128xf32, #tpu.memory_space<vmem>>, vector<112x128xf32>,
    %c0_129 = arith.constant 0 : index
    %c0_130 = arith.constant 0 : index
    %118 = vector.load %arg5[%c0_129, %c0_130] : memref<112x128xf32, #tpu.memory_space<vmem>>, vector<28x128xf32>
    %c28_131 = arith.constant 28 : index
    %c0_132 = arith.constant 0 : index
    %119 = vector.load %arg5[%c28_131, %c0_132] : memref<112x128xf32, #tpu.memory_space<vmem>>, vector<28x128xf32>
    %120 = arith.maximumf %118, %119 : vector<28x128xf32>
    %c0_133 = arith.constant 0 : index
    %c0_134 = arith.constant 0 : index
    %121 = vector.load %arg6[%c0_133, %c0_134] : memref<56x128xf32, #tpu.memory_space<vmem>>, vector<28x128xf32>
    tpu.vector_store %arg6[%c0_133, %c0_134], %120 {strides = array<i32>} : memref<56x128xf32, #tpu.memory_space<vmem>>, vector<28x128xf32>,
    %c56_135 = arith.constant 56 : index
    %c0_136 = arith.constant 0 : index
    %122 = vector.load %arg5[%c56_135, %c0_136] : memref<112x128xf32, #tpu.memory_space<vmem>>, vector<28x128xf32>
    %c84_137 = arith.constant 84 : index
    %c0_138 = arith.constant 0 : index
    %123 = vector.load %arg5[%c84_137, %c0_138] : memref<112x128xf32, #tpu.memory_space<vmem>>, vector<28x128xf32>
    %124 = arith.maximumf %122, %123 : vector<28x128xf32>
    %c28_139 = arith.constant 28 : index
    %c0_140 = arith.constant 0 : index
    %125 = vector.load %arg6[%c28_139, %c0_140] : memref<56x128xf32, #tpu.memory_space<vmem>>, vector<28x128xf32>
    tpu.vector_store %arg6[%c28_139, %c0_140], %124 {strides = array<i32>} : memref<56x128xf32, #tpu.memory_space<vmem>>, vector<28x128xf32>,
    %c0_141 = arith.constant 0 : index
    %c0_142 = arith.constant 0 : index
    %126 = tpu.strided_load %arg6[%c0_141, %c0_142] {strides = array<i32: 2, 1>} : memref<56x128xf32, #tpu.memory_space<vmem>>, vector<28x128xf32>
    %c1_143 = arith.constant 1 : index
    %c0_144 = arith.constant 0 : index
    %127 = tpu.strided_load %arg6[%c1_143, %c0_144] {strides = array<i32: 2, 1>} : memref<56x128xf32, #tpu.memory_space<vmem>>, vector<28x128xf32>
    %128 = arith.maximumf %126, %127 : vector<28x128xf32>
    %129 = arith.addf %128, %3 : vector<28x128xf32>
    %cst_145 = arith.constant 0.000000e+00 : f32
    %130 = vector.broadcast %cst_145 : f32 to vector<28x128xf32>
    %131 = arith.maximumf %129, %130 : vector<28x128xf32>
    %132 = arith.truncf %131 : vector<28x128xf32> to vector<28x128xbf16>
    %c0_146 = arith.constant 0 : index
    %c140 = arith.constant 140 : index
    %c0_147 = arith.constant 0 : index
    %133 = vector.load %arg4[%c0_146, %c140, %c0_147] : memref<1x196x128xbf16, #tpu.memory_space<vmem>>, vector<1x28x128xbf16>
    %134 = vector.shape_cast %133 : vector<1x28x128xbf16> to vector<28x128xbf16>
    %135 = vector.shape_cast %132 : vector<28x128xbf16> to vector<1x28x128xbf16>
    tpu.vector_store %arg4[%c0_146, %c140, %c0_147], %135 {strides = array<i32>} : memref<1x196x128xbf16, #tpu.memory_space<vmem>>, vector<1x28x128xbf16>,
    %c0_148 = arith.constant 0 : index
    %c672 = arith.constant 672 : index
    %c0_149 = arith.constant 0 : index
    %136 = vector.load %arg1[%c0_148, %c672, %c0_149] : memref<1x784x128xbf16, #tpu.memory_space<vmem>>, vector<1x112x128xbf16>
    %137 = vector.shape_cast %136 : vector<1x112x128xbf16> to vector<112x128xbf16>
    %cst_150 = arith.constant dense<0.000000e+00> : vector<112x128xf32>
    %138 = tpu.matmul %137, %0, %cst_150 {dimension_numbers = #tpu.dot_dimension_numbers<[1], [0], [0], [1], [0, 0, 1, 1], [], []>} : vector<112x128xbf16>, vector<128x128xbf16>, vector<112x128xf32> -> vector<112x128xf32>
    %c0_151 = arith.constant 0 : index
    %c0_152 = arith.constant 0 : index
    %139 = vector.load %arg5[%c0_151, %c0_152] : memref<112x128xf32, #tpu.memory_space<vmem>>, vector<112x128xf32>
    tpu.vector_store %arg5[%c0_151, %c0_152], %138 {strides = array<i32>} : memref<112x128xf32, #tpu.memory_space<vmem>>, vector<112x128xf32>,
    %c0_153 = arith.constant 0 : index
    %c0_154 = arith.constant 0 : index
    %140 = vector.load %arg5[%c0_153, %c0_154] : memref<112x128xf32, #tpu.memory_space<vmem>>, vector<28x128xf32>
    %c28_155 = arith.constant 28 : index
    %c0_156 = arith.constant 0 : index
    %141 = vector.load %arg5[%c28_155, %c0_156] : memref<112x128xf32, #tpu.memory_space<vmem>>, vector<28x128xf32>
    %142 = arith.maximumf %140, %141 : vector<28x128xf32>
    %c0_157 = arith.constant 0 : index
    %c0_158 = arith.constant 0 : index
    %143 = vector.load %arg6[%c0_157, %c0_158] : memref<56x128xf32, #tpu.memory_space<vmem>>, vector<28x128xf32>
    tpu.vector_store %arg6[%c0_157, %c0_158], %142 {strides = array<i32>} : memref<56x128xf32, #tpu.memory_space<vmem>>, vector<28x128xf32>,
    %c56_159 = arith.constant 56 : index
    %c0_160 = arith.constant 0 : index
    %144 = vector.load %arg5[%c56_159, %c0_160] : memref<112x128xf32, #tpu.memory_space<vmem>>, vector<28x128xf32>
    %c84_161 = arith.constant 84 : index
    %c0_162 = arith.constant 0 : index
    %145 = vector.load %arg5[%c84_161, %c0_162] : memref<112x128xf32, #tpu.memory_space<vmem>>, vector<28x128xf32>
    %146 = arith.maximumf %144, %145 : vector<28x128xf32>
    %c28_163 = arith.constant 28 : index
    %c0_164 = arith.constant 0 : index
    %147 = vector.load %arg6[%c28_163, %c0_164] : memref<56x128xf32, #tpu.memory_space<vmem>>, vector<28x128xf32>
    tpu.vector_store %arg6[%c28_163, %c0_164], %146 {strides = array<i32>} : memref<56x128xf32, #tpu.memory_space<vmem>>, vector<28x128xf32>,
    %c0_165 = arith.constant 0 : index
    %c0_166 = arith.constant 0 : index
    %148 = tpu.strided_load %arg6[%c0_165, %c0_166] {strides = array<i32: 2, 1>} : memref<56x128xf32, #tpu.memory_space<vmem>>, vector<28x128xf32>
    %c1_167 = arith.constant 1 : index
    %c0_168 = arith.constant 0 : index
    %149 = tpu.strided_load %arg6[%c1_167, %c0_168] {strides = array<i32: 2, 1>} : memref<56x128xf32, #tpu.memory_space<vmem>>, vector<28x128xf32>
    %150 = arith.maximumf %148, %149 : vector<28x128xf32>
    %151 = arith.addf %150, %3 : vector<28x128xf32>
    %cst_169 = arith.constant 0.000000e+00 : f32
    %152 = vector.broadcast %cst_169 : f32 to vector<28x128xf32>
    %153 = arith.maximumf %151, %152 : vector<28x128xf32>
    %154 = arith.truncf %153 : vector<28x128xf32> to vector<28x128xbf16>
    %c0_170 = arith.constant 0 : index
    %c168 = arith.constant 168 : index
    %c0_171 = arith.constant 0 : index
    %155 = vector.load %arg4[%c0_170, %c168, %c0_171] : memref<1x196x128xbf16, #tpu.memory_space<vmem>>, vector<1x28x128xbf16>
    %156 = vector.shape_cast %155 : vector<1x28x128xbf16> to vector<28x128xbf16>
    %157 = vector.shape_cast %154 : vector<28x128xbf16> to vector<1x28x128xbf16>
    tpu.vector_store %arg4[%c0_170, %c168, %c0_171], %157 {strides = array<i32>} : memref<1x196x128xbf16, #tpu.memory_space<vmem>>, vector<1x28x128xbf16>,
    return
  }
  func.func @transform_0(%arg0: i32) -> (i32, i32, i32) {
    %c0_i32 = arith.constant 0 : i32
    %c0_i32_0 = arith.constant 0 : i32
    %c0_i32_1 = arith.constant 0 : i32
    return %arg0, %c0_i32, %c0_i32_0 : i32, i32, i32
  }
  func.func @transform_1(%arg0: i32) -> (i32, i32) {
    %c0_i32 = arith.constant 0 : i32
    %c0_i32_0 = arith.constant 0 : i32
    %c0_i32_1 = arith.constant 0 : i32
    return %c0_i32, %c0_i32_0 : i32, i32
  }
  func.func @transform_2(%arg0: i32) -> (i32, i32) {
    %c0_i32 = arith.constant 0 : i32
    %c0_i32_0 = arith.constant 0 : i32
    %c0_i32_1 = arith.constant 0 : i32
    return %c0_i32, %c0_i32_0 : i32, i32
  }
  func.func @transform_3(%arg0: i32) -> (i32, i32, i32) {
    %c0_i32 = arith.constant 0 : i32
    %c0_i32_0 = arith.constant 0 : i32
    %c0_i32_1 = arith.constant 0 : i32
    return %arg0, %c0_i32, %c0_i32_0 : i32, i32, i32
  }
}

module attributes {stable_mosaic.version = 11 : i64} {
  func.func @_conv_relu_pool_kernel(%arg0: i32, %arg1: memref<1x100x256xbf16, #tpu.memory_space<vmem>>, %arg2: memref<256x128xbf16, #tpu.memory_space<vmem>>, %arg3: memref<1x128xf32, #tpu.memory_space<vmem>>, %arg4: memref<1x25x128xf32, #tpu.memory_space<vmem>>, %arg5: memref<104x128xf32, #tpu.memory_space<vmem>>, %arg6: memref<56x128xf32, #tpu.memory_space<vmem>>) attributes {dimension_semantics = [#tpu.dimension_semantics<parallel>], iteration_bounds = array<i64: 2>, scalar_prefetch = 0 : i64, scratch_operands = 2 : i64, tpu.core_type = #tpu.core_type<tc>, window_params = [{transform_indices = @transform_0, window_bounds = array<i64: 1, 100, 256>}, {pipeline_mode = #tpu.pipeline_mode<synchronous>, transform_indices = @transform_1, window_bounds = array<i64: 256, 128>}, {pipeline_mode = #tpu.pipeline_mode<synchronous>, transform_indices = @transform_2, window_bounds = array<i64: 1, 128>}, {transform_indices = @transform_3, window_bounds = array<i64: 1, 25, 128>}]} {
    %c0 = arith.constant 0 : index
    %c0_0 = arith.constant 0 : index
    %0 = vector.load %arg2[%c0, %c0_0] : memref<256x128xbf16, #tpu.memory_space<vmem>>, vector<256x128xbf16>
    %c0_1 = arith.constant 0 : index
    %c0_2 = arith.constant 0 : index
    %1 = vector.load %arg3[%c0_1, %c0_2] : memref<1x128xf32, #tpu.memory_space<vmem>>, vector<1x128xf32>
    %2 = vector.shape_cast %1 : vector<1x128xf32> to vector<1x128xf32>
    %3 = vector.broadcast %2 : vector<1x128xf32> to vector<25x128xf32>
    %c0_3 = arith.constant 0 : index
    %c0_4 = arith.constant 0 : index
    %c0_5 = arith.constant 0 : index
    %4 = vector.load %arg1[%c0_3, %c0_4, %c0_5] : memref<1x100x256xbf16, #tpu.memory_space<vmem>>, vector<1x100x256xbf16>
    %5 = vector.shape_cast %4 : vector<1x100x256xbf16> to vector<100x256xbf16>
    %cst = arith.constant dense<0.000000e+00> : vector<100x128xf32>
    %6 = tpu.matmul %5, %0, %cst {dimension_numbers = #tpu.dot_dimension_numbers<[1], [0], [0], [1], [0, 0, 1, 1], [], []>} : vector<100x256xbf16>, vector<256x128xbf16>, vector<100x128xf32> -> vector<100x128xf32>
    %c0_6 = arith.constant 0 : index
    %c0_7 = arith.constant 0 : index
    %7 = vector.load %arg5[%c0_6, %c0_7] : memref<104x128xf32, #tpu.memory_space<vmem>>, vector<100x128xf32>
    tpu.vector_store %arg5[%c0_6, %c0_7], %6 {strides = array<i32>} : memref<104x128xf32, #tpu.memory_space<vmem>>, vector<100x128xf32>,
    %c0_8 = arith.constant 0 : index
    %c0_9 = arith.constant 0 : index
    %8 = vector.load %arg5[%c0_8, %c0_9] : memref<104x128xf32, #tpu.memory_space<vmem>>, vector<10x128xf32>
    %c10 = arith.constant 10 : index
    %c0_10 = arith.constant 0 : index
    %9 = vector.load %arg5[%c10, %c0_10] : memref<104x128xf32, #tpu.memory_space<vmem>>, vector<10x128xf32>
    %10 = arith.maximumf %8, %9 : vector<10x128xf32>
    %c0_11 = arith.constant 0 : index
    %c0_12 = arith.constant 0 : index
    %11 = vector.load %arg6[%c0_11, %c0_12] : memref<56x128xf32, #tpu.memory_space<vmem>>, vector<10x128xf32>
    tpu.vector_store %arg6[%c0_11, %c0_12], %10 {strides = array<i32>} : memref<56x128xf32, #tpu.memory_space<vmem>>, vector<10x128xf32>,
    %c20 = arith.constant 20 : index
    %c0_13 = arith.constant 0 : index
    %12 = vector.load %arg5[%c20, %c0_13] : memref<104x128xf32, #tpu.memory_space<vmem>>, vector<10x128xf32>
    %c30 = arith.constant 30 : index
    %c0_14 = arith.constant 0 : index
    %13 = vector.load %arg5[%c30, %c0_14] : memref<104x128xf32, #tpu.memory_space<vmem>>, vector<10x128xf32>
    %14 = arith.maximumf %12, %13 : vector<10x128xf32>
    %c10_15 = arith.constant 10 : index
    %c0_16 = arith.constant 0 : index
    %15 = vector.load %arg6[%c10_15, %c0_16] : memref<56x128xf32, #tpu.memory_space<vmem>>, vector<10x128xf32>
    tpu.vector_store %arg6[%c10_15, %c0_16], %14 {strides = array<i32>} : memref<56x128xf32, #tpu.memory_space<vmem>>, vector<10x128xf32>,
    %c40 = arith.constant 40 : index
    %c0_17 = arith.constant 0 : index
    %16 = vector.load %arg5[%c40, %c0_17] : memref<104x128xf32, #tpu.memory_space<vmem>>, vector<10x128xf32>
    %c50 = arith.constant 50 : index
    %c0_18 = arith.constant 0 : index
    %17 = vector.load %arg5[%c50, %c0_18] : memref<104x128xf32, #tpu.memory_space<vmem>>, vector<10x128xf32>
    %18 = arith.maximumf %16, %17 : vector<10x128xf32>
    %c20_19 = arith.constant 20 : index
    %c0_20 = arith.constant 0 : index
    %19 = vector.load %arg6[%c20_19, %c0_20] : memref<56x128xf32, #tpu.memory_space<vmem>>, vector<10x128xf32>
    tpu.vector_store %arg6[%c20_19, %c0_20], %18 {strides = array<i32>} : memref<56x128xf32, #tpu.memory_space<vmem>>, vector<10x128xf32>,
    %c60 = arith.constant 60 : index
    %c0_21 = arith.constant 0 : index
    %20 = vector.load %arg5[%c60, %c0_21] : memref<104x128xf32, #tpu.memory_space<vmem>>, vector<10x128xf32>
    %c70 = arith.constant 70 : index
    %c0_22 = arith.constant 0 : index
    %21 = vector.load %arg5[%c70, %c0_22] : memref<104x128xf32, #tpu.memory_space<vmem>>, vector<10x128xf32>
    %22 = arith.maximumf %20, %21 : vector<10x128xf32>
    %c30_23 = arith.constant 30 : index
    %c0_24 = arith.constant 0 : index
    %23 = vector.load %arg6[%c30_23, %c0_24] : memref<56x128xf32, #tpu.memory_space<vmem>>, vector<10x128xf32>
    tpu.vector_store %arg6[%c30_23, %c0_24], %22 {strides = array<i32>} : memref<56x128xf32, #tpu.memory_space<vmem>>, vector<10x128xf32>,
    %c80 = arith.constant 80 : index
    %c0_25 = arith.constant 0 : index
    %24 = vector.load %arg5[%c80, %c0_25] : memref<104x128xf32, #tpu.memory_space<vmem>>, vector<10x128xf32>
    %c90 = arith.constant 90 : index
    %c0_26 = arith.constant 0 : index
    %25 = vector.load %arg5[%c90, %c0_26] : memref<104x128xf32, #tpu.memory_space<vmem>>, vector<10x128xf32>
    %26 = arith.maximumf %24, %25 : vector<10x128xf32>
    %c40_27 = arith.constant 40 : index
    %c0_28 = arith.constant 0 : index
    %27 = vector.load %arg6[%c40_27, %c0_28] : memref<56x128xf32, #tpu.memory_space<vmem>>, vector<10x128xf32>
    tpu.vector_store %arg6[%c40_27, %c0_28], %26 {strides = array<i32>} : memref<56x128xf32, #tpu.memory_space<vmem>>, vector<10x128xf32>,
    %c0_29 = arith.constant 0 : index
    %c0_30 = arith.constant 0 : index
    %28 = tpu.strided_load %arg6[%c0_29, %c0_30] {strides = array<i32: 2, 1>} : memref<56x128xf32, #tpu.memory_space<vmem>>, vector<25x128xf32>
    %c1 = arith.constant 1 : index
    %c0_31 = arith.constant 0 : index
    %29 = tpu.strided_load %arg6[%c1, %c0_31] {strides = array<i32: 2, 1>} : memref<56x128xf32, #tpu.memory_space<vmem>>, vector<25x128xf32>
    %30 = arith.maximumf %28, %29 : vector<25x128xf32>
    %31 = arith.addf %30, %3 : vector<25x128xf32>
    %cst_32 = arith.constant 0.000000e+00 : f32
    %32 = vector.broadcast %cst_32 : f32 to vector<25x128xf32>
    %33 = arith.maximumf %31, %32 : vector<25x128xf32>
    %c0_33 = arith.constant 0 : index
    %c0_34 = arith.constant 0 : index
    %c0_35 = arith.constant 0 : index
    %34 = vector.load %arg4[%c0_33, %c0_34, %c0_35] : memref<1x25x128xf32, #tpu.memory_space<vmem>>, vector<1x25x128xf32>
    %35 = vector.shape_cast %34 : vector<1x25x128xf32> to vector<25x128xf32>
    %36 = vector.shape_cast %33 : vector<25x128xf32> to vector<1x25x128xf32>
    tpu.vector_store %arg4[%c0_33, %c0_34, %c0_35], %36 {strides = array<i32>} : memref<1x25x128xf32, #tpu.memory_space<vmem>>, vector<1x25x128xf32>,
    return
  }
  func.func @transform_0(%arg0: i32) -> (i32, i32, i32) {
    %c0_i32 = arith.constant 0 : i32
    %c0_i32_0 = arith.constant 0 : i32
    %c0_i32_1 = arith.constant 0 : i32
    return %arg0, %c0_i32, %c0_i32_0 : i32, i32, i32
  }
  func.func @transform_1(%arg0: i32) -> (i32, i32) {
    %c0_i32 = arith.constant 0 : i32
    %c0_i32_0 = arith.constant 0 : i32
    %c0_i32_1 = arith.constant 0 : i32
    return %c0_i32, %c0_i32_0 : i32, i32
  }
  func.func @transform_2(%arg0: i32) -> (i32, i32) {
    %c0_i32 = arith.constant 0 : i32
    %c0_i32_0 = arith.constant 0 : i32
    %c0_i32_1 = arith.constant 0 : i32
    return %c0_i32, %c0_i32_0 : i32, i32
  }
  func.func @transform_3(%arg0: i32) -> (i32, i32, i32) {
    %c0_i32 = arith.constant 0 : i32
    %c0_i32_0 = arith.constant 0 : i32
    %c0_i32_1 = arith.constant 0 : i32
    return %arg0, %c0_i32, %c0_i32_0 : i32, i32, i32
  }
}

module attributes {stable_mosaic.version = 11 : i64} {
  func.func @_fc_stack_kernel(%arg0: i32, %arg1: memref<8x512xbf16, #tpu.memory_space<vmem>>, %arg2: memref<512x128xbf16, #tpu.memory_space<vmem>>, %arg3: memref<1x128xf32, #tpu.memory_space<vmem>>, %arg4: memref<128x128xbf16, #tpu.memory_space<vmem>>, %arg5: memref<1x128xf32, #tpu.memory_space<vmem>>, %arg6: memref<128x128xbf16, #tpu.memory_space<vmem>>, %arg7: memref<1x128xf32, #tpu.memory_space<vmem>>, %arg8: memref<8x128xf32, #tpu.memory_space<vmem>>) attributes {dimension_semantics = [#tpu.dimension_semantics<parallel>], iteration_bounds = array<i64: 1>, scalar_prefetch = 0 : i64, scratch_operands = 0 : i64, tpu.core_type = #tpu.core_type<tc>, window_params = [{transform_indices = @transform_0, window_bounds = array<i64: 8, 512>}, {pipeline_mode = #tpu.pipeline_mode<synchronous>, transform_indices = @transform_1, window_bounds = array<i64: 512, 128>}, {pipeline_mode = #tpu.pipeline_mode<synchronous>, transform_indices = @transform_2, window_bounds = array<i64: 1, 128>}, {pipeline_mode = #tpu.pipeline_mode<synchronous>, transform_indices = @transform_3, window_bounds = array<i64: 128, 128>}, {pipeline_mode = #tpu.pipeline_mode<synchronous>, transform_indices = @transform_4, window_bounds = array<i64: 1, 128>}, {pipeline_mode = #tpu.pipeline_mode<synchronous>, transform_indices = @transform_5, window_bounds = array<i64: 128, 128>}, {pipeline_mode = #tpu.pipeline_mode<synchronous>, transform_indices = @transform_6, window_bounds = array<i64: 1, 128>}, {transform_indices = @transform_7, window_bounds = array<i64: 8, 128>}]} {
    %c0 = arith.constant 0 : index
    %c0_0 = arith.constant 0 : index
    %0 = vector.load %arg1[%c0, %c0_0] : memref<8x512xbf16, #tpu.memory_space<vmem>>, vector<8x512xbf16>
    %c0_1 = arith.constant 0 : index
    %c0_2 = arith.constant 0 : index
    %1 = vector.load %arg2[%c0_1, %c0_2] : memref<512x128xbf16, #tpu.memory_space<vmem>>, vector<512x128xbf16>
    %cst = arith.constant dense<0.000000e+00> : vector<8x128xf32>
    %2 = tpu.matmul %0, %1, %cst {dimension_numbers = #tpu.dot_dimension_numbers<[1], [0], [0], [1], [0, 0, 1, 1], [], []>} : vector<8x512xbf16>, vector<512x128xbf16>, vector<8x128xf32> -> vector<8x128xf32>
    %c0_3 = arith.constant 0 : index
    %c0_4 = arith.constant 0 : index
    %3 = vector.load %arg3[%c0_3, %c0_4] : memref<1x128xf32, #tpu.memory_space<vmem>>, vector<1x128xf32>
    %4 = vector.broadcast %3 : vector<1x128xf32> to vector<8x128xf32>
    %5 = arith.addf %2, %4 : vector<8x128xf32>
    %cst_5 = arith.constant 0.000000e+00 : f32
    %6 = vector.broadcast %cst_5 : f32 to vector<8x128xf32>
    %7 = arith.maximumf %5, %6 : vector<8x128xf32>
    %8 = arith.truncf %7 : vector<8x128xf32> to vector<8x128xbf16>
    %c0_6 = arith.constant 0 : index
    %c0_7 = arith.constant 0 : index
    %9 = vector.load %arg4[%c0_6, %c0_7] : memref<128x128xbf16, #tpu.memory_space<vmem>>, vector<128x128xbf16>
    %cst_8 = arith.constant dense<0.000000e+00> : vector<8x128xf32>
    %10 = tpu.matmul %8, %9, %cst_8 {dimension_numbers = #tpu.dot_dimension_numbers<[1], [0], [0], [1], [0, 0, 1, 1], [], []>} : vector<8x128xbf16>, vector<128x128xbf16>, vector<8x128xf32> -> vector<8x128xf32>
    %c0_9 = arith.constant 0 : index
    %c0_10 = arith.constant 0 : index
    %11 = vector.load %arg5[%c0_9, %c0_10] : memref<1x128xf32, #tpu.memory_space<vmem>>, vector<1x128xf32>
    %12 = vector.broadcast %11 : vector<1x128xf32> to vector<8x128xf32>
    %13 = arith.addf %10, %12 : vector<8x128xf32>
    %cst_11 = arith.constant 0.000000e+00 : f32
    %14 = vector.broadcast %cst_11 : f32 to vector<8x128xf32>
    %15 = arith.maximumf %13, %14 : vector<8x128xf32>
    %16 = arith.truncf %15 : vector<8x128xf32> to vector<8x128xbf16>
    %c0_12 = arith.constant 0 : index
    %c0_13 = arith.constant 0 : index
    %17 = vector.load %arg6[%c0_12, %c0_13] : memref<128x128xbf16, #tpu.memory_space<vmem>>, vector<128x128xbf16>
    %cst_14 = arith.constant dense<0.000000e+00> : vector<8x128xf32>
    %18 = tpu.matmul %16, %17, %cst_14 {dimension_numbers = #tpu.dot_dimension_numbers<[1], [0], [0], [1], [0, 0, 1, 1], [], []>} : vector<8x128xbf16>, vector<128x128xbf16>, vector<8x128xf32> -> vector<8x128xf32>
    %c0_15 = arith.constant 0 : index
    %c0_16 = arith.constant 0 : index
    %19 = vector.load %arg7[%c0_15, %c0_16] : memref<1x128xf32, #tpu.memory_space<vmem>>, vector<1x128xf32>
    %20 = vector.broadcast %19 : vector<1x128xf32> to vector<8x128xf32>
    %21 = arith.addf %18, %20 : vector<8x128xf32>
    %c0_17 = arith.constant 0 : index
    %c0_18 = arith.constant 0 : index
    %22 = vector.load %arg8[%c0_17, %c0_18] : memref<8x128xf32, #tpu.memory_space<vmem>>, vector<8x128xf32>
    tpu.vector_store %arg8[%c0_17, %c0_18], %21 {strides = array<i32>} : memref<8x128xf32, #tpu.memory_space<vmem>>, vector<8x128xf32>,
    return
  }
  func.func @transform_0(%arg0: i32) -> (i32, i32) {
    %c0_i32 = arith.constant 0 : i32
    %c0_i32_0 = arith.constant 0 : i32
    return %arg0, %c0_i32 : i32, i32
  }
  func.func @transform_1(%arg0: i32) -> (i32, i32) {
    %c0_i32 = arith.constant 0 : i32
    %c0_i32_0 = arith.constant 0 : i32
    %c0_i32_1 = arith.constant 0 : i32
    return %c0_i32, %c0_i32_0 : i32, i32
  }
  func.func @transform_2(%arg0: i32) -> (i32, i32) {
    %c0_i32 = arith.constant 0 : i32
    %c0_i32_0 = arith.constant 0 : i32
    %c0_i32_1 = arith.constant 0 : i32
    return %c0_i32, %c0_i32_0 : i32, i32
  }
  func.func @transform_3(%arg0: i32) -> (i32, i32) {
    %c0_i32 = arith.constant 0 : i32
    %c0_i32_0 = arith.constant 0 : i32
    %c0_i32_1 = arith.constant 0 : i32
    return %c0_i32, %c0_i32_0 : i32, i32
  }
  func.func @transform_4(%arg0: i32) -> (i32, i32) {
    %c0_i32 = arith.constant 0 : i32
    %c0_i32_0 = arith.constant 0 : i32
    %c0_i32_1 = arith.constant 0 : i32
    return %c0_i32, %c0_i32_0 : i32, i32
  }
  func.func @transform_5(%arg0: i32) -> (i32, i32) {
    %c0_i32 = arith.constant 0 : i32
    %c0_i32_0 = arith.constant 0 : i32
    %c0_i32_1 = arith.constant 0 : i32
    return %c0_i32, %c0_i32_0 : i32, i32
  }
  func.func @transform_6(%arg0: i32) -> (i32, i32) {
    %c0_i32 = arith.constant 0 : i32
    %c0_i32_0 = arith.constant 0 : i32
    %c0_i32_1 = arith.constant 0 : i32
    return %c0_i32, %c0_i32_0 : i32, i32
  }
  func.func @transform_7(%arg0: i32) -> (i32, i32) {
    %c0_i32 = arith.constant 0 : i32
    %c0_i32_0 = arith.constant 0 : i32
    return %arg0, %c0_i32 : i32, i32
  }
}

</mosaic_0001>

<llo_original>
// kernel: net_forward.3
$region0: #{net_forward.3}
  #allocation0 [shape = 'u32[]', space=smem, size = 0x4, offset = 0x4, fixed_abs, tag = 'smem constant byte address 0x4 - core index']
  #allocation1 [shape = 'u32[144,128]{1,0:T(1,128)}', space=vmem, size = 0x12000, scoped, tag = 'internal scratch']
  #allocation2 [shape = 'f32[112,128]{1,0:T(8,128)}', space=vmem, size = 0xe000, scoped, tag = 'scratch operand']
  #allocation3 [shape = 'f32[56,128]{1,0:T(8,128)}', space=vmem, size = 0x7000, scoped, tag = 'scratch operand']
  %s0 = inlined_call_operand.vmem [shape: bf16[2,784,128], index: 0, kind: input, shape index: {}]
  %s1 = inlined_call_operand.vmem [shape: bf16[128,128], index: 1, kind: input, shape index: {}]
  %s2 = inlined_call_operand.vmem [shape: f32[1,128], index: 2, kind: input, shape index: {}]
  %s3 = inlined_call_operand.vmem [shape: bf16[2,196,128], index: 3, kind: output, shape index: {}]
  %s4 = sld [smem:[#allocation0]]
  $region45: #{net_forward.3} parent=0
    _
  %s6 = ssub.s32 1, %s4
  %s7 = scalar_select 0, %s6, %s4
  loop: start=0, step=1, limit=4
  $region2: #{net_forward.3} parent=0 // loop_pre_header
    _
  $region3: #{net_forward.3} parent=0 // loop_header
    %s9 = sphi 0, %s13
    %p10 = scmp.ge.s32.totalorder %s9, 4
    %s19 = sphi 0, %s21
    %s22 = sphi 0, %s19
    %s23 = sphi 0, %s22
    %s39 = sphi 0, %s23
    %s43 = sphi 0, %s43
    %s45 = sphi 0, %s43
    %s46 = sphi 0, %s45
    %s60 = sphi 0, %s46
    %s64 = sphi 0, %s64
    %s66 = sphi 0, %s64
    %s67 = sphi 0, %s66
    %s81 = sphi 0, %s67
    %s87 = sphi 0, %s89
    %s90 = sphi 0, %s87
    %s91 = sphi 0, %s90
    %s107 = sphi 0, %s91
  $region4: #{net_forward.3} parent=0 // loop_header_branch
    %12 = sbr.rel (%p10) target = $region8
  $region5: #{net_forward.3} parent=0 // loop_body
    %s14 = ssub.s32 %s9, 1
    %s15 = ssub.s32 %s9, 2
    %s16 = sadd.s32 %s9, 1
    %s17 = ssub.s32 %s9, %s16
    %p18 = scmp.eq.s32.totalorder %s17, 0
    %s20 = sadd.s32 %s19, 1
    %s21 = scalar_select %p18, %s19, %s20
    %p24 = pneg %p18
    %p25 = scmp.eq.s32.totalorder %s9, 1
    %p26 = por %p24, %p25
    %p27 = scmp.ne.s32.totalorder %s19, %s22
    %p28 = scmp.eq.s32.totalorder %s9, 0
    %p29 = por %p27, %p28
    %p30 = scmp.ne.s32.totalorder %s19, %s22
    %p31 = scmp.eq.s32.totalorder %s14, 1
    %p32 = por %p30, %p31
    %p33 = scmp.ne.s32.totalorder %s22, %s23
    %p34 = scmp.eq.s32.totalorder %s14, 0
    %p35 = por %p33, %p34
    %p36 = scmp.ne.s32.totalorder %s22, %s23
    %p37 = scmp.eq.s32.totalorder %s15, 1
    %p38 = por %p36, %p37
    %p40 = scmp.ne.s32.totalorder %s23, %s39
    %p41 = scmp.eq.s32.totalorder %s15, 0
    %p42 = por %p40, %p41
    %s44 = sadd.s32 %s43, 1
    %p47 = scmp.eq.s32.totalorder %s9, 1
    %p48 = scmp.ne.s32.totalorder %s43, %s45
    %p49 = scmp.eq.s32.totalorder %s9, 0
    %p50 = por %p48, %p49
    %p51 = scmp.ne.s32.totalorder %s43, %s45
    %p52 = scmp.eq.s32.totalorder %s14, 1
    %p53 = por %p51, %p52
    %p54 = scmp.ne.s32.totalorder %s45, %s46
    %p55 = scmp.eq.s32.totalorder %s14, 0
    %p56 = por %p54, %p55
    %p57 = scmp.ne.s32.totalorder %s45, %s46
    %p58 = scmp.eq.s32.totalorder %s15, 1
    %p59 = por %p57, %p58
    %p61 = scmp.ne.s32.totalorder %s46, %s60
    %p62 = scmp.eq.s32.totalorder %s15, 0
    %p63 = por %p61, %p62
    %s65 = sadd.s32 %s64, 1
    %p68 = scmp.eq.s32.totalorder %s9, 1
    %p69 = scmp.ne.s32.totalorder %s64, %s66
    %p70 = scmp.eq.s32.totalorder %s9, 0
    %p71 = por %p69, %p70
    %p72 = scmp.ne.s32.totalorder %s64, %s66
    %p73 = scmp.eq.s32.totalorder %s14, 1
    %p74 = por %p72, %p73
    %p75 = scmp.ne.s32.totalorder %s66, %s67
    %p76 = scmp.eq.s32.totalorder %s14, 0
    %p77 = por %p75, %p76
    %p78 = scmp.ne.s32.totalorder %s66, %s67
    %p79 = scmp.eq.s32.totalorder %s15, 1
    %p80 = por %p78, %p79
    %p82 = scmp.ne.s32.totalorder %s67, %s81
    %p83 = scmp.eq.s32.totalorder %s15, 0
    %p84 = por %p82, %p83
    %s85 = ssub.s32 %s9, %s16
    %p86 = scmp.eq.s32.totalorder %s85, 0
    %s88 = sadd.s32 %s87, 1
    %s89 = scalar_select %p86, %s87, %s88
    %p92 = pneg %p86
    %p93 = scmp.eq.s32.totalorder %s9, 1
    %p94 = por %p92, %p93
    %p95 = scmp.ne.s32.totalorder %s87, %s90
    %p96 = scmp.eq.s32.totalorder %s9, 0
    %p97 = por %p95, %p96
    %p98 = scmp.ne.s32.totalorder %s87, %s90
    %p99 = scmp.eq.s32.totalorder %s14, 1
    %p100 = por %p98, %p99
    %p101 = scmp.ne.s32.totalorder %s90, %s91
    %p102 = scmp.eq.s32.totalorder %s14, 0
    %p103 = por %p101, %p102
    %p104 = scmp.ne.s32.totalorder %s90, %s91
    %p105 = scmp.eq.s32.totalorder %s15, 1
    %p106 = por %p104, %p105
    %p108 = scmp.ne.s32.totalorder %s91, %s107
    %p109 = scmp.eq.s32.totalorder %s15, 0
    %p110 = por %p108, %p109
    %p111 = scmp.le.s32.totalorder 1, %s9
    %p112 = scmp.lt.s32.totalorder %s9, 3
    %p113 = pnand %p111, %p112
    %p114 = pneg %p113
    // Predicated region
    $region9: #{net_forward.3} parent=5 // pred_check
      _
    $region10: #{net_forward.3} parent=5 // pred_check_branch
      %116 = sbr.rel (%p113) target = $region12
    $region11: #{net_forward.3} parent=5 // pred_region
      %s117 = ssub.s32 %s9, 1
      // Predicated region
      $region13: #{net_forward.3} parent=11 // pred_check
        %p118 = pneg %p56
      $region14: #{net_forward.3} parent=11 // pred_check_branch
        %120 = sbr.rel (%p118) target = $region16
      $region15: #{net_forward.3} parent=11 // pred_region
        _
      $region16: #{net_forward.3} parent=11 // pred_fallthru
        _
      // Predicated region
      $region17: #{net_forward.3} parent=11 // pred_check
        %p121 = pneg %p77
      $region18: #{net_forward.3} parent=11 // pred_check_branch
        %123 = sbr.rel (%p121) target = $region20
      $region19: #{net_forward.3} parent=11 // pred_region
        _
      $region20: #{net_forward.3} parent=11 // pred_fallthru
        _
    $region12: #{net_forward.3} parent=5 // pred_fallthru
      _
    %p124 = scmp.lt.s32.totalorder %s9, 2
    // Predicated region
    $region21: #{net_forward.3} parent=5 // pred_check
      %p125 = pneg %p124
    $region22: #{net_forward.3} parent=5 // pred_check_branch
      %127 = sbr.rel (%p125) target = $region24
    $region23: #{net_forward.3} parent=5 // pred_region
      // Predicated region
      $region25: #{net_forward.3} parent=23 // pred_check
        %p128 = pneg %p29
      $region26: #{net_forward.3} parent=23 // pred_check_branch
        %130 = sbr.rel (%p128) target = $region28
      $region27: #{net_forward.3} parent=23 // pred_region
        %p131 = scmp.lt.s32.totalorder %s9, 1
        %s132 = scalar_select %p131, %s9, 1
        %s133 = smul.addr %s132, 98
        %s134 = smul.addr %s133, 4
        %s135 = scalar_lea.vmem %s0, %s134
      $region28: #{net_forward.3} parent=23 // pred_fallthru
        _
    $region24: #{net_forward.3} parent=5 // pred_fallthru
      _
    %p136 = scmp.le.s32.totalorder 1, %s9
    %p137 = scmp.lt.s32.totalorder %s9, 3
    %p138 = pnand %p136, %p137
    %p139 = pneg %p138
    // Predicated region
    $region29: #{net_forward.3} parent=5 // pred_check
      _
    $region30: #{net_forward.3} parent=5 // pred_check_branch
      %141 = sbr.rel (%p138) target = $region32
    $region31: #{net_forward.3} parent=5 // pred_region
      %s142 = ssub.s32 %s9, 1
      %p143 = scmp.lt.s32.totalorder %s14, 1
      %s144 = scalar_select %p143, %s14, 1
      %s145 = smul.addr %s144, 98
      %s146 = smul.addr %s145, 4
      %s147 = scalar_lea.vmem %s0, %s146
      %p148 = pneg %p35
      %p149 = pneg %p32
      %p150 = pneg %p56
      %p151 = pneg %p53
      %p152 = pneg %p77
      %p153 = pneg %p74
      %p154 = pneg %p103
      %p155 = pneg %p100
      %p156 = scmp.lt.s32.totalorder %s14, 1
      %s157 = scalar_select %p156, %s14, 1
      %s158 = smul.addr %s157, 25
      %s159 = smul.addr %s158, 4
      %s160 = scalar_lea.vmem %s3, %s159
      %p161 = scmp.lt.s32.totalorder %s14, 1
      %s162 = scalar_select %p161, %s14, 1
      %s163 = smul.addr %s162, 98
      %s164 = smul.addr %s163, 4
      %s165 = scalar_lea.vmem %s0, %s164
      %p166 = scmp.lt.s32.totalorder %s14, 1
      %s167 = scalar_select %p166, %s14, 1
      %s168 = smul.addr %s167, 25
      %s169 = smul.addr %s168, 4
      %s170 = scalar_lea.vmem %s3, %s169
      %v172 = vld [vmem:[%s1] sm:$0xf]
      %v173 = vld [vmem:[%s1 + $0x4] sm:$0xf]
      %v174 = vld [vmem:[%s1 + $0x8] sm:$0xf]
      %v175 = vld [vmem:[%s1 + $0xc] sm:$0xf]
      %v176 = vld [vmem:[%s1 + $0x10] sm:$0xf]
      %v177 = vld [vmem:[%s1 + $0x14] sm:$0xf]
      %v178 = vld [vmem:[%s1 + $0x18] sm:$0xf]
      %v179 = vld [vmem:[%s1 + $0x1c] sm:$0xf]
      %v180 = vld [vmem:[%s1 + $0x20] sm:$0xf]
      %v181 = vld [vmem:[%s1 + $0x24] sm:$0xf]
      %v182 = vld [vmem:[%s1 + $0x28] sm:$0xf]
      %v183 = vld [vmem:[%s1 + $0x2c] sm:$0xf]
      %v184 = vld [vmem:[%s1 + $0x30] sm:$0xf]
      %v185 = vld [vmem:[%s1 + $0x34] sm:$0xf]
      %v186 = vld [vmem:[%s1 + $0x38] sm:$0xf]
      %v187 = vld [vmem:[%s1 + $0x3c] sm:$0xf]
      %v188 = vld [vmem:[%s2] sm:$0x1]
      %v190 = vlaneseq
      %v191 = vshrl.u32 %v190, 7
      %v192 = vsub.s32 0, %v191
      %v193 = vrot.slane %v188, %v192
      %v195 = vld [vmem:[%s165] sm:$0xf]
      %v196 = vld [vmem:[%s165 + $0x4] sm:$0xf]
      %v197 = vld [vmem:[%s165 + $0x8] sm:$0xf]
      %v198 = vld [vmem:[%s165 + $0xc] sm:$0xf]
      %v199 = vld [vmem:[%s165 + $0x10] sm:$0xf]
      %v200 = vld [vmem:[%s165 + $0x14] sm:$0xf]
      %v201 = vld [vmem:[%s165 + $0x18] sm:$0xf]
      %v202 = vld [vmem:[%s165 + $0x1c] sm:$0xf]
      %v203 = vld [vmem:[%s165 + $0x20] sm:$0xf]
      %v204 = vld [vmem:[%s165 + $0x24] sm:$0xf]
      %v205 = vld [vmem:[%s165 + $0x28] sm:$0xf]
      %v206 = vld [vmem:[%s165 + $0x2c] sm:$0xf]
      %v207 = vld [vmem:[%s165 + $0x30] sm:$0xf]
      %v208 = vld [vmem:[%s165 + $0x34] sm:$0xf]
      %v223 = vunpack.c.l.b16 %v195
      %v224 = vunpack.c.l.b16 %v196
      %v225 = vunpack.c.l.b16 %v197
      %v226 = vunpack.c.l.b16 %v198
      %v227 = vunpack.c.l.b16 %v199
      %v228 = vunpack.c.l.b16 %v200
      %v229 = vunpack.c.l.b16 %v201
      %v230 = vunpack.c.l.b16 %v202
      %v231 = vunpack.c.l.b16 %v203
      %v232 = vunpack.c.l.b16 %v204
      %v233 = vunpack.c.l.b16 %v205
      %v234 = vunpack.c.l.b16 %v206
      %v235 = vunpack.c.l.b16 %v207
      %v236 = vunpack.c.l.b16 %v208
      %v237 = vpack.c.b16 %v224, %v223
      %v238 = vpack.c.b16 %v226, %v225
      %v239 = vpack.c.b16 %v228, %v227
      %v240 = vpack.c.b16 %v230, %v229
      %v241 = vpack.c.b16 %v232, %v231
      %v242 = vpack.c.b16 %v234, %v233
      %v243 = vpack.c.b16 %v236, %v235
      %v267 = vunpack.c.l.b16 %v172
      %v268 = vunpack.c.l.b16 %v173
      %v269 = vunpack.c.l.b16 %v174
      %v270 = vunpack.c.l.b16 %v175
      %v271 = vunpack.c.l.b16 %v176
      %v272 = vunpack.c.l.b16 %v177
      %v273 = vunpack.c.l.b16 %v178
      %v274 = vunpack.c.l.b16 %v179
      %v275 = vunpack.c.l.b16 %v180
      %v276 = vunpack.c.l.b16 %v181
      %v277 = vunpack.c.l.b16 %v182
      %v278 = vunpack.c.l.b16 %v183
      %v279 = vunpack.c.l.b16 %v184
      %v280 = vunpack.c.l.b16 %v185
      %v281 = vunpack.c.l.b16 %v186
      %v282 = vunpack.c.l.b16 %v187
      %v283 = vpack.c.b16 %v268, %v267
      %v284 = vpack.c.b16 %v270, %v269
      %v285 = vpack.c.b16 %v272, %v271
      %v286 = vpack.c.b16 %v274, %v273
      %v287 = vpack.c.b16 %v276, %v275
      %v288 = vpack.c.b16 %v278, %v277
      %v289 = vpack.c.b16 %v280, %v279
      %v290 = vpack.c.b16 %v282, %v281
      %299 = vmatprep.subr.bf16.mxu0 0
      %300 = vmatpush1.bf16.msra.mxu0 %v283
      %301 = vmatprep.subr.bf16.mxu0 0
      %302 = vmatpush1.bf16.msra.mxu0 %v284
      %303 = vmatprep.subr.bf16.mxu0 0
      %304 = vmatpush1.bf16.msra.mxu0 %v285
      %305 = vmatprep.subr.bf16.mxu0 0
      %306 = vmatpush1.bf16.msra.mxu0 %v286
      %307 = vmatprep.subr.bf16.mxu0 0
      %308 = vmatpush1.bf16.msra.mxu0 %v287
      %309 = vmatprep.subr.bf16.mxu0 0
      %310 = vmatpush1.bf16.msra.mxu0 %v288
      %311 = vmatprep.subr.bf16.mxu0 0
      %312 = vmatpush1.bf16.msra.mxu0 %v289
      %313 = vmatprep.subr.bf16.mxu0 0
      %314 = vmatpush1.bf16.msra.mxu0 %v290
      %315 = vmatprep.subr.bf16.mxu0 0
      %316 = vmatpush1.bf16.msra.mxu0 0
      %317 = vmatprep.subr.bf16.mxu0 0
      %318 = vmatpush1.bf16.msra.mxu0 0
      %319 = vmatprep.subr.bf16.mxu0 0
      %320 = vmatpush1.bf16.msra.mxu0 0
      %321 = vmatprep.subr.bf16.mxu0 0
      %322 = vmatpush1.bf16.msra.mxu0 0
      %323 = vmatprep.subr.bf16.mxu0 0
      %324 = vmatpush1.bf16.msra.mxu0 0
      %325 = vmatprep.subr.bf16.mxu0 0
      %326 = vmatpush1.bf16.msra.mxu0 0
      %327 = vmatprep.subr.bf16.mxu0 0
      %328 = vmatpush1.bf16.msra.mxu0 0
      %329 = vmatprep.subr.bf16.mxu0 0
      %330 = vmatpush1.bf16.msra.mxu0 0
      %331 = vmatprep.mubr.bf16.mxu0 0
      %332 = vmatmul.mubr.bf16.gmra.mrb[0].mxu0 %v237
      %v333 = vpop.f32.mrb[0].mxu0
      %v334 = vadd.f32 0.0, %v333
      %v335 = vpop.f32.mrb[0].mxu0
      %v336 = vpop.f32.mrb[0].mxu0
      %v337 = vadd.f32 0.0, %v336
      %v338 = vpop.f32.mrb[0].mxu0
      %339 = vmatprep.mubr.bf16.mxu0 0
      %340 = vmatmul.mubr.bf16.gmra.mrb[0].mxu0 %v238
      %v341 = vpop.f32.mrb[0].mxu0
      %v342 = vadd.f32 0.0, %v341
      %v343 = vpop.f32.mrb[0].mxu0
      %v344 = vpop.f32.mrb[0].mxu0
      %v345 = vadd.f32 0.0, %v344
      %v346 = vpop.f32.mrb[0].mxu0
      %347 = vmatprep.mubr.bf16.mxu0 0
      %348 = vmatmul.mubr.bf16.gmra.mrb[0].mxu0 %v239
      %v349 = vpop.f32.mrb[0].mxu0
      %v350 = vadd.f32 0.0, %v349
      %v351 = vpop.f32.mrb[0].mxu0
      %v352 = vpop.f32.mrb[0].mxu0
      %v353 = vadd.f32 0.0, %v352
      %v354 = vpop.f32.mrb[0].mxu0
      %355 = vmatprep.mubr.bf16.mxu0 0
      %356 = vmatmul.mubr.bf16.gmra.mrb[0].mxu0 %v240
      %v357 = vpop.f32.mrb[0].mxu0
      %v358 = vadd.f32 0.0, %v357
      %v359 = vpop.f32.mrb[0].mxu0
      %v360 = vpop.f32.mrb[0].mxu0
      %v361 = vadd.f32 0.0, %v360
      %v362 = vpop.f32.mrb[0].mxu0
      %363 = vmatprep.mubr.bf16.mxu0 0
      %364 = vmatmul.mubr.bf16.gmra.mrb[0].mxu0 %v241
      %v365 = vpop.f32.mrb[0].mxu0
      %v366 = vadd.f32 0.0, %v365
      %v367 = vpop.f32.mrb[0].mxu0
      %v368 = vpop.f32.mrb[0].mxu0
      %v369 = vadd.f32 0.0, %v368
      %v370 = vpop.f32.mrb[0].mxu0
      %371 = vmatprep.mubr.bf16.mxu0 0
      %372 = vmatmul.mubr.bf16.gmra.mrb[0].mxu0 %v242
      %v373 = vpop.f32.mrb[0].mxu0
      %v374 = vadd.f32 0.0, %v373
      %v375 = vpop.f32.mrb[0].mxu0
      %v376 = vpop.f32.mrb[0].mxu0
      %v377 = vadd.f32 0.0, %v376
      %v378 = vpop.f32.mrb[0].mxu0
      %379 = vmatprep.mubr.bf16.mxu0 0
      %380 = vmatmul.mubr.bf16.gmra.mrb[0].mxu0 %v243
      %v381 = vpop.f32.mrb[0].mxu0
      %v382 = vadd.f32 0.0, %v381
      %v383 = vpop.f32.mrb[0].mxu0
      %v384 = vpop.f32.mrb[0].mxu0
      %v385 = vadd.f32 0.0, %v384
      %v386 = vpop.f32.mrb[0].mxu0
      %387 = vdwg.mxu0
      %388 = vst [vmem:[#allocation2] sm:$0xff] %v334
      %389 = vst [vmem:[#allocation2 + $0x8] sm:$0xff] %v337
      %390 = vst [vmem:[#allocation2 + $0x10] sm:$0xff] %v342
      %391 = vst [vmem:[#allocation2 + $0x18] sm:$0xff] %v345
      %392 = vst [vmem:[#allocation2 + $0x20] sm:$0xff] %v350
      %393 = vst [vmem:[#allocation2 + $0x28] sm:$0xff] %v353
      %394 = vst [vmem:[#allocation2 + $0x30] sm:$0xff] %v358
      %395 = vst [vmem:[#allocation2 + $0x38] sm:$0xff] %v361
      %396 = vst [vmem:[#allocation2 + $0x40] sm:$0xff] %v366
      %397 = vst [vmem:[#allocation2 + $0x48] sm:$0xff] %v369
      %398 = vst [vmem:[#allocation2 + $0x50] sm:$0xff] %v374
      %399 = vst [vmem:[#allocation2 + $0x58] sm:$0xff] %v377
      %400 = vst [vmem:[#allocation2 + $0x60] sm:$0xff] %v382
      %401 = vst [vmem:[#allocation2 + $0x68] sm:$0xff] %v385
      %v402 = vld [vmem:[#allocation2] sm:$0xff]
      %v403 = vld [vmem:[#allocation2 + $0x8] sm:$0xff]
      %v404 = vld [vmem:[#allocation2 + $0x10] sm:$0xff]
      %v405 = vld [vmem:[#allocation2 + $0x18] sm:$0xf]
      %v406 = vld [vmem:[#allocation2 + $0x1c] sm:$0xff]
      %v407 = vld [vmem:[#allocation2 + $0x24] sm:$0xff]
      %v408 = vld [vmem:[#allocation2 + $0x2c] sm:$0xff]
      %v409 = vld [vmem:[#allocation2 + $0x34] sm:$0xf]
      %v410 = vmax.f32 %v402, %v406
      %v411 = vmax.f32 %v403, %v407
      %v412 = vmax.f32 %v404, %v408
      %v413 = vmax.f32 %v405, %v409
      %414 = vst [vmem:[#allocation3] sm:$0xff] %v410
      %415 = vst [vmem:[#allocation3 + $0x8] sm:$0xff] %v411
      %416 = vst [vmem:[#allocation3 + $0x10] sm:$0xff] %v412
      %417 = vst [vmem:[#allocation3 + $0x18] sm:$0xf] %v413
      %v418 = vld [vmem:[#allocation2 + $0x38] sm:$0xff]
      %v419 = vld [vmem:[#allocation2 + $0x40] sm:$0xff]
      %v420 = vld [vmem:[#allocation2 + $0x48] sm:$0xff]
      %v421 = vld [vmem:[#allocation2 + $0x50] sm:$0xf]
      %v422 = vld [vmem:[#allocation2 + $0x54] sm:$0xff]
      %v423 = vld [vmem:[#allocation2 + $0x5c] sm:$0xff]
      %v424 = vld [vmem:[#allocation2 + $0x64] sm:$0xff]
      %v425 = vld [vmem:[#allocation2 + $0x6c] sm:$0xf]
      %v426 = vmax.f32 %v418, %v422
      %v427 = vmax.f32 %v419, %v423
      %v428 = vmax.f32 %v420, %v424
      %v429 = vmax.f32 %v421, %v425
      %430 = vst [vmem:[#allocation3 + $0x1c] sm:$0xff] %v426
      %431 = vst [vmem:[#allocation3 + $0x24] sm:$0xff] %v427
      %432 = vst [vmem:[#allocation3 + $0x2c] sm:$0xff] %v428
      %433 = vst [vmem:[#allocation3 + $0x34] sm:$0xf] %v429
      %v434 = vld [vmem:[#allocation3] ss:$2 sm:$0xff]
      %s435 = scalar_lea.vmem [#allocation3], 16
      %v436 = vld [vmem:[%s435] ss:$2 sm:$0xff]
      %s437 = scalar_lea.vmem [#allocation3], 32
      %v438 = vld [vmem:[%s437] ss:$2 sm:$0xff]
      %s439 = scalar_lea.vmem [#allocation3], 48
      %v440 = vld [vmem:[%s439] ss:$2 sm:$0xf]
      %s441 = scalar_lea.vmem [#allocation3], 1
      %v442 = vld [vmem:[%s441] ss:$2 sm:$0xff]
      %s443 = scalar_lea.vmem [#allocation3], 17
      %v444 = vld [vmem:[%s443] ss:$2 sm:$0xff]
      %s445 = scalar_lea.vmem [#allocation3], 33
      %v446 = vld [vmem:[%s445] ss:$2 sm:$0xff]
      %s447 = scalar_lea.vmem [#allocation3], 49
      %v448 = vld [vmem:[%s447] ss:$2 sm:$0xf]
      %v449 = vmax.f32 %v434, %v442
      %v450 = vmax.f32 %v436, %v444
      %v451 = vmax.f32 %v438, %v446
      %v452 = vmax.f32 %v440, %v448
      %v453 = vadd.f32 %v449, %v193
      %v454 = vadd.f32 %v450, %v193
      %v455 = vadd.f32 %v451, %v193
      %v456 = vadd.f32 %v452, %v193
      %v457 = vmax.f32 %v453, 0.0
      %v458 = vmax.f32 %v454, 0.0
      %v459 = vmax.f32 %v455, 0.0
      %v460 = vmax.f32 %v456, 0.0
      %v461 = vpack.c.bf16 %v458, %v457
      %v462 = vpack.c.bf16 %v460, %v459
      %v465 = vunpack.c.l.b16 %v461
      %v466 = vunpack.c.h.b16 %v461
      %v467 = vunpack.c.l.b16 %v462
      %v468 = vunpack.c.h.b16 %v462
      %v469 = vpack.c.b16 %v465, %v465
      %v470 = vpack.c.b16 %v466, %v466
      %v471 = vpack.c.b16 %v467, %v467
      %v472 = vpack.c.b16 %v468, %v468
      %477 = vst [vmem:[%s170] sm:$0xf] %v469
      %478 = vst [vmem:[%s170 + $0x4] sm:$0xf] %v470
      %479 = vst [vmem:[%s170 + $0x8] sm:$0xf] %v471
      %480 = vst [vmem:[%s170 + $0xc] sm:$0x3] %v472
      %v481 = vld [vmem:[%s165 + $0x38] sm:$0xf]
      %v482 = vld [vmem:[%s165 + $0x3c] sm:$0xf]
      %v483 = vld [vmem:[%s165 + $0x40] sm:$0xf]
      %v484 = vld [vmem:[%s165 + $0x44] sm:$0xf]
      %v485 = vld [vmem:[%s165 + $0x48] sm:$0xf]
      %v486 = vld [vmem:[%s165 + $0x4c] sm:$0xf]
      %v487 = vld [vmem:[%s165 + $0x50] sm:$0xf]
      %v488 = vld [vmem:[%s165 + $0x54] sm:$0xf]
      %v489 = vld [vmem:[%s165 + $0x58] sm:$0xf]
      %v490 = vld [vmem:[%s165 + $0x5c] sm:$0xf]
      %v491 = vld [vmem:[%s165 + $0x60] sm:$0xf]
      %v492 = vld [vmem:[%s165 + $0x64] sm:$0xf]
      %v493 = vld [vmem:[%s165 + $0x68] sm:$0xf]
      %v494 = vld [vmem:[%s165 + $0x6c] sm:$0xf]
      %v509 = vunpack.c.l.b16 %v481
      %v510 = vunpack.c.l.b16 %v482
      %v511 = vunpack.c.l.b16 %v483
      %v512 = vunpack.c.l.b16 %v484
      %v513 = vunpack.c.l.b16 %v485
      %v514 = vunpack.c.l.b16 %v486
      %v515 = vunpack.c.l.b16 %v487
      %v516 = vunpack.c.l.b16 %v488
      %v517 = vunpack.c.l.b16 %v489
      %v518 = vunpack.c.l.b16 %v490
      %v519 = vunpack.c.l.b16 %v491
      %v520 = vunpack.c.l.b16 %v492
      %v521 = vunpack.c.l.b16 %v493
      %v522 = vunpack.c.l.b16 %v494
      %v523 = vpack.c.b16 %v510, %v509
      %v524 = vpack.c.b16 %v512, %v511
      %v525 = vpack.c.b16 %v514, %v513
      %v526 = vpack.c.b16 %v516, %v515
      %v527 = vpack.c.b16 %v518, %v517
      %v528 = vpack.c.b16 %v520, %v519
      %v529 = vpack.c.b16 %v522, %v521
      %537 = vmatprep.subr.bf16.mxu0 0
      %538 = vmatpush1.bf16.msra.mxu0 %v283
      %539 = vmatprep.subr.bf16.mxu0 0
      %540 = vmatpush1.bf16.msra.mxu0 %v284
      %541 = vmatprep.subr.bf16.mxu0 0
      %542 = vmatpush1.bf16.msra.mxu0 %v285
      %543 = vmatprep.subr.bf16.mxu0 0
      %544 = vmatpush1.bf16.msra.mxu0 %v286
      %545 = vmatprep.subr.bf16.mxu0 0
      %546 = vmatpush1.bf16.msra.mxu0 %v287
      %547 = vmatprep.subr.bf16.mxu0 0
      %548 = vmatpush1.bf16.msra.mxu0 %v288
      %549 = vmatprep.subr.bf16.mxu0 0
      %550 = vmatpush1.bf16.msra.mxu0 %v289
      %551 = vmatprep.subr.bf16.mxu0 0
      %552 = vmatpush1.bf16.msra.mxu0 %v290
      %553 = vmatprep.subr.bf16.mxu0 0
      %554 = vmatpush1.bf16.msra.mxu0 0
      %555 = vmatprep.subr.bf16.mxu0 0
      %556 = vmatpush1.bf16.msra.mxu0 0
      %557 = vmatprep.subr.bf16.mxu0 0
      %558 = vmatpush1.bf16.msra.mxu0 0
      %559 = vmatprep.subr.bf16.mxu0 0
      %560 = vmatpush1.bf16.msra.mxu0 0
      %561 = vmatprep.subr.bf16.mxu0 0
      %562 = vmatpush1.bf16.msra.mxu0 0
      %563 = vmatprep.subr.bf16.mxu0 0
      %564 = vmatpush1.bf16.msra.mxu0 0
      %565 = vmatprep.subr.bf16.mxu0 0
      %566 = vmatpush1.bf16.msra.mxu0 0
      %567 = vmatprep.subr.bf16.mxu0 0
      %568 = vmatpush1.bf16.msra.mxu0 0
      %569 = vmatprep.mubr.bf16.mxu0 0
      %570 = vmatmul.mubr.bf16.gmra.mrb[0].mxu0 %v523
      %v571 = vpop.f32.mrb[0].mxu0
      %v572 = vadd.f32 0.0, %v571
      %v573 = vpop.f32.mrb[0].mxu0
      %v574 = vpop.f32.mrb[0].mxu0
      %v575 = vadd.f32 0.0, %v574
      %v576 = vpop.f32.mrb[0].mxu0
      %577 = vmatprep.mubr.bf16.mxu0 0
      %578 = vmatmul.mubr.bf16.gmra.mrb[0].mxu0 %v524
      %v579 = vpop.f32.mrb[0].mxu0
      %v580 = vadd.f32 0.0, %v579
      %v581 = vpop.f32.mrb[0].mxu0
      %v582 = vpop.f32.mrb[0].mxu0
      %v583 = vadd.f32 0.0, %v582
      %v584 = vpop.f32.mrb[0].mxu0
      %585 = vmatprep.mubr.bf16.mxu0 0
      %586 = vmatmul.mubr.bf16.gmra.mrb[0].mxu0 %v525
      %v587 = vpop.f32.mrb[0].mxu0
      %v588 = vadd.f32 0.0, %v587
      %v589 = vpop.f32.mrb[0].mxu0
      %v590 = vpop.f32.mrb[0].mxu0
      %v591 = vadd.f32 0.0, %v590
      %v592 = vpop.f32.mrb[0].mxu0
      %593 = vmatprep.mubr.bf16.mxu0 0
      %594 = vmatmul.mubr.bf16.gmra.mrb[0].mxu0 %v526
      %v595 = vpop.f32.mrb[0].mxu0
      %v596 = vadd.f32 0.0, %v595
      %v597 = vpop.f32.mrb[0].mxu0
      %v598 = vpop.f32.mrb[0].mxu0
      %v599 = vadd.f32 0.0, %v598
      %v600 = vpop.f32.mrb[0].mxu0
      %601 = vmatprep.mubr.bf16.mxu0 0
      %602 = vmatmul.mubr.bf16.gmra.mrb[0].mxu0 %v527
      %v603 = vpop.f32.mrb[0].mxu0
      %v604 = vadd.f32 0.0, %v603
      %v605 = vpop.f32.mrb[0].mxu0
      %v606 = vpop.f32.mrb[0].mxu0
      %v607 = vadd.f32 0.0, %v606
      %v608 = vpop.f32.mrb[0].mxu0
      %609 = vmatprep.mubr.bf16.mxu0 0
      %610 = vmatmul.mubr.bf16.gmra.mrb[0].mxu0 %v528
      %v611 = vpop.f32.mrb[0].mxu0
      %v612 = vadd.f32 0.0, %v611
      %v613 = vpop.f32.mrb[0].mxu0
      %v614 = vpop.f32.mrb[0].mxu0
      %v615 = vadd.f32 0.0, %v614
      %v616 = vpop.f32.mrb[0].mxu0
      %617 = vmatprep.mubr.bf16.mxu0 0
      %618 = vmatmul.mubr.bf16.gmra.mrb[0].mxu0 %v529
      %v619 = vpop.f32.mrb[0].mxu0
      %v620 = vadd.f32 0.0, %v619
      %v621 = vpop.f32.mrb[0].mxu0
      %v622 = vpop.f32.mrb[0].mxu0
      %v623 = vadd.f32 0.0, %v622
      %v624 = vpop.f32.mrb[0].mxu0
      %625 = vdwg.mxu0
      %626 = vst [vmem:[#allocation2] sm:$0xff] %v572
      %627 = vst [vmem:[#allocation2 + $0x8] sm:$0xff] %v575
      %628 = vst [vmem:[#allocation2 + $0x10] sm:$0xff] %v580
      %629 = vst [vmem:[#allocation2 + $0x18] sm:$0xff] %v583
      %630 = vst [vmem:[#allocation2 + $0x20] sm:$0xff] %v588
      %631 = vst [vmem:[#allocation2 + $0x28] sm:$0xff] %v591
      %632 = vst [vmem:[#allocation2 + $0x30] sm:$0xff] %v596
      %633 = vst [vmem:[#allocation2 + $0x38] sm:$0xff] %v599
      %634 = vst [vmem:[#allocation2 + $0x40] sm:$0xff] %v604
      %635 = vst [vmem:[#allocation2 + $0x48] sm:$0xff] %v607
      %636 = vst [vmem:[#allocation2 + $0x50] sm:$0xff] %v612
      %637 = vst [vmem:[#allocation2 + $0x58] sm:$0xff] %v615
      %638 = vst [vmem:[#allocation2 + $0x60] sm:$0xff] %v620
      %639 = vst [vmem:[#allocation2 + $0x68] sm:$0xff] %v623
      %v640 = vld [vmem:[#allocation2] sm:$0xff]
      %v641 = vld [vmem:[#allocation2 + $0x8] sm:$0xff]
      %v642 = vld [vmem:[#allocation2 + $0x10] sm:$0xff]
      %v643 = vld [vmem:[#allocation2 + $0x18] sm:$0xf]
      %v644 = vld [vmem:[#allocation2 + $0x1c] sm:$0xff]
      %v645 = vld [vmem:[#allocation2 + $0x24] sm:$0xff]
      %v646 = vld [vmem:[#allocation2 + $0x2c] sm:$0xff]
      %v647 = vld [vmem:[#allocation2 + $0x34] sm:$0xf]
      %v648 = vmax.f32 %v640, %v644
      %v649 = vmax.f32 %v641, %v645
      %v650 = vmax.f32 %v642, %v646
      %v651 = vmax.f32 %v643, %v647
      %652 = vst [vmem:[#allocation3] sm:$0xff] %v648
      %653 = vst [vmem:[#allocation3 + $0x8] sm:$0xff] %v649
      %654 = vst [vmem:[#allocation3 + $0x10] sm:$0xff] %v650
      %655 = vst [vmem:[#allocation3 + $0x18] sm:$0xf] %v651
      %v656 = vld [vmem:[#allocation2 + $0x38] sm:$0xff]
      %v657 = vld [vmem:[#allocation2 + $0x40] sm:$0xff]
      %v658 = vld [vmem:[#allocation2 + $0x48] sm:$0xff]
      %v659 = vld [vmem:[#allocation2 + $0x50] sm:$0xf]
      %v660 = vld [vmem:[#allocation2 + $0x54] sm:$0xff]
      %v661 = vld [vmem:[#allocation2 + $0x5c] sm:$0xff]
      %v662 = vld [vmem:[#allocation2 + $0x64] sm:$0xff]
      %v663 = vld [vmem:[#allocation2 + $0x6c] sm:$0xf]
      %v664 = vmax.f32 %v656, %v660
      %v665 = vmax.f32 %v657, %v661
      %v666 = vmax.f32 %v658, %v662
      %v667 = vmax.f32 %v659, %v663
      %668 = vst [vmem:[#allocation3 + $0x1c] sm:$0xff] %v664
      %669 = vst [vmem:[#allocation3 + $0x24] sm:$0xff] %v665
      %670 = vst [vmem:[#allocation3 + $0x2c] sm:$0xff] %v666
      %671 = vst [vmem:[#allocation3 + $0x34] sm:$0xf] %v667
      %v672 = vld [vmem:[#allocation3] ss:$2 sm:$0xff]
      %v673 = vld [vmem:[%s435] ss:$2 sm:$0xff]
      %v674 = vld [vmem:[%s437] ss:$2 sm:$0xff]
      %v675 = vld [vmem:[%s439] ss:$2 sm:$0xf]
      %v676 = vld [vmem:[%s441] ss:$2 sm:$0xff]
      %v677 = vld [vmem:[%s443] ss:$2 sm:$0xff]
      %v678 = vld [vmem:[%s445] ss:$2 sm:$0xff]
      %v679 = vld [vmem:[%s447] ss:$2 sm:$0xf]
      %v680 = vmax.f32 %v672, %v676
      %v681 = vmax.f32 %v673, %v677
      %v682 = vmax.f32 %v674, %v678
      %v683 = vmax.f32 %v675, %v679
      %v684 = vadd.f32 %v680, %v193
      %v685 = vadd.f32 %v681, %v193
      %v686 = vadd.f32 %v682, %v193
      %v687 = vadd.f32 %v683, %v193
      %v688 = vmax.f32 %v684, 0.0
      %v689 = vmax.f32 %v685, 0.0
      %v690 = vmax.f32 %v686, 0.0
      %v691 = vmax.f32 %v687, 0.0
      %v692 = vpack.c.bf16 %v689, %v688
      %v693 = vpack.c.bf16 %v691, %v690
      %v696 = vunpack.c.l.b16 %v692
      %v697 = vunpack.c.h.b16 %v692
      %v698 = vunpack.c.l.b16 %v693
      %v699 = vunpack.c.h.b16 %v693
      %v700 = vpack.c.b16 %v696, %v696
      %v701 = vpack.c.b16 %v697, %v697
      %v702 = vpack.c.b16 %v698, %v698
      %v703 = vpack.c.b16 %v699, %v699
      %vm704 = vcmask 1041408
      %vm705 = vcmask 1045508
      %vm706 = vmor %vm704, %vm705
      %v707 = vrot.slane %v700, 6
      %v708 = vrot.slane %v707, 4
      %v709 = vrot.slane %v701, 6
      %v710 = vsel %vm706, %v708, %v709
      %v711 = vrot.slane %v709, 4
      %v712 = vrot.slane %v702, 6
      %v713 = vsel %vm706, %v711, %v712
      %v714 = vrot.slane %v712, 4
      %v715 = vrot.slane %v703, 6
      %v716 = vsel %vm706, %v714, %v715
      %721 = vst [vmem:[%s170 + $0xc] sm:$0xc] %v707
      %722 = vst [vmem:[%s170 + $0x10] sm:$0xf] %v710
      %723 = vst [vmem:[%s170 + $0x14] sm:$0xf] %v713
      %724 = vst [vmem:[%s170 + $0x18] sm:$0xf] %v716
      %v725 = vld [vmem:[%s165 + $0x70] sm:$0xf]
      %v726 = vld [vmem:[%s165 + $0x74] sm:$0xf]
      %v727 = vld [vmem:[%s165 + $0x78] sm:$0xf]
      %v728 = vld [vmem:[%s165 + $0x7c] sm:$0xf]
      %v729 = vld [vmem:[%s165 + $0x80] sm:$0xf]
      %v730 = vld [vmem:[%s165 + $0x84] sm:$0xf]
      %v731 = vld [vmem:[%s165 + $0x88] sm:$0xf]
      %v732 = vld [vmem:[%s165 + $0x8c] sm:$0xf]
      %v733 = vld [vmem:[%s165 + $0x90] sm:$0xf]
      %v734 = vld [vmem:[%s165 + $0x94] sm:$0xf]
      %v735 = vld [vmem:[%s165 + $0x98] sm:$0xf]
      %v736 = vld [vmem:[%s165 + $0x9c] sm:$0xf]
      %v737 = vld [vmem:[%s165 + $0xa0] sm:$0xf]
      %v738 = vld [vmem:[%s165 + $0xa4] sm:$0xf]
      %v753 = vunpack.c.l.b16 %v725
      %v754 = vunpack.c.l.b16 %v726
      %v755 = vunpack.c.l.b16 %v727
      %v756 = vunpack.c.l.b16 %v728
      %v757 = vunpack.c.l.b16 %v729
      %v758 = vunpack.c.l.b16 %v730
      %v759 = vunpack.c.l.b16 %v731
      %v760 = vunpack.c.l.b16 %v732
      %v761 = vunpack.c.l.b16 %v733
      %v762 = vunpack.c.l.b16 %v734
      %v763 = vunpack.c.l.b16 %v735
      %v764 = vunpack.c.l.b16 %v736
      %v765 = vunpack.c.l.b16 %v737
      %v766 = vunpack.c.l.b16 %v738
      %v767 = vpack.c.b16 %v754, %v753
      %v768 = vpack.c.b16 %v756, %v755
      %v769 = vpack.c.b16 %v758, %v757
      %v770 = vpack.c.b16 %v760, %v759
      %v771 = vpack.c.b16 %v762, %v761
      %v772 = vpack.c.b16 %v764, %v763
      %v773 = vpack.c.b16 %v766, %v765
      %781 = vmatprep.subr.bf16.mxu0 0
      %782 = vmatpush1.bf16.msra.mxu0 %v283
      %783 = vmatprep.subr.bf16.mxu0 0
      %784 = vmatpush1.bf16.msra.mxu0 %v284
      %785 = vmatprep.subr.bf16.mxu0 0
      %786 = vmatpush1.bf16.msra.mxu0 %v285
      %787 = vmatprep.subr.bf16.mxu0 0
      %788 = vmatpush1.bf16.msra.mxu0 %v286
      %789 = vmatprep.subr.bf16.mxu0 0
      %790 = vmatpush1.bf16.msra.mxu0 %v287
      %791 = vmatprep.subr.bf16.mxu0 0
      %792 = vmatpush1.bf16.msra.mxu0 %v288
      %793 = vmatprep.subr.bf16.mxu0 0
      %794 = vmatpush1.bf16.msra.mxu0 %v289
      %795 = vmatprep.subr.bf16.mxu0 0
      %796 = vmatpush1.bf16.msra.mxu0 %v290
      %797 = vmatprep.subr.bf16.mxu0 0
      %798 = vmatpush1.bf16.msra.mxu0 0
      %799 = vmatprep.subr.bf16.mxu0 0
      %800 = vmatpush1.bf16.msra.mxu0 0
      %801 = vmatprep.subr.bf16.mxu0 0
      %802 = vmatpush1.bf16.msra.mxu0 0
      %803 = vmatprep.subr.bf16.mxu0 0
      %804 = vmatpush1.bf16.msra.mxu0 0
      %805 = vmatprep.subr.bf16.mxu0 0
      %806 = vmatpush1.bf16.msra.mxu0 0
      %807 = vmatprep.subr.bf16.mxu0 0
      %808 = vmatpush1.bf16.msra.mxu0 0
      %809 = vmatprep.subr.bf16.mxu0 0
      %810 = vmatpush1.bf16.msra.mxu0 0
      %811 = vmatprep.subr.bf16.mxu0 0
      %812 = vmatpush1.bf16.msra.mxu0 0
      %813 = vmatprep.mubr.bf16.mxu0 0
      %814 = vmatmul.mubr.bf16.gmra.mrb[0].mxu0 %v767
      %v815 = vpop.f32.mrb[0].mxu0
      %v816 = vadd.f32 0.0, %v815
      %v817 = vpop.f32.mrb[0].mxu0
      %v818 = vpop.f32.mrb[0].mxu0
      %v819 = vadd.f32 0.0, %v818
      %v820 = vpop.f32.mrb[0].mxu0
      %821 = vmatprep.mubr.bf16.mxu0 0
      %822 = vmatmul.mubr.bf16.gmra.mrb[0].mxu0 %v768
      %v823 = vpop.f32.mrb[0].mxu0
      %v824 = vadd.f32 0.0, %v823
      %v825 = vpop.f32.mrb[0].mxu0
      %v826 = vpop.f32.mrb[0].mxu0
      %v827 = vadd.f32 0.0, %v826
      %v828 = vpop.f32.mrb[0].mxu0
      %829 = vmatprep.mubr.bf16.mxu0 0
      %830 = vmatmul.mubr.bf16.gmra.mrb[0].mxu0 %v769
      %v831 = vpop.f32.mrb[0].mxu0
      %v832 = vadd.f32 0.0, %v831
      %v833 = vpop.f32.mrb[0].mxu0
      %v834 = vpop.f32.mrb[0].mxu0
      %v835 = vadd.f32 0.0, %v834
      %v836 = vpop.f32.mrb[0].mxu0
      %837 = vmatprep.mubr.bf16.mxu0 0
      %838 = vmatmul.mubr.bf16.gmra.mrb[0].mxu0 %v770
      %v839 = vpop.f32.mrb[0].mxu0
      %v840 = vadd.f32 0.0, %v839
      %v841 = vpop.f32.mrb[0].mxu0
      %v842 = vpop.f32.mrb[0].mxu0
      %v843 = vadd.f32 0.0, %v842
      %v844 = vpop.f32.mrb[0].mxu0
      %845 = vmatprep.mubr.bf16.mxu0 0
      %846 = vmatmul.mubr.bf16.gmra.mrb[0].mxu0 %v771
      %v847 = vpop.f32.mrb[0].mxu0
      %v848 = vadd.f32 0.0, %v847
      %v849 = vpop.f32.mrb[0].mxu0
      %v850 = vpop.f32.mrb[0].mxu0
      %v851 = vadd.f32 0.0, %v850
      %v852 = vpop.f32.mrb[0].mxu0
      %853 = vmatprep.mubr.bf16.mxu0 0
      %854 = vmatmul.mubr.bf16.gmra.mrb[0].mxu0 %v772
      %v855 = vpop.f32.mrb[0].mxu0
      %v856 = vadd.f32 0.0, %v855
      %v857 = vpop.f32.mrb[0].mxu0
      %v858 = vpop.f32.mrb[0].mxu0
      %v859 = vadd.f32 0.0, %v858
      %v860 = vpop.f32.mrb[0].mxu0
      %861 = vmatprep.mubr.bf16.mxu0 0
      %862 = vmatmul.mubr.bf16.gmra.mrb[0].mxu0 %v773
      %v863 = vpop.f32.mrb[0].mxu0
      %v864 = vadd.f32 0.0, %v863
      %v865 = vpop.f32.mrb[0].mxu0
      %v866 = vpop.f32.mrb[0].mxu0
      %v867 = vadd.f32 0.0, %v866
      %v868 = vpop.f32.mrb[0].mxu0
      %869 = vdwg.mxu0
      %870 = vst [vmem:[#allocation2] sm:$0xff] %v816
      %871 = vst [vmem:[#allocation2 + $0x8] sm:$0xff] %v819
      %872 = vst [vmem:[#allocation2 + $0x10] sm:$0xff] %v824
      %873 = vst [vmem:[#allocation2 + $0x18] sm:$0xff] %v827
      %874 = vst [vmem:[#allocation2 + $0x20] sm:$0xff] %v832
      %875 = vst [vmem:[#allocation2 + $0x28] sm:$0xff] %v835
      %876 = vst [vmem:[#allocation2 + $0x30] sm:$0xff] %v840
      %877 = vst [vmem:[#allocation2 + $0x38] sm:$0xff] %v843
      %878 = vst [vmem:[#allocation2 + $0x40] sm:$0xff] %v848
      %879 = vst [vmem:[#allocation2 + $0x48] sm:$0xff] %v851
      %880 = vst [vmem:[#allocation2 + $0x50] sm:$0xff] %v856
      %881 = vst [vmem:[#allocation2 + $0x58] sm:$0xff] %v859
      %882 = vst [vmem:[#allocation2 + $0x60] sm:$0xff] %v864
      %883 = vst [vmem:[#allocation2 + $0x68] sm:$0xff] %v867
      %v884 = vld [vmem:[#allocation2] sm:$0xff]
      %v885 = vld [vmem:[#allocation2 + $0x8] sm:$0xff]
      %v886 = vld [vmem:[#allocation2 + $0x10] sm:$0xff]
      %v887 = vld [vmem:[#allocation2 + $0x18] sm:$0xf]
      %v888 = vld [vmem:[#allocation2 + $0x1c] sm:$0xff]
      %v889 = vld [vmem:[#allocation2 + $0x24] sm:$0xff]
      %v890 = vld [vmem:[#allocation2 + $0x2c] sm:$0xff]
      %v891 = vld [vmem:[#allocation2 + $0x34] sm:$0xf]
      %v892 = vmax.f32 %v884, %v888
      %v893 = vmax.f32 %v885, %v889
      %v894 = vmax.f32 %v886, %v890
      %v895 = vmax.f32 %v887, %v891
      %896 = vst [vmem:[#allocation3] sm:$0xff] %v892
      %897 = vst [vmem:[#allocation3 + $0x8] sm:$0xff] %v893
      %898 = vst [vmem:[#allocation3 + $0x10] sm:$0xff] %v894
      %899 = vst [vmem:[#allocation3 + $0x18] sm:$0xf] %v895
      %v900 = vld [vmem:[#allocation2 + $0x38] sm:$0xff]
      %v901 = vld [vmem:[#allocation2 + $0x40] sm:$0xff]
      %v902 = vld [vmem:[#allocation2 + $0x48] sm:$0xff]
      %v903 = vld [vmem:[#allocation2 + $0x50] sm:$0xf]
      %v904 = vld [vmem:[#allocation2 + $0x54] sm:$0xff]
      %v905 = vld [vmem:[#allocation2 + $0x5c] sm:$0xff]
      %v906 = vld [vmem:[#allocation2 + $0x64] sm:$0xff]
      %v907 = vld [vmem:[#allocation2 + $0x6c] sm:$0xf]
      %v908 = vmax.f32 %v900, %v904
      %v909 = vmax.f32 %v901, %v905
      %v910 = vmax.f32 %v902, %v906
      %v911 = vmax.f32 %v903, %v907
      %912 = vst [vmem:[#allocation3 + $0x1c] sm:$0xff] %v908
      %913 = vst [vmem:[#allocation3 + $0x24] sm:$0xff] %v909
      %914 = vst [vmem:[#allocation3 + $0x2c] sm:$0xff] %v910
      %915 = vst [vmem:[#allocation3 + $0x34] sm:$0xf] %v911
      %v916 = vld [vmem:[#allocation3] ss:$2 sm:$0xff]
      %v917 = vld [vmem:[%s435] ss:$2 sm:$0xff]
      %v918 = vld [vmem:[%s437] ss:$2 sm:$0xff]
      %v919 = vld [vmem:[%s439] ss:$2 sm:$0xf]
      %v920 = vld [vmem:[%s441] ss:$2 sm:$0xff]
      %v921 = vld [vmem:[%s443] ss:$2 sm:$0xff]
      %v922 = vld [vmem:[%s445] ss:$2 sm:$0xff]
      %v923 = vld [vmem:[%s447] ss:$2 sm:$0xf]
      %v924 = vmax.f32 %v916, %v920
      %v925 = vmax.f32 %v917, %v921
      %v926 = vmax.f32 %v918, %v922
      %v927 = vmax.f32 %v919, %v923
      %v928 = vadd.f32 %v924, %v193
      %v929 = vadd.f32 %v925, %v193
      %v930 = vadd.f32 %v926, %v193
      %v931 = vadd.f32 %v927, %v193
      %v932 = vmax.f32 %v928, 0.0
      %v933 = vmax.f32 %v929, 0.0
      %v934 = vmax.f32 %v930, 0.0
      %v935 = vmax.f32 %v931, 0.0
      %v936 = vpack.c.bf16 %v933, %v932
      %v937 = vpack.c.bf16 %v935, %v934
      %v940 = vunpack.c.l.b16 %v936
      %v941 = vunpack.c.h.b16 %v936
      %v942 = vunpack.c.l.b16 %v937
      %v943 = vunpack.c.h.b16 %v937
      %v944 = vpack.c.b16 %v940, %v940
      %v945 = vpack.c.b16 %v941, %v941
      %v946 = vpack.c.b16 %v942, %v942
      %v947 = vpack.c.b16 %v943, %v943
      %952 = vst [vmem:[%s170 + $0x1c] sm:$0xf] %v944
      %953 = vst [vmem:[%s170 + $0x20] sm:$0xf] %v945
      %954 = vst [vmem:[%s170 + $0x24] sm:$0xf] %v946
      %955 = vst [vmem:[%s170 + $0x28] sm:$0x3] %v947
      %v956 = vld [vmem:[%s165 + $0xa8] sm:$0xf]
      %v957 = vld [vmem:[%s165 + $0xac] sm:$0xf]
      %v958 = vld [vmem:[%s165 + $0xb0] sm:$0xf]
      %v959 = vld [vmem:[%s165 + $0xb4] sm:$0xf]
      %v960 = vld [vmem:[%s165 + $0xb8] sm:$0xf]
      %v961 = vld [vmem:[%s165 + $0xbc] sm:$0xf]
      %v962 = vld [vmem:[%s165 + $0xc0] sm:$0xf]
      %v963 = vld [vmem:[%s165 + $0xc4] sm:$0xf]
      %v964 = vld [vmem:[%s165 + $0xc8] sm:$0xf]
      %v965 = vld [vmem:[%s165 + $0xcc] sm:$0xf]
      %v966 = vld [vmem:[%s165 + $0xd0] sm:$0xf]
      %v967 = vld [vmem:[%s165 + $0xd4] sm:$0xf]
      %v968 = vld [vmem:[%s165 + $0xd8] sm:$0xf]
      %v969 = vld [vmem:[%s165 + $0xdc] sm:$0xf]
      %v984 = vunpack.c.l.b16 %v956
      %v985 = vunpack.c.l.b16 %v957
      %v986 = vunpack.c.l.b16 %v958
      %v987 = vunpack.c.l.b16 %v959
      %v988 = vunpack.c.l.b16 %v960
      %v989 = vunpack.c.l.b16 %v961
      %v990 = vunpack.c.l.b16 %v962
      %v991 = vunpack.c.l.b16 %v963
      %v992 = vunpack.c.l.b16 %v964
      %v993 = vunpack.c.l.b16 %v965
      %v994 = vunpack.c.l.b16 %v966
      %v995 = vunpack.c.l.b16 %v967
      %v996 = vunpack.c.l.b16 %v968
      %v997 = vunpack.c.l.b16 %v969
      %v998 = vpack.c.b16 %v985, %v984
      %v999 = vpack.c.b16 %v987, %v986
      %v1000 = vpack.c.b16 %v989, %v988
      %v1001 = vpack.c.b16 %v991, %v990
      %v1002 = vpack.c.b16 %v993, %v992
      %v1003 = vpack.c.b16 %v995, %v994
      %v1004 = vpack.c.b16 %v997, %v996
      %1012 = vmatprep.subr.bf16.mxu0 0
      %1013 = vmatpush1.bf16.msra.mxu0 %v283
      %1014 = vmatprep.subr.bf16.mxu0 0
      %1015 = vmatpush1.bf16.msra.mxu0 %v284
      %1016 = vmatprep.subr.bf16.mxu0 0
      %1017 = vmatpush1.bf16.msra.mxu0 %v285
      %1018 = vmatprep.subr.bf16.mxu0 0
      %1019 = vmatpush1.bf16.msra.mxu0 %v286
      %1020 = vmatprep.subr.bf16.mxu0 0
      %1021 = vmatpush1.bf16.msra.mxu0 %v287
      %1022 = vmatprep.subr.bf16.mxu0 0
      %1023 = vmatpush1.bf16.msra.mxu0 %v288
      %1024 = vmatprep.subr.bf16.mxu0 0
      %1025 = vmatpush1.bf16.msra.mxu0 %v289
      %1026 = vmatprep.subr.bf16.mxu0 0
      %1027 = vmatpush1.bf16.msra.mxu0 %v290
      %1028 = vmatprep.subr.bf16.mxu0 0
      %1029 = vmatpush1.bf16.msra.mxu0 0
      %1030 = vmatprep.subr.bf16.mxu0 0
      %1031 = vmatpush1.bf16.msra.mxu0 0
      %1032 = vmatprep.subr.bf16.mxu0 0
      %1033 = vmatpush1.bf16.msra.mxu0 0
      %1034 = vmatprep.subr.bf16.mxu0 0
      %1035 = vmatpush1.bf16.msra.mxu0 0
      %1036 = vmatprep.subr.bf16.mxu0 0
      %1037 = vmatpush1.bf16.msra.mxu0 0
      %1038 = vmatprep.subr.bf16.mxu0 0
      %1039 = vmatpush1.bf16.msra.mxu0 0
      %1040 = vmatprep.subr.bf16.mxu0 0
      %1041 = vmatpush1.bf16.msra.mxu0 0
      %1042 = vmatprep.subr.bf16.mxu0 0
      %1043 = vmatpush1.bf16.msra.mxu0 0
      %1044 = vmatprep.mubr.bf16.mxu0 0
      %1045 = vmatmul.mubr.bf16.gmra.mrb[0].mxu0 %v998
      %v1046 = vpop.f32.mrb[0].mxu0
      %v1047 = vadd.f32 0.0, %v1046
      %v1048 = vpop.f32.mrb[0].mxu0
      %v1049 = vpop.f32.mrb[0].mxu0
      %v1050 = vadd.f32 0.0, %v1049
      %v1051 = vpop.f32.mrb[0].mxu0
      %1052 = vmatprep.mubr.bf16.mxu0 0
      %1053 = vmatmul.mubr.bf16.gmra.mrb[0].mxu0 %v999
      %v1054 = vpop.f32.mrb[0].mxu0
      %v1055 = vadd.f32 0.0, %v1054
      %v1056 = vpop.f32.mrb[0].mxu0
      %v1057 = vpop.f32.mrb[0].mxu0
      %v1058 = vadd.f32 0.0, %v1057
      %v1059 = vpop.f32.mrb[0].mxu0
      %1060 = vmatprep.mubr.bf16.mxu0 0
      %1061 = vmatmul.mubr.bf16.gmra.mrb[0].mxu0 %v1000
      %v1062 = vpop.f32.mrb[0].mxu0
      %v1063 = vadd.f32 0.0, %v1062
      %v1064 = vpop.f32.mrb[0].mxu0
      %v1065 = vpop.f32.mrb[0].mxu0
      %v1066 = vadd.f32 0.0, %v1065
      %v1067 = vpop.f32.mrb[0].mxu0
      %1068 = vmatprep.mubr.bf16.mxu0 0
      %1069 = vmatmul.mubr.bf16.gmra.mrb[0].mxu0 %v1001
      %v1070 = vpop.f32.mrb[0].mxu0
      %v1071 = vadd.f32 0.0, %v1070
      %v1072 = vpop.f32.mrb[0].mxu0
      %v1073 = vpop.f32.mrb[0].mxu0
      %v1074 = vadd.f32 0.0, %v1073
      %v1075 = vpop.f32.mrb[0].mxu0
      %1076 = vmatprep.mubr.bf16.mxu0 0
      %1077 = vmatmul.mubr.bf16.gmra.mrb[0].mxu0 %v1002
      %v1078 = vpop.f32.mrb[0].mxu0
      %v1079 = vadd.f32 0.0, %v1078
      %v1080 = vpop.f32.mrb[0].mxu0
      %v1081 = vpop.f32.mrb[0].mxu0
      %v1082 = vadd.f32 0.0, %v1081
      %v1083 = vpop.f32.mrb[0].mxu0
      %1084 = vmatprep.mubr.bf16.mxu0 0
      %1085 = vmatmul.mubr.bf16.gmra.mrb[0].mxu0 %v1003
      %v1086 = vpop.f32.mrb[0].mxu0
      %v1087 = vadd.f32 0.0, %v1086
      %v1088 = vpop.f32.mrb[0].mxu0
      %v1089 = vpop.f32.mrb[0].mxu0
      %v1090 = vadd.f32 0.0, %v1089
      %v1091 = vpop.f32.mrb[0].mxu0
      %1092 = vmatprep.mubr.bf16.mxu0 0
      %1093 = vmatmul.mubr.bf16.gmra.mrb[0].mxu0 %v1004
      %v1094 = vpop.f32.mrb[0].mxu0
      %v1095 = vadd.f32 0.0, %v1094
      %v1096 = vpop.f32.mrb[0].mxu0
      %v1097 = vpop.f32.mrb[0].mxu0
      %v1098 = vadd.f32 0.0, %v1097
      %v1099 = vpop.f32.mrb[0].mxu0
      %1100 = vdwg.mxu0
      %1101 = vst [vmem:[#allocation2] sm:$0xff] %v1047
      %1102 = vst [vmem:[#allocation2 + $0x8] sm:$0xff] %v1050
      %1103 = vst [vmem:[#allocation2 + $0x10] sm:$0xff] %v1055
      %1104 = vst [vmem:[#allocation2 + $0x18] sm:$0xff] %v1058
      %1105 = vst [vmem:[#allocation2 + $0x20] sm:$0xff] %v1063
      %1106 = vst [vmem:[#allocation2 + $0x28] sm:$0xff] %v1066
      %1107 = vst [vmem:[#allocation2 + $0x30] sm:$0xff] %v1071
      %1108 = vst [vmem:[#allocation2 + $0x38] sm:$0xff] %v1074
      %1109 = vst [vmem:[#allocation2 + $0x40] sm:$0xff] %v1079
      %1110 = vst [vmem:[#allocation2 + $0x48] sm:$0xff] %v1082
      %1111 = vst [vmem:[#allocation2 + $0x50] sm:$0xff] %v1087
      %1112 = vst [vmem:[#allocation2 + $0x58] sm:$0xff] %v1090
      %1113 = vst [vmem:[#allocation2 + $0x60] sm:$0xff] %v1095
      %1114 = vst [vmem:[#allocation2 + $0x68] sm:$0xff] %v1098
      %v1115 = vld [vmem:[#allocation2] sm:$0xff]
      %v1116 = vld [vmem:[#allocation2 + $0x8] sm:$0xff]
      %v1117 = vld [vmem:[#allocation2 + $0x10] sm:$0xff]
      %v1118 = vld [vmem:[#allocation2 + $0x18] sm:$0xf]
      %v1119 = vld [vmem:[#allocation2 + $0x1c] sm:$0xff]
      %v1120 = vld [vmem:[#allocation2 + $0x24] sm:$0xff]
      %v1121 = vld [vmem:[#allocation2 + $0x2c] sm:$0xff]
      %v1122 = vld [vmem:[#allocation2 + $0x34] sm:$0xf]
      %v1123 = vmax.f32 %v1115, %v1119
      %v1124 = vmax.f32 %v1116, %v1120
      %v1125 = vmax.f32 %v1117, %v1121
      %v1126 = vmax.f32 %v1118, %v1122
      %1127 = vst [vmem:[#allocation3] sm:$0xff] %v1123
      %1128 = vst [vmem:[#allocation3 + $0x8] sm:$0xff] %v1124
      %1129 = vst [vmem:[#allocation3 + $0x10] sm:$0xff] %v1125
      %1130 = vst [vmem:[#allocation3 + $0x18] sm:$0xf] %v1126
      %v1131 = vld [vmem:[#allocation2 + $0x38] sm:$0xff]
      %v1132 = vld [vmem:[#allocation2 + $0x40] sm:$0xff]
      %v1133 = vld [vmem:[#allocation2 + $0x48] sm:$0xff]
      %v1134 = vld [vmem:[#allocation2 + $0x50] sm:$0xf]
      %v1135 = vld [vmem:[#allocation2 + $0x54] sm:$0xff]
      %v1136 = vld [vmem:[#allocation2 + $0x5c] sm:$0xff]
      %v1137 = vld [vmem:[#allocation2 + $0x64] sm:$0xff]
      %v1138 = vld [vmem:[#allocation2 + $0x6c] sm:$0xf]
      %v1139 = vmax.f32 %v1131, %v1135
      %v1140 = vmax.f32 %v1132, %v1136
      %v1141 = vmax.f32 %v1133, %v1137
      %v1142 = vmax.f32 %v1134, %v1138
      %1143 = vst [vmem:[#allocation3 + $0x1c] sm:$0xff] %v1139
      %1144 = vst [vmem:[#allocation3 + $0x24] sm:$0xff] %v1140
      %1145 = vst [vmem:[#allocation3 + $0x2c] sm:$0xff] %v1141
      %1146 = vst [vmem:[#allocation3 + $0x34] sm:$0xf] %v1142
      %v1147 = vld [vmem:[#allocation3] ss:$2 sm:$0xff]
      %v1148 = vld [vmem:[%s435] ss:$2 sm:$0xff]
      %v1149 = vld [vmem:[%s437] ss:$2 sm:$0xff]
      %v1150 = vld [vmem:[%s439] ss:$2 sm:$0xf]
      %v1151 = vld [vmem:[%s441] ss:$2 sm:$0xff]
      %v1152 = vld [vmem:[%s443] ss:$2 sm:$0xff]
      %v1153 = vld [vmem:[%s445] ss:$2 sm:$0xff]
      %v1154 = vld [vmem:[%s447] ss:$2 sm:$0xf]
      %v1155 = vmax.f32 %v1147, %v1151
      %v1156 = vmax.f32 %v1148, %v1152
      %v1157 = vmax.f32 %v1149, %v1153
      %v1158 = vmax.f32 %v1150, %v1154
      %v1159 = vadd.f32 %v1155, %v193
      %v1160 = vadd.f32 %v1156, %v193
      %v1161 = vadd.f32 %v1157, %v193
      %v1162 = vadd.f32 %v1158, %v193
      %v1163 = vmax.f32 %v1159, 0.0
      %v1164 = vmax.f32 %v1160, 0.0
      %v1165 = vmax.f32 %v1161, 0.0
      %v1166 = vmax.f32 %v1162, 0.0
      %v1167 = vpack.c.bf16 %v1164, %v1163
      %v1168 = vpack.c.bf16 %v1166, %v1165
      %v1171 = vunpack.c.l.b16 %v1167
      %v1172 = vunpack.c.h.b16 %v1167
      %v1173 = vunpack.c.l.b16 %v1168
      %v1174 = vunpack.c.h.b16 %v1168
      %v1175 = vpack.c.b16 %v1171, %v1171
      %v1176 = vpack.c.b16 %v1172, %v1172
      %v1177 = vpack.c.b16 %v1173, %v1173
      %v1178 = vpack.c.b16 %v1174, %v1174
      %v1179 = vrot.slane %v1175, 6
      %v1180 = vrot.slane %v1179, 4
      %v1181 = vrot.slane %v1176, 6
      %v1182 = vsel %vm706, %v1180, %v1181
      %v1183 = vrot.slane %v1181, 4
      %v1184 = vrot.slane %v1177, 6
      %v1185 = vsel %vm706, %v1183, %v1184
      %v1186 = vrot.slane %v1184, 4
      %v1187 = vrot.slane %v1178, 6
      %v1188 = vsel %vm706, %v1186, %v1187
      %1193 = vst [vmem:[%s170 + $0x28] sm:$0xc] %v1179
      %1194 = vst [vmem:[%s170 + $0x2c] sm:$0xf] %v1182
      %1195 = vst [vmem:[%s170 + $0x30] sm:$0xf] %v1185
      %1196 = vst [vmem:[%s170 + $0x34] sm:$0xf] %v1188
      %v1197 = vld [vmem:[%s165 + $0xe0] sm:$0xf]
      %v1198 = vld [vmem:[%s165 + $0xe4] sm:$0xf]
      %v1199 = vld [vmem:[%s165 + $0xe8] sm:$0xf]
      %v1200 = vld [vmem:[%s165 + $0xec] sm:$0xf]
      %v1201 = vld [vmem:[%s165 + $0xf0] sm:$0xf]
      %v1202 = vld [vmem:[%s165 + $0xf4] sm:$0xf]
      %v1203 = vld [vmem:[%s165 + $0xf8] sm:$0xf]
      %v1204 = vld [vmem:[%s165 + $0xfc] sm:$0xf]
      %v1205 = vld [vmem:[%s165 + $0x100] sm:$0xf]
      %v1206 = vld [vmem:[%s165 + $0x104] sm:$0xf]
      %v1207 = vld [vmem:[%s165 + $0x108] sm:$0xf]
      %v1208 = vld [vmem:[%s165 + $0x10c] sm:$0xf]
      %v1209 = vld [vmem:[%s165 + $0x110] sm:$0xf]
      %v1210 = vld [vmem:[%s165 + $0x114] sm:$0xf]
      %v1225 = vunpack.c.l.b16 %v1197
      %v1226 = vunpack.c.l.b16 %v1198
      %v1227 = vunpack.c.l.b16 %v1199
      %v1228 = vunpack.c.l.b16 %v1200
      %v1229 = vunpack.c.l.b16 %v1201
      %v1230 = vunpack.c.l.b16 %v1202
      %v1231 = vunpack.c.l.b16 %v1203
      %v1232 = vunpack.c.l.b16 %v1204
      %v1233 = vunpack.c.l.b16 %v1205
      %v1234 = vunpack.c.l.b16 %v1206
      %v1235 = vunpack.c.l.b16 %v1207
      %v1236 = vunpack.c.l.b16 %v1208
      %v1237 = vunpack.c.l.b16 %v1209
      %v1238 = vunpack.c.l.b16 %v1210
      %v1239 = vpack.c.b16 %v1226, %v1225
      %v1240 = vpack.c.b16 %v1228, %v1227
      %v1241 = vpack.c.b16 %v1230, %v1229
      %v1242 = vpack.c.b16 %v1232, %v1231
      %v1243 = vpack.c.b16 %v1234, %v1233
      %v1244 = vpack.c.b16 %v1236, %v1235
      %v1245 = vpack.c.b16 %v1238, %v1237
      %1253 = vmatprep.subr.bf16.mxu0 0
      %1254 = vmatpush1.bf16.msra.mxu0 %v283
      %1255 = vmatprep.subr.bf16.mxu0 0
      %1256 = vmatpush1.bf16.msra.mxu0 %v284
      %1257 = vmatprep.subr.bf16.mxu0 0
      %1258 = vmatpush1.bf16.msra.mxu0 %v285
      %1259 = vmatprep.subr.bf16.mxu0 0
      %1260 = vmatpush1.bf16.msra.mxu0 %v286
      %1261 = vmatprep.subr.bf16.mxu0 0
      %1262 = vmatpush1.bf16.msra.mxu0 %v287
      %1263 = vmatprep.subr.bf16.mxu0 0
      %1264 = vmatpush1.bf16.msra.mxu0 %v288
      %1265 = vmatprep.subr.bf16.mxu0 0
      %1266 = vmatpush1.bf16.msra.mxu0 %v289
      %1267 = vmatprep.subr.bf16.mxu0 0
      %1268 = vmatpush1.bf16.msra.mxu0 %v290
      %1269 = vmatprep.subr.bf16.mxu0 0
      %1270 = vmatpush1.bf16.msra.mxu0 0
      %1271 = vmatprep.subr.bf16.mxu0 0
      %1272 = vmatpush1.bf16.msra.mxu0 0
      %1273 = vmatprep.subr.bf16.mxu0 0
      %1274 = vmatpush1.bf16.msra.mxu0 0
      %1275 = vmatprep.subr.bf16.mxu0 0
      %1276 = vmatpush1.bf16.msra.mxu0 0
      %1277 = vmatprep.subr.bf16.mxu0 0
      %1278 = vmatpush1.bf16.msra.mxu0 0
      %1279 = vmatprep.subr.bf16.mxu0 0
      %1280 = vmatpush1.bf16.msra.mxu0 0
      %1281 = vmatprep.subr.bf16.mxu0 0
      %1282 = vmatpush1.bf16.msra.mxu0 0
      %1283 = vmatprep.subr.bf16.mxu0 0
      %1284 = vmatpush1.bf16.msra.mxu0 0
      %1285 = vmatprep.mubr.bf16.mxu0 0
      %1286 = vmatmul.mubr.bf16.gmra.mrb[0].mxu0 %v1239
      %v1287 = vpop.f32.mrb[0].mxu0
      %v1288 = vadd.f32 0.0, %v1287
      %v1289 = vpop.f32.mrb[0].mxu0
      %v1290 = vpop.f32.mrb[0].mxu0
      %v1291 = vadd.f32 0.0, %v1290
      %v1292 = vpop.f32.mrb[0].mxu0
      %1293 = vmatprep.mubr.bf16.mxu0 0
      %1294 = vmatmul.mubr.bf16.gmra.mrb[0].mxu0 %v1240
      %v1295 = vpop.f32.mrb[0].mxu0
      %v1296 = vadd.f32 0.0, %v1295
      %v1297 = vpop.f32.mrb[0].mxu0
      %v1298 = vpop.f32.mrb[0].mxu0
      %v1299 = vadd.f32 0.0, %v1298
      %v1300 = vpop.f32.mrb[0].mxu0
      %1301 = vmatprep.mubr.bf16.mxu0 0
      %1302 = vmatmul.mubr.bf16.gmra.mrb[0].mxu0 %v1241
      %v1303 = vpop.f32.mrb[0].mxu0
      %v1304 = vadd.f32 0.0, %v1303
      %v1305 = vpop.f32.mrb[0].mxu0
      %v1306 = vpop.f32.mrb[0].mxu0
      %v1307 = vadd.f32 0.0, %v1306
      %v1308 = vpop.f32.mrb[0].mxu0
      %1309 = vmatprep.mubr.bf16.mxu0 0
      %1310 = vmatmul.mubr.bf16.gmra.mrb[0].mxu0 %v1242
      %v1311 = vpop.f32.mrb[0].mxu0
      %v1312 = vadd.f32 0.0, %v1311
      %v1313 = vpop.f32.mrb[0].mxu0
      %v1314 = vpop.f32.mrb[0].mxu0
      %v1315 = vadd.f32 0.0, %v1314
      %v1316 = vpop.f32.mrb[0].mxu0
      %1317 = vmatprep.mubr.bf16.mxu0 0
      %1318 = vmatmul.mubr.bf16.gmra.mrb[0].mxu0 %v1243
      %v1319 = vpop.f32.mrb[0].mxu0
      %v1320 = vadd.f32 0.0, %v1319
      %v1321 = vpop.f32.mrb[0].mxu0
      %v1322 = vpop.f32.mrb[0].mxu0
      %v1323 = vadd.f32 0.0, %v1322
      %v1324 = vpop.f32.mrb[0].mxu0
      %1325 = vmatprep.mubr.bf16.mxu0 0
      %1326 = vmatmul.mubr.bf16.gmra.mrb[0].mxu0 %v1244
      %v1327 = vpop.f32.mrb[0].mxu0
      %v1328 = vadd.f32 0.0, %v1327
      %v1329 = vpop.f32.mrb[0].mxu0
      %v1330 = vpop.f32.mrb[0].mxu0
      %v1331 = vadd.f32 0.0, %v1330
      %v1332 = vpop.f32.mrb[0].mxu0
      %1333 = vmatprep.mubr.bf16.mxu0 0
      %1334 = vmatmul.mubr.bf16.gmra.mrb[0].mxu0 %v1245
      %v1335 = vpop.f32.mrb[0].mxu0
      %v1336 = vadd.f32 0.0, %v1335
      %v1337 = vpop.f32.mrb[0].mxu0
      %v1338 = vpop.f32.mrb[0].mxu0
      %v1339 = vadd.f32 0.0, %v1338
      %v1340 = vpop.f32.mrb[0].mxu0
      %1341 = vdwg.mxu0
      %1342 = vst [vmem:[#allocation2] sm:$0xff] %v1288
      %1343 = vst [vmem:[#allocation2 + $0x8] sm:$0xff] %v1291
      %1344 = vst [vmem:[#allocation2 + $0x10] sm:$0xff] %v1296
      %1345 = vst [vmem:[#allocation2 + $0x18] sm:$0xff] %v1299
      %1346 = vst [vmem:[#allocation2 + $0x20] sm:$0xff] %v1304
      %1347 = vst [vmem:[#allocation2 + $0x28] sm:$0xff] %v1307
      %1348 = vst [vmem:[#allocation2 + $0x30] sm:$0xff] %v1312
      %1349 = vst [vmem:[#allocation2 + $0x38] sm:$0xff] %v1315
      %1350 = vst [vmem:[#allocation2 + $0x40] sm:$0xff] %v1320
      %1351 = vst [vmem:[#allocation2 + $0x48] sm:$0xff] %v1323
      %1352 = vst [vmem:[#allocation2 + $0x50] sm:$0xff] %v1328
      %1353 = vst [vmem:[#allocation2 + $0x58] sm:$0xff] %v1331
      %1354 = vst [vmem:[#allocation2 + $0x60] sm:$0xff] %v1336
      %1355 = vst [vmem:[#allocation2 + $0x68] sm:$0xff] %v1339
      %v1356 = vld [vmem:[#allocation2] sm:$0xff]
      %v1357 = vld [vmem:[#allocation2 + $0x8] sm:$0xff]
      %v1358 = vld [vmem:[#allocation2 + $0x10] sm:$0xff]
      %v1359 = vld [vmem:[#allocation2 + $0x18] sm:$0xf]
      %v1360 = vld [vmem:[#allocation2 + $0x1c] sm:$0xff]
      %v1361 = vld [vmem:[#allocation2 + $0x24] sm:$0xff]
      %v1362 = vld [vmem:[#allocation2 + $0x2c] sm:$0xff]
      %v1363 = vld [vmem:[#allocation2 + $0x34] sm:$0xf]
      %v1364 = vmax.f32 %v1356, %v1360
      %v1365 = vmax.f32 %v1357, %v1361
      %v1366 = vmax.f32 %v1358, %v1362
      %v1367 = vmax.f32 %v1359, %v1363
      %1368 = vst [vmem:[#allocation3] sm:$0xff] %v1364
      %1369 = vst [vmem:[#allocation3 + $0x8] sm:$0xff] %v1365
      %1370 = vst [vmem:[#allocation3 + $0x10] sm:$0xff] %v1366
      %1371 = vst [vmem:[#allocation3 + $0x18] sm:$0xf] %v1367
      %v1372 = vld [vmem:[#allocation2 + $0x38] sm:$0xff]
      %v1373 = vld [vmem:[#allocation2 + $0x40] sm:$0xff]
      %v1374 = vld [vmem:[#allocation2 + $0x48] sm:$0xff]
      %v1375 = vld [vmem:[#allocation2 + $0x50] sm:$0xf]
      %v1376 = vld [vmem:[#allocation2 + $0x54] sm:$0xff]
      %v1377 = vld [vmem:[#allocation2 + $0x5c] sm:$0xff]
      %v1378 = vld [vmem:[#allocation2 + $0x64] sm:$0xff]
      %v1379 = vld [vmem:[#allocation2 + $0x6c] sm:$0xf]
      %v1380 = vmax.f32 %v1372, %v1376
      %v1381 = vmax.f32 %v1373, %v1377
      %v1382 = vmax.f32 %v1374, %v1378
      %v1383 = vmax.f32 %v1375, %v1379
      %1384 = vst [vmem:[#allocation3 + $0x1c] sm:$0xff] %v1380
      %1385 = vst [vmem:[#allocation3 + $0x24] sm:$0xff] %v1381
      %1386 = vst [vmem:[#allocation3 + $0x2c] sm:$0xff] %v1382
      %1387 = vst [vmem:[#allocation3 + $0x34] sm:$0xf] %v1383
      %v1388 = vld [vmem:[#allocation3] ss:$2 sm:$0xff]
      %v1389 = vld [vmem:[%s435] ss:$2 sm:$0xff]
      %v1390 = vld [vmem:[%s437] ss:$2 sm:$0xff]
      %v1391 = vld [vmem:[%s439] ss:$2 sm:$0xf]
      %v1392 = vld [vmem:[%s441] ss:$2 sm:$0xff]
      %v1393 = vld [vmem:[%s443] ss:$2 sm:$0xff]
      %v1394 = vld [vmem:[%s445] ss:$2 sm:$0xff]
      %v1395 = vld [vmem:[%s447] ss:$2 sm:$0xf]
      %v1396 = vmax.f32 %v1388, %v1392
      %v1397 = vmax.f32 %v1389, %v1393
      %v1398 = vmax.f32 %v1390, %v1394
      %v1399 = vmax.f32 %v1391, %v1395
      %v1400 = vadd.f32 %v1396, %v193
      %v1401 = vadd.f32 %v1397, %v193
      %v1402 = vadd.f32 %v1398, %v193
      %v1403 = vadd.f32 %v1399, %v193
      %v1404 = vmax.f32 %v1400, 0.0
      %v1405 = vmax.f32 %v1401, 0.0
      %v1406 = vmax.f32 %v1402, 0.0
      %v1407 = vmax.f32 %v1403, 0.0
      %v1408 = vpack.c.bf16 %v1405, %v1404
      %v1409 = vpack.c.bf16 %v1407, %v1406
      %v1412 = vunpack.c.l.b16 %v1408
      %v1413 = vunpack.c.h.b16 %v1408
      %v1414 = vunpack.c.l.b16 %v1409
      %v1415 = vunpack.c.h.b16 %v1409
      %v1416 = vpack.c.b16 %v1412, %v1412
      %v1417 = vpack.c.b16 %v1413, %v1413
      %v1418 = vpack.c.b16 %v1414, %v1414
      %v1419 = vpack.c.b16 %v1415, %v1415
      %1424 = vst [vmem:[%s170 + $0x38] sm:$0xf] %v1416
      %1425 = vst [vmem:[%s170 + $0x3c] sm:$0xf] %v1417
      %1426 = vst [vmem:[%s170 + $0x40] sm:$0xf] %v1418
      %1427 = vst [vmem:[%s170 + $0x44] sm:$0x3] %v1419
      %v1428 = vld [vmem:[%s165 + $0x118] sm:$0xf]
      %v1429 = vld [vmem:[%s165 + $0x11c] sm:$0xf]
      %v1430 = vld [vmem:[%s165 + $0x120] sm:$0xf]
      %v1431 = vld [vmem:[%s165 + $0x124] sm:$0xf]
      %v1432 = vld [vmem:[%s165 + $0x128] sm:$0xf]
      %v1433 = vld [vmem:[%s165 + $0x12c] sm:$0xf]
      %v1434 = vld [vmem:[%s165 + $0x130] sm:$0xf]
      %v1435 = vld [vmem:[%s165 + $0x134] sm:$0xf]
      %v1436 = vld [vmem:[%s165 + $0x138] sm:$0xf]
      %v1437 = vld [vmem:[%s165 + $0x13c] sm:$0xf]
      %v1438 = vld [vmem:[%s165 + $0x140] sm:$0xf]
      %v1439 = vld [vmem:[%s165 + $0x144] sm:$0xf]
      %v1440 = vld [vmem:[%s165 + $0x148] sm:$0xf]
      %v1441 = vld [vmem:[%s165 + $0x14c] sm:$0xf]
      %v1456 = vunpack.c.l.b16 %v1428
      %v1457 = vunpack.c.l.b16 %v1429
      %v1458 = vunpack.c.l.b16 %v1430
      %v1459 = vunpack.c.l.b16 %v1431
      %v1460 = vunpack.c.l.b16 %v1432
      %v1461 = vunpack.c.l.b16 %v1433
      %v1462 = vunpack.c.l.b16 %v1434
      %v1463 = vunpack.c.l.b16 %v1435
      %v1464 = vunpack.c.l.b16 %v1436
      %v1465 = vunpack.c.l.b16 %v1437
      %v1466 = vunpack.c.l.b16 %v1438
      %v1467 = vunpack.c.l.b16 %v1439
      %v1468 = vunpack.c.l.b16 %v1440
      %v1469 = vunpack.c.l.b16 %v1441
      %v1470 = vpack.c.b16 %v1457, %v1456
      %v1471 = vpack.c.b16 %v1459, %v1458
      %v1472 = vpack.c.b16 %v1461, %v1460
      %v1473 = vpack.c.b16 %v1463, %v1462
      %v1474 = vpack.c.b16 %v1465, %v1464
      %v1475 = vpack.c.b16 %v1467, %v1466
      %v1476 = vpack.c.b16 %v1469, %v1468
      %1484 = vmatprep.subr.bf16.mxu0 0
      %1485 = vmatpush1.bf16.msra.mxu0 %v283
      %1486 = vmatprep.subr.bf16.mxu0 0
      %1487 = vmatpush1.bf16.msra.mxu0 %v284
      %1488 = vmatprep.subr.bf16.mxu0 0
      %1489 = vmatpush1.bf16.msra.mxu0 %v285
      %1490 = vmatprep.subr.bf16.mxu0 0
      %1491 = vmatpush1.bf16.msra.mxu0 %v286
      %1492 = vmatprep.subr.bf16.mxu0 0
      %1493 = vmatpush1.bf16.msra.mxu0 %v287
      %1494 = vmatprep.subr.bf16.mxu0 0
      %1495 = vmatpush1.bf16.msra.mxu0 %v288
      %1496 = vmatprep.subr.bf16.mxu0 0
      %1497 = vmatpush1.bf16.msra.mxu0 %v289
      %1498 = vmatprep.subr.bf16.mxu0 0
      %1499 = vmatpush1.bf16.msra.mxu0 %v290
      %1500 = vmatprep.subr.bf16.mxu0 0
      %1501 = vmatpush1.bf16.msra.mxu0 0
      %1502 = vmatprep.subr.bf16.mxu0 0
      %1503 = vmatpush1.bf16.msra.mxu0 0
      %1504 = vmatprep.subr.bf16.mxu0 0
      %1505 = vmatpush1.bf16.msra.mxu0 0
      %1506 = vmatprep.subr.bf16.mxu0 0
      %1507 = vmatpush1.bf16.msra.mxu0 0
      %1508 = vmatprep.subr.bf16.mxu0 0
      %1509 = vmatpush1.bf16.msra.mxu0 0
      %1510 = vmatprep.subr.bf16.mxu0 0
      %1511 = vmatpush1.bf16.msra.mxu0 0
      %1512 = vmatprep.subr.bf16.mxu0 0
      %1513 = vmatpush1.bf16.msra.mxu0 0
      %1514 = vmatprep.subr.bf16.mxu0 0
      %1515 = vmatpush1.bf16.msra.mxu0 0
      %1516 = vmatprep.mubr.bf16.mxu0 0
      %1517 = vmatmul.mubr.bf16.gmra.mrb[0].mxu0 %v1470
      %v1518 = vpop.f32.mrb[0].mxu0
      %v1519 = vadd.f32 0.0, %v1518
      %v1520 = vpop.f32.mrb[0].mxu0
      %v1521 = vpop.f32.mrb[0].mxu0
      %v1522 = vadd.f32 0.0, %v1521
      %v1523 = vpop.f32.mrb[0].mxu0
      %1524 = vmatprep.mubr.bf16.mxu0 0
      %1525 = vmatmul.mubr.bf16.gmra.mrb[0].mxu0 %v1471
      %v1526 = vpop.f32.mrb[0].mxu0
      %v1527 = vadd.f32 0.0, %v1526
      %v1528 = vpop.f32.mrb[0].mxu0
      %v1529 = vpop.f32.mrb[0].mxu0
      %v1530 = vadd.f32 0.0, %v1529
      %v1531 = vpop.f32.mrb[0].mxu0
      %1532 = vmatprep.mubr.bf16.mxu0 0
      %1533 = vmatmul.mubr.bf16.gmra.mrb[0].mxu0 %v1472
      %v1534 = vpop.f32.mrb[0].mxu0
      %v1535 = vadd.f32 0.0, %v1534
      %v1536 = vpop.f32.mrb[0].mxu0
      %v1537 = vpop.f32.mrb[0].mxu0
      %v1538 = vadd.f32 0.0, %v1537
      %v1539 = vpop.f32.mrb[0].mxu0
      %1540 = vmatprep.mubr.bf16.mxu0 0
      %1541 = vmatmul.mubr.bf16.gmra.mrb[0].mxu0 %v1473
      %v1542 = vpop.f32.mrb[0].mxu0
      %v1543 = vadd.f32 0.0, %v1542
      %v1544 = vpop.f32.mrb[0].mxu0
      %v1545 = vpop.f32.mrb[0].mxu0
      %v1546 = vadd.f32 0.0, %v1545
      %v1547 = vpop.f32.mrb[0].mxu0
      %1548 = vmatprep.mubr.bf16.mxu0 0
      %1549 = vmatmul.mubr.bf16.gmra.mrb[0].mxu0 %v1474
      %v1550 = vpop.f32.mrb[0].mxu0
      %v1551 = vadd.f32 0.0, %v1550
      %v1552 = vpop.f32.mrb[0].mxu0
      %v1553 = vpop.f32.mrb[0].mxu0
      %v1554 = vadd.f32 0.0, %v1553
      %v1555 = vpop.f32.mrb[0].mxu0
      %1556 = vmatprep.mubr.bf16.mxu0 0
      %1557 = vmatmul.mubr.bf16.gmra.mrb[0].mxu0 %v1475
      %v1558 = vpop.f32.mrb[0].mxu0
      %v1559 = vadd.f32 0.0, %v1558
      %v1560 = vpop.f32.mrb[0].mxu0
      %v1561 = vpop.f32.mrb[0].mxu0
      %v1562 = vadd.f32 0.0, %v1561
      %v1563 = vpop.f32.mrb[0].mxu0
      %1564 = vmatprep.mubr.bf16.mxu0 0
      %1565 = vmatmul.mubr.bf16.gmra.mrb[0].mxu0 %v1476
      %v1566 = vpop.f32.mrb[0].mxu0
      %v1567 = vadd.f32 0.0, %v1566
      %v1568 = vpop.f32.mrb[0].mxu0
      %v1569 = vpop.f32.mrb[0].mxu0
      %v1570 = vadd.f32 0.0, %v1569
      %v1571 = vpop.f32.mrb[0].mxu0
      %1572 = vdwg.mxu0
      %1573 = vst [vmem:[#allocation2] sm:$0xff] %v1519
      %1574 = vst [vmem:[#allocation2 + $0x8] sm:$0xff] %v1522
      %1575 = vst [vmem:[#allocation2 + $0x10] sm:$0xff] %v1527
      %1576 = vst [vmem:[#allocation2 + $0x18] sm:$0xff] %v1530
      %1577 = vst [vmem:[#allocation2 + $0x20] sm:$0xff] %v1535
      %1578 = vst [vmem:[#allocation2 + $0x28] sm:$0xff] %v1538
      %1579 = vst [vmem:[#allocation2 + $0x30] sm:$0xff] %v1543
      %1580 = vst [vmem:[#allocation2 + $0x38] sm:$0xff] %v1546
      %1581 = vst [vmem:[#allocation2 + $0x40] sm:$0xff] %v1551
      %1582 = vst [vmem:[#allocation2 + $0x48] sm:$0xff] %v1554
      %1583 = vst [vmem:[#allocation2 + $0x50] sm:$0xff] %v1559
      %1584 = vst [vmem:[#allocation2 + $0x58] sm:$0xff] %v1562
      %1585 = vst [vmem:[#allocation2 + $0x60] sm:$0xff] %v1567
      %1586 = vst [vmem:[#allocation2 + $0x68] sm:$0xff] %v1570
      %v1587 = vld [vmem:[#allocation2] sm:$0xff]
      %v1588 = vld [vmem:[#allocation2 + $0x8] sm:$0xff]
      %v1589 = vld [vmem:[#allocation2 + $0x10] sm:$0xff]
      %v1590 = vld [vmem:[#allocation2 + $0x18] sm:$0xf]
      %v1591 = vld [vmem:[#allocation2 + $0x1c] sm:$0xff]
      %v1592 = vld [vmem:[#allocation2 + $0x24] sm:$0xff]
      %v1593 = vld [vmem:[#allocation2 + $0x2c] sm:$0xff]
      %v1594 = vld [vmem:[#allocation2 + $0x34] sm:$0xf]
      %v1595 = vmax.f32 %v1587, %v1591
      %v1596 = vmax.f32 %v1588, %v1592
      %v1597 = vmax.f32 %v1589, %v1593
      %v1598 = vmax.f32 %v1590, %v1594
      %1599 = vst [vmem:[#allocation3] sm:$0xff] %v1595
      %1600 = vst [vmem:[#allocation3 + $0x8] sm:$0xff] %v1596
      %1601 = vst [vmem:[#allocation3 + $0x10] sm:$0xff] %v1597
      %1602 = vst [vmem:[#allocation3 + $0x18] sm:$0xf] %v1598
      %v1603 = vld [vmem:[#allocation2 + $0x38] sm:$0xff]
      %v1604 = vld [vmem:[#allocation2 + $0x40] sm:$0xff]
      %v1605 = vld [vmem:[#allocation2 + $0x48] sm:$0xff]
      %v1606 = vld [vmem:[#allocation2 + $0x50] sm:$0xf]
      %v1607 = vld [vmem:[#allocation2 + $0x54] sm:$0xff]
      %v1608 = vld [vmem:[#allocation2 + $0x5c] sm:$0xff]
      %v1609 = vld [vmem:[#allocation2 + $0x64] sm:$0xff]
      %v1610 = vld [vmem:[#allocation2 + $0x6c] sm:$0xf]
      %v1611 = vmax.f32 %v1603, %v1607
      %v1612 = vmax.f32 %v1604, %v1608
      %v1613 = vmax.f32 %v1605, %v1609
      %v1614 = vmax.f32 %v1606, %v1610
      %1615 = vst [vmem:[#allocation3 + $0x1c] sm:$0xff] %v1611
      %1616 = vst [vmem:[#allocation3 + $0x24] sm:$0xff] %v1612
      %1617 = vst [vmem:[#allocation3 + $0x2c] sm:$0xff] %v1613
      %1618 = vst [vmem:[#allocation3 + $0x34] sm:$0xf] %v1614
      %v1619 = vld [vmem:[#allocation3] ss:$2 sm:$0xff]
      %v1620 = vld [vmem:[%s435] ss:$2 sm:$0xff]
      %v1621 = vld [vmem:[%s437] ss:$2 sm:$0xff]
      %v1622 = vld [vmem:[%s439] ss:$2 sm:$0xf]
      %v1623 = vld [vmem:[%s441] ss:$2 sm:$0xff]
      %v1624 = vld [vmem:[%s443] ss:$2 sm:$0xff]
      %v1625 = vld [vmem:[%s445] ss:$2 sm:$0xff]
      %v1626 = vld [vmem:[%s447] ss:$2 sm:$0xf]
      %v1627 = vmax.f32 %v1619, %v1623
      %v1628 = vmax.f32 %v1620, %v1624
      %v1629 = vmax.f32 %v1621, %v1625
      %v1630 = vmax.f32 %v1622, %v1626
      %v1631 = vadd.f32 %v1627, %v193
      %v1632 = vadd.f32 %v1628, %v193
      %v1633 = vadd.f32 %v1629, %v193
      %v1634 = vadd.f32 %v1630, %v193
      %v1635 = vmax.f32 %v1631, 0.0
      %v1636 = vmax.f32 %v1632, 0.0
      %v1637 = vmax.f32 %v1633, 0.0
      %v1638 = vmax.f32 %v1634, 0.0
      %v1639 = vpack.c.bf16 %v1636, %v1635
      %v1640 = vpack.c.bf16 %v1638, %v1637
      %v1643 = vunpack.c.l.b16 %v1639
      %v1644 = vunpack.c.h.b16 %v1639
      %v1645 = vunpack.c.l.b16 %v1640
      %v1646 = vunpack.c.h.b16 %v1640
      %v1647 = vpack.c.b16 %v1643, %v1643
      %v1648 = vpack.c.b16 %v1644, %v1644
      %v1649 = vpack.c.b16 %v1645, %v1645
      %v1650 = vpack.c.b16 %v1646, %v1646
      %v1651 = vrot.slane %v1647, 6
      %v1652 = vrot.slane %v1651, 4
      %v1653 = vrot.slane %v1648, 6
      %v1654 = vsel %vm706, %v1652, %v1653
      %v1655 = vrot.slane %v1653, 4
      %v1656 = vrot.slane %v1649, 6
      %v1657 = vsel %vm706, %v1655, %v1656
      %v1658 = vrot.slane %v1656, 4
      %v1659 = vrot.slane %v1650, 6
      %v1660 = vsel %vm706, %v1658, %v1659
      %1665 = vst [vmem:[%s170 + $0x44] sm:$0xc] %v1651
      %1666 = vst [vmem:[%s170 + $0x48] sm:$0xf] %v1654
      %1667 = vst [vmem:[%s170 + $0x4c] sm:$0xf] %v1657
      %1668 = vst [vmem:[%s170 + $0x50] sm:$0xf] %v1660
      %v1669 = vld [vmem:[%s165 + $0x150] sm:$0xf]
      %v1670 = vld [vmem:[%s165 + $0x154] sm:$0xf]
      %v1671 = vld [vmem:[%s165 + $0x158] sm:$0xf]
      %v1672 = vld [vmem:[%s165 + $0x15c] sm:$0xf]
      %v1673 = vld [vmem:[%s165 + $0x160] sm:$0xf]
      %v1674 = vld [vmem:[%s165 + $0x164] sm:$0xf]
      %v1675 = vld [vmem:[%s165 + $0x168] sm:$0xf]
      %v1676 = vld [vmem:[%s165 + $0x16c] sm:$0xf]
      %v1677 = vld [vmem:[%s165 + $0x170] sm:$0xf]
      %v1678 = vld [vmem:[%s165 + $0x174] sm:$0xf]
      %v1679 = vld [vmem:[%s165 + $0x178] sm:$0xf]
      %v1680 = vld [vmem:[%s165 + $0x17c] sm:$0xf]
      %v1681 = vld [vmem:[%s165 + $0x180] sm:$0xf]
      %v1682 = vld [vmem:[%s165 + $0x184] sm:$0xf]
      %v1697 = vunpack.c.l.b16 %v1669
      %v1698 = vunpack.c.l.b16 %v1670
      %v1699 = vunpack.c.l.b16 %v1671
      %v1700 = vunpack.c.l.b16 %v1672
      %v1701 = vunpack.c.l.b16 %v1673
      %v1702 = vunpack.c.l.b16 %v1674
      %v1703 = vunpack.c.l.b16 %v1675
      %v1704 = vunpack.c.l.b16 %v1676
      %v1705 = vunpack.c.l.b16 %v1677
      %v1706 = vunpack.c.l.b16 %v1678
      %v1707 = vunpack.c.l.b16 %v1679
      %v1708 = vunpack.c.l.b16 %v1680
      %v1709 = vunpack.c.l.b16 %v1681
      %v1710 = vunpack.c.l.b16 %v1682
      %v1711 = vpack.c.b16 %v1698, %v1697
      %v1712 = vpack.c.b16 %v1700, %v1699
      %v1713 = vpack.c.b16 %v1702, %v1701
      %v1714 = vpack.c.b16 %v1704, %v1703
      %v1715 = vpack.c.b16 %v1706, %v1705
      %v1716 = vpack.c.b16 %v1708, %v1707
      %v1717 = vpack.c.b16 %v1710, %v1709
      %1725 = vmatprep.subr.bf16.mxu0 0
      %1726 = vmatpush1.bf16.msra.mxu0 %v283
      %1727 = vmatprep.subr.bf16.mxu0 0
      %1728 = vmatpush1.bf16.msra.mxu0 %v284
      %1729 = vmatprep.subr.bf16.mxu0 0
      %1730 = vmatpush1.bf16.msra.mxu0 %v285
      %1731 = vmatprep.subr.bf16.mxu0 0
      %1732 = vmatpush1.bf16.msra.mxu0 %v286
      %1733 = vmatprep.subr.bf16.mxu0 0
      %1734 = vmatpush1.bf16.msra.mxu0 %v287
      %1735 = vmatprep.subr.bf16.mxu0 0
      %1736 = vmatpush1.bf16.msra.mxu0 %v288
      %1737 = vmatprep.subr.bf16.mxu0 0
      %1738 = vmatpush1.bf16.msra.mxu0 %v289
      %1739 = vmatprep.subr.bf16.mxu0 0
      %1740 = vmatpush1.bf16.msra.mxu0 %v290
      %1741 = vmatprep.subr.bf16.mxu0 0
      %1742 = vmatpush1.bf16.msra.mxu0 0
      %1743 = vmatprep.subr.bf16.mxu0 0
      %1744 = vmatpush1.bf16.msra.mxu0 0
      %1745 = vmatprep.subr.bf16.mxu0 0
      %1746 = vmatpush1.bf16.msra.mxu0 0
      %1747 = vmatprep.subr.bf16.mxu0 0
      %1748 = vmatpush1.bf16.msra.mxu0 0
      %1749 = vmatprep.subr.bf16.mxu0 0
      %1750 = vmatpush1.bf16.msra.mxu0 0
      %1751 = vmatprep.subr.bf16.mxu0 0
      %1752 = vmatpush1.bf16.msra.mxu0 0
      %1753 = vmatprep.subr.bf16.mxu0 0
      %1754 = vmatpush1.bf16.msra.mxu0 0
      %1755 = vmatprep.subr.bf16.mxu0 0
      %1756 = vmatpush1.bf16.msra.mxu0 0
      %1757 = vmatprep.mubr.bf16.mxu0 0
      %1758 = vmatmul.mubr.bf16.gmra.mrb[0].mxu0 %v1711
      %v1759 = vpop.f32.mrb[0].mxu0
      %v1760 = vadd.f32 0.0, %v1759
      %v1761 = vpop.f32.mrb[0].mxu0
      %v1762 = vpop.f32.mrb[0].mxu0
      %v1763 = vadd.f32 0.0, %v1762
      %v1764 = vpop.f32.mrb[0].mxu0
      %1765 = vmatprep.mubr.bf16.mxu0 0
      %1766 = vmatmul.mubr.bf16.gmra.mrb[0].mxu0 %v1712
      %v1767 = vpop.f32.mrb[0].mxu0
      %v1768 = vadd.f32 0.0, %v1767
      %v1769 = vpop.f32.mrb[0].mxu0
      %v1770 = vpop.f32.mrb[0].mxu0
      %v1771 = vadd.f32 0.0, %v1770
      %v1772 = vpop.f32.mrb[0].mxu0
      %1773 = vmatprep.mubr.bf16.mxu0 0
      %1774 = vmatmul.mubr.bf16.gmra.mrb[0].mxu0 %v1713
      %v1775 = vpop.f32.mrb[0].mxu0
      %v1776 = vadd.f32 0.0, %v1775
      %v1777 = vpop.f32.mrb[0].mxu0
      %v1778 = vpop.f32.mrb[0].mxu0
      %v1779 = vadd.f32 0.0, %v1778
      %v1780 = vpop.f32.mrb[0].mxu0
      %1781 = vmatprep.mubr.bf16.mxu0 0
      %1782 = vmatmul.mubr.bf16.gmra.mrb[0].mxu0 %v1714
      %v1783 = vpop.f32.mrb[0].mxu0
      %v1784 = vadd.f32 0.0, %v1783
      %v1785 = vpop.f32.mrb[0].mxu0
      %v1786 = vpop.f32.mrb[0].mxu0
      %v1787 = vadd.f32 0.0, %v1786
      %v1788 = vpop.f32.mrb[0].mxu0
      %1789 = vmatprep.mubr.bf16.mxu0 0
      %1790 = vmatmul.mubr.bf16.gmra.mrb[0].mxu0 %v1715
      %v1791 = vpop.f32.mrb[0].mxu0
      %v1792 = vadd.f32 0.0, %v1791
      %v1793 = vpop.f32.mrb[0].mxu0
      %v1794 = vpop.f32.mrb[0].mxu0
      %v1795 = vadd.f32 0.0, %v1794
      %v1796 = vpop.f32.mrb[0].mxu0
      %1797 = vmatprep.mubr.bf16.mxu0 0
      %1798 = vmatmul.mubr.bf16.gmra.mrb[0].mxu0 %v1716
      %v1799 = vpop.f32.mrb[0].mxu0
      %v1800 = vadd.f32 0.0, %v1799
      %v1801 = vpop.f32.mrb[0].mxu0
      %v1802 = vpop.f32.mrb[0].mxu0
      %v1803 = vadd.f32 0.0, %v1802
      %v1804 = vpop.f32.mrb[0].mxu0
      %1805 = vmatprep.mubr.bf16.mxu0 0
      %1806 = vmatmul.mubr.bf16.gmra.mrb[0].mxu0 %v1717
      %v1807 = vpop.f32.mrb[0].mxu0
      %v1808 = vadd.f32 0.0, %v1807
      %v1809 = vpop.f32.mrb[0].mxu0
      %v1810 = vpop.f32.mrb[0].mxu0
      %v1811 = vadd.f32 0.0, %v1810
      %v1812 = vpop.f32.mrb[0].mxu0
      %1813 = vdwg.mxu0
      %1814 = vst [vmem:[#allocation2] sm:$0xff] %v1760
      %1815 = vst [vmem:[#allocation2 + $0x8] sm:$0xff] %v1763
      %1816 = vst [vmem:[#allocation2 + $0x10] sm:$0xff] %v1768
      %1817 = vst [vmem:[#allocation2 + $0x18] sm:$0xff] %v1771
      %1818 = vst [vmem:[#allocation2 + $0x20] sm:$0xff] %v1776
      %1819 = vst [vmem:[#allocation2 + $0x28] sm:$0xff] %v1779
      %1820 = vst [vmem:[#allocation2 + $0x30] sm:$0xff] %v1784
      %1821 = vst [vmem:[#allocation2 + $0x38] sm:$0xff] %v1787
      %1822 = vst [vmem:[#allocation2 + $0x40] sm:$0xff] %v1792
      %1823 = vst [vmem:[#allocation2 + $0x48] sm:$0xff] %v1795
      %1824 = vst [vmem:[#allocation2 + $0x50] sm:$0xff] %v1800
      %1825 = vst [vmem:[#allocation2 + $0x58] sm:$0xff] %v1803
      %1826 = vst [vmem:[#allocation2 + $0x60] sm:$0xff] %v1808
      %1827 = vst [vmem:[#allocation2 + $0x68] sm:$0xff] %v1811
      %v1828 = vld [vmem:[#allocation2] sm:$0xff]
      %v1829 = vld [vmem:[#allocation2 + $0x8] sm:$0xff]
      %v1830 = vld [vmem:[#allocation2 + $0x10] sm:$0xff]
      %v1831 = vld [vmem:[#allocation2 + $0x18] sm:$0xf]
      %v1832 = vld [vmem:[#allocation2 + $0x1c] sm:$0xff]
      %v1833 = vld [vmem:[#allocation2 + $0x24] sm:$0xff]
      %v1834 = vld [vmem:[#allocation2 + $0x2c] sm:$0xff]
      %v1835 = vld [vmem:[#allocation2 + $0x34] sm:$0xf]
      %v1836 = vmax.f32 %v1828, %v1832
      %v1837 = vmax.f32 %v1829, %v1833
      %v1838 = vmax.f32 %v1830, %v1834
      %v1839 = vmax.f32 %v1831, %v1835
      %1840 = vst [vmem:[#allocation3] sm:$0xff] %v1836
      %1841 = vst [vmem:[#allocation3 + $0x8] sm:$0xff] %v1837
      %1842 = vst [vmem:[#allocation3 + $0x10] sm:$0xff] %v1838
      %1843 = vst [vmem:[#allocation3 + $0x18] sm:$0xf] %v1839
      %v1844 = vld [vmem:[#allocation2 + $0x38] sm:$0xff]
      %v1845 = vld [vmem:[#allocation2 + $0x40] sm:$0xff]
      %v1846 = vld [vmem:[#allocation2 + $0x48] sm:$0xff]
      %v1847 = vld [vmem:[#allocation2 + $0x50] sm:$0xf]
      %v1848 = vld [vmem:[#allocation2 + $0x54] sm:$0xff]
      %v1849 = vld [vmem:[#allocation2 + $0x5c] sm:$0xff]
      %v1850 = vld [vmem:[#allocation2 + $0x64] sm:$0xff]
      %v1851 = vld [vmem:[#allocation2 + $0x6c] sm:$0xf]
      %v1852 = vmax.f32 %v1844, %v1848
      %v1853 = vmax.f32 %v1845, %v1849
      %v1854 = vmax.f32 %v1846, %v1850
      %v1855 = vmax.f32 %v1847, %v1851
      %1856 = vst [vmem:[#allocation3 + $0x1c] sm:$0xff] %v1852
      %1857 = vst [vmem:[#allocation3 + $0x24] sm:$0xff] %v1853
      %1858 = vst [vmem:[#allocation3 + $0x2c] sm:$0xff] %v1854
      %1859 = vst [vmem:[#allocation3 + $0x34] sm:$0xf] %v1855
      %v1860 = vld [vmem:[#allocation3] ss:$2 sm:$0xff]
      %v1861 = vld [vmem:[%s435] ss:$2 sm:$0xff]
      %v1862 = vld [vmem:[%s437] ss:$2 sm:$0xff]
      %v1863 = vld [vmem:[%s439] ss:$2 sm:$0xf]
      %v1864 = vld [vmem:[%s441] ss:$2 sm:$0xff]
      %v1865 = vld [vmem:[%s443] ss:$2 sm:$0xff]
      %v1866 = vld [vmem:[%s445] ss:$2 sm:$0xff]
      %v1867 = vld [vmem:[%s447] ss:$2 sm:$0xf]
      %v1868 = vmax.f32 %v1860, %v1864
      %v1869 = vmax.f32 %v1861, %v1865
      %v1870 = vmax.f32 %v1862, %v1866
      %v1871 = vmax.f32 %v1863, %v1867
      %v1872 = vadd.f32 %v1868, %v193
      %v1873 = vadd.f32 %v1869, %v193
      %v1874 = vadd.f32 %v1870, %v193
      %v1875 = vadd.f32 %v1871, %v193
      %v1876 = vmax.f32 %v1872, 0.0
      %v1877 = vmax.f32 %v1873, 0.0
      %v1878 = vmax.f32 %v1874, 0.0
      %v1879 = vmax.f32 %v1875, 0.0
      %v1880 = vpack.c.bf16 %v1877, %v1876
      %v1881 = vpack.c.bf16 %v1879, %v1878
      %v1884 = vunpack.c.l.b16 %v1880
      %v1885 = vunpack.c.h.b16 %v1880
      %v1886 = vunpack.c.l.b16 %v1881
      %v1887 = vunpack.c.h.b16 %v1881
      %v1888 = vpack.c.b16 %v1884, %v1884
      %v1889 = vpack.c.b16 %v1885, %v1885
      %v1890 = vpack.c.b16 %v1886, %v1886
      %v1891 = vpack.c.b16 %v1887, %v1887
      %1896 = vst [vmem:[%s170 + $0x54] sm:$0xf] %v1888
      %1897 = vst [vmem:[%s170 + $0x58] sm:$0xf] %v1889
      %1898 = vst [vmem:[%s170 + $0x5c] sm:$0xf] %v1890
      %1899 = vst [vmem:[%s170 + $0x60] sm:$0x3] %v1891
      %p1900 = scmp.lt.s32.totalorder %s14, 1
      %s1901 = scalar_select %p1900, %s14, 1
      %s1902 = smul.addr %s1901, 25
      %s1903 = smul.addr %s1902, 4
      %s1904 = scalar_lea.vmem %s3, %s1903
      // Predicated region
      $region33: #{net_forward.3} parent=31 // pred_check
        %p1905 = pneg %p100
      $region34: #{net_forward.3} parent=31 // pred_check_branch
        %1907 = sbr.rel (%p1905) target = $region36
      $region35: #{net_forward.3} parent=31 // pred_region
        _
      $region36: #{net_forward.3} parent=31 // pred_fallthru
        _
    $region32: #{net_forward.3} parent=5 // pred_fallthru
      _
    %p1908 = scmp.le.s32.totalorder 2, %s9
    // Predicated region
    $region37: #{net_forward.3} parent=5 // pred_check
      %p1909 = pneg %p1908
    $region38: #{net_forward.3} parent=5 // pred_check_branch
      %1911 = sbr.rel (%p1909) target = $region40
    $region39: #{net_forward.3} parent=5 // pred_region
      %s1912 = ssub.s32 %s9, 2
      // Predicated region
      $region41: #{net_forward.3} parent=39 // pred_check
        %p1913 = pneg %p106
      $region42: #{net_forward.3} parent=39 // pred_check_branch
        %1915 = sbr.rel (%p1913) target = $region44
      $region43: #{net_forward.3} parent=39 // pred_region
        %p1916 = scmp.lt.s32.totalorder %s15, 1
        %s1917 = scalar_select %p1916, %s15, 1
        %s1918 = smul.addr %s1917, 25
        %s1919 = smul.addr %s1918, 4
        %s1920 = scalar_lea.vmem %s3, %s1919
      $region44: #{net_forward.3} parent=39 // pred_fallthru
        _
    $region40: #{net_forward.3} parent=5 // pred_fallthru
      _
  $region6: #{net_forward.3} parent=0 // loop_footer
    %s13 = sadd.s32 1, %s9
  $region7: #{net_forward.3} parent=0 // loop_footer_branch
    %8 = sbr.rel target = $region3
  $region8: #{net_forward.3} parent=0 // loop_exit
    _

// kernel: net_forward.4
$region0: #{net_forward.4}
  #allocation0 [shape = 'u32[]', space=smem, size = 0x4, offset = 0x4, fixed_abs, tag = 'smem constant byte address 0x4 - core index']
  #allocation1 [shape = 'u32[144,128]{1,0:T(1,128)}', space=vmem, size = 0x12000, scoped, tag = 'internal scratch']
  #allocation2 [shape = 'f32[104,128]{1,0:T(8,128)}', space=vmem, size = 0xd000, scoped, tag = 'scratch operand']
  #allocation3 [shape = 'f32[56,128]{1,0:T(8,128)}', space=vmem, size = 0x7000, scoped, tag = 'scratch operand']
  %s0 = inlined_call_operand.vmem [shape: bf16[2,100,256], index: 0, kind: input, shape index: {}]
  %s1 = inlined_call_operand.vmem [shape: bf16[256,128], index: 1, kind: input, shape index: {}]
  %s2 = inlined_call_operand.vmem [shape: f32[1,128], index: 2, kind: input, shape index: {}]
  %s3 = inlined_call_operand.vmem [shape: f32[2,25,128], index: 3, kind: output, shape index: {}]
  %s4 = sld [smem:[#allocation0]]
  $region45: #{net_forward.4} parent=0
    _
  %s6 = ssub.s32 1, %s4
  %s7 = scalar_select 0, %s6, %s4
  loop: start=0, step=1, limit=4
  $region2: #{net_forward.4} parent=0 // loop_pre_header
    _
  $region3: #{net_forward.4} parent=0 // loop_header
    %s9 = sphi 0, %s13
    %p10 = scmp.ge.s32.totalorder %s9, 4
    %s19 = sphi 0, %s21
    %s22 = sphi 0, %s19
    %s23 = sphi 0, %s22
    %s39 = sphi 0, %s23
    %s43 = sphi 0, %s43
    %s45 = sphi 0, %s43
    %s46 = sphi 0, %s45
    %s60 = sphi 0, %s46
    %s64 = sphi 0, %s64
    %s66 = sphi 0, %s64
    %s67 = sphi 0, %s66
    %s81 = sphi 0, %s67
    %s87 = sphi 0, %s89
    %s90 = sphi 0, %s87
    %s91 = sphi 0, %s90
    %s107 = sphi 0, %s91
  $region4: #{net_forward.4} parent=0 // loop_header_branch
    %12 = sbr.rel (%p10) target = $region8
  $region5: #{net_forward.4} parent=0 // loop_body
    %s14 = ssub.s32 %s9, 1
    %s15 = ssub.s32 %s9, 2
    %s16 = sadd.s32 %s9, 1
    %s17 = ssub.s32 %s9, %s16
    %p18 = scmp.eq.s32.totalorder %s17, 0
    %s20 = sadd.s32 %s19, 1
    %s21 = scalar_select %p18, %s19, %s20
    %p24 = pneg %p18
    %p25 = scmp.eq.s32.totalorder %s9, 1
    %p26 = por %p24, %p25
    %p27 = scmp.ne.s32.totalorder %s19, %s22
    %p28 = scmp.eq.s32.totalorder %s9, 0
    %p29 = por %p27, %p28
    %p30 = scmp.ne.s32.totalorder %s19, %s22
    %p31 = scmp.eq.s32.totalorder %s14, 1
    %p32 = por %p30, %p31
    %p33 = scmp.ne.s32.totalorder %s22, %s23
    %p34 = scmp.eq.s32.totalorder %s14, 0
    %p35 = por %p33, %p34
    %p36 = scmp.ne.s32.totalorder %s22, %s23
    %p37 = scmp.eq.s32.totalorder %s15, 1
    %p38 = por %p36, %p37
    %p40 = scmp.ne.s32.totalorder %s23, %s39
    %p41 = scmp.eq.s32.totalorder %s15, 0
    %p42 = por %p40, %p41
    %s44 = sadd.s32 %s43, 1
    %p47 = scmp.eq.s32.totalorder %s9, 1
    %p48 = scmp.ne.s32.totalorder %s43, %s45
    %p49 = scmp.eq.s32.totalorder %s9, 0
    %p50 = por %p48, %p49
    %p51 = scmp.ne.s32.totalorder %s43, %s45
    %p52 = scmp.eq.s32.totalorder %s14, 1
    %p53 = por %p51, %p52
    %p54 = scmp.ne.s32.totalorder %s45, %s46
    %p55 = scmp.eq.s32.totalorder %s14, 0
    %p56 = por %p54, %p55
    %p57 = scmp.ne.s32.totalorder %s45, %s46
    %p58 = scmp.eq.s32.totalorder %s15, 1
    %p59 = por %p57, %p58
    %p61 = scmp.ne.s32.totalorder %s46, %s60
    %p62 = scmp.eq.s32.totalorder %s15, 0
    %p63 = por %p61, %p62
    %s65 = sadd.s32 %s64, 1
    %p68 = scmp.eq.s32.totalorder %s9, 1
    %p69 = scmp.ne.s32.totalorder %s64, %s66
    %p70 = scmp.eq.s32.totalorder %s9, 0
    %p71 = por %p69, %p70
    %p72 = scmp.ne.s32.totalorder %s64, %s66
    %p73 = scmp.eq.s32.totalorder %s14, 1
    %p74 = por %p72, %p73
    %p75 = scmp.ne.s32.totalorder %s66, %s67
    %p76 = scmp.eq.s32.totalorder %s14, 0
    %p77 = por %p75, %p76
    %p78 = scmp.ne.s32.totalorder %s66, %s67
    %p79 = scmp.eq.s32.totalorder %s15, 1
    %p80 = por %p78, %p79
    %p82 = scmp.ne.s32.totalorder %s67, %s81
    %p83 = scmp.eq.s32.totalorder %s15, 0
    %p84 = por %p82, %p83
    %s85 = ssub.s32 %s9, %s16
    %p86 = scmp.eq.s32.totalorder %s85, 0
    %s88 = sadd.s32 %s87, 1
    %s89 = scalar_select %p86, %s87, %s88
    %p92 = pneg %p86
    %p93 = scmp.eq.s32.totalorder %s9, 1
    %p94 = por %p92, %p93
    %p95 = scmp.ne.s32.totalorder %s87, %s90
    %p96 = scmp.eq.s32.totalorder %s9, 0
    %p97 = por %p95, %p96
    %p98 = scmp.ne.s32.totalorder %s87, %s90
    %p99 = scmp.eq.s32.totalorder %s14, 1
    %p100 = por %p98, %p99
    %p101 = scmp.ne.s32.totalorder %s90, %s91
    %p102 = scmp.eq.s32.totalorder %s14, 0
    %p103 = por %p101, %p102
    %p104 = scmp.ne.s32.totalorder %s90, %s91
    %p105 = scmp.eq.s32.totalorder %s15, 1
    %p106 = por %p104, %p105
    %p108 = scmp.ne.s32.totalorder %s91, %s107
    %p109 = scmp.eq.s32.totalorder %s15, 0
    %p110 = por %p108, %p109
    %p111 = scmp.le.s32.totalorder 1, %s9
    %p112 = scmp.lt.s32.totalorder %s9, 3
    %p113 = pnand %p111, %p112
    %p114 = pneg %p113
    // Predicated region
    $region9: #{net_forward.4} parent=5 // pred_check
      _
    $region10: #{net_forward.4} parent=5 // pred_check_branch
      %116 = sbr.rel (%p113) target = $region12
    $region11: #{net_forward.4} parent=5 // pred_region
      %s117 = ssub.s32 %s9, 1
      // Predicated region
      $region13: #{net_forward.4} parent=11 // pred_check
        %p118 = pneg %p56
      $region14: #{net_forward.4} parent=11 // pred_check_branch
        %120 = sbr.rel (%p118) target = $region16
      $region15: #{net_forward.4} parent=11 // pred_region
        _
      $region16: #{net_forward.4} parent=11 // pred_fallthru
        _
      // Predicated region
      $region17: #{net_forward.4} parent=11 // pred_check
        %p121 = pneg %p77
      $region18: #{net_forward.4} parent=11 // pred_check_branch
        %123 = sbr.rel (%p121) target = $region20
      $region19: #{net_forward.4} parent=11 // pred_region
        _
      $region20: #{net_forward.4} parent=11 // pred_fallthru
        _
    $region12: #{net_forward.4} parent=5 // pred_fallthru
      _
    %p124 = scmp.lt.s32.totalorder %s9, 2
    // Predicated region
    $region21: #{net_forward.4} parent=5 // pred_check
      %p125 = pneg %p124
    $region22: #{net_forward.4} parent=5 // pred_check_branch
      %127 = sbr.rel (%p125) target = $region24
    $region23: #{net_forward.4} parent=5 // pred_region
      // Predicated region
      $region25: #{net_forward.4} parent=23 // pred_check
        %p128 = pneg %p29
      $region26: #{net_forward.4} parent=23 // pred_check_branch
        %130 = sbr.rel (%p128) target = $region28
      $region27: #{net_forward.4} parent=23 // pred_region
        %p131 = scmp.lt.s32.totalorder %s9, 1
        %s132 = scalar_select %p131, %s9, 1
        %s133 = smul.addr %s132, 26
        %s134 = smul.addr %s133, 4
        %s135 = scalar_lea.vmem %s0, %s134
      $region28: #{net_forward.4} parent=23 // pred_fallthru
        _
    $region24: #{net_forward.4} parent=5 // pred_fallthru
      _
    %p136 = scmp.le.s32.totalorder 1, %s9
    %p137 = scmp.lt.s32.totalorder %s9, 3
    %p138 = pnand %p136, %p137
    %p139 = pneg %p138
    // Predicated region
    $region29: #{net_forward.4} parent=5 // pred_check
      _
    $region30: #{net_forward.4} parent=5 // pred_check_branch
      %141 = sbr.rel (%p138) target = $region32
    $region31: #{net_forward.4} parent=5 // pred_region
      %s142 = ssub.s32 %s9, 1
      %p143 = scmp.lt.s32.totalorder %s14, 1
      %s144 = scalar_select %p143, %s14, 1
      %s145 = smul.addr %s144, 26
      %s146 = smul.addr %s145, 4
      %s147 = scalar_lea.vmem %s0, %s146
      %p148 = pneg %p35
      %p149 = pneg %p32
      %p150 = pneg %p56
      %p151 = pneg %p53
      %p152 = pneg %p77
      %p153 = pneg %p74
      %p154 = pneg %p103
      %p155 = pneg %p100
      %p156 = scmp.lt.s32.totalorder %s14, 1
      %s157 = scalar_select %p156, %s14, 1
      %s158 = smul.addr %s157, 4
      %s159 = smul.addr %s158, 8
      %s160 = scalar_lea.vmem %s3, %s159
      %p161 = scmp.lt.s32.totalorder %s14, 1
      %s162 = scalar_select %p161, %s14, 1
      %s163 = smul.addr %s162, 26
      %s164 = smul.addr %s163, 4
      %s165 = scalar_lea.vmem %s0, %s164
      %p166 = scmp.lt.s32.totalorder %s14, 1
      %s167 = scalar_select %p166, %s14, 1
      %s168 = smul.addr %s167, 4
      %s169 = smul.addr %s168, 8
      %s170 = scalar_lea.vmem %s3, %s169
      %v172 = vld [vmem:[%s1] sm:$0xf]
      %v173 = vld [vmem:[%s1 + $0x4] sm:$0xf]
      %v174 = vld [vmem:[%s1 + $0x8] sm:$0xf]
      %v175 = vld [vmem:[%s1 + $0xc] sm:$0xf]
      %v176 = vld [vmem:[%s1 + $0x10] sm:$0xf]
      %v177 = vld [vmem:[%s1 + $0x14] sm:$0xf]
      %v178 = vld [vmem:[%s1 + $0x18] sm:$0xf]
      %v179 = vld [vmem:[%s1 + $0x1c] sm:$0xf]
      %v180 = vld [vmem:[%s1 + $0x20] sm:$0xf]
      %v181 = vld [vmem:[%s1 + $0x24] sm:$0xf]
      %v182 = vld [vmem:[%s1 + $0x28] sm:$0xf]
      %v183 = vld [vmem:[%s1 + $0x2c] sm:$0xf]
      %v184 = vld [vmem:[%s1 + $0x30] sm:$0xf]
      %v185 = vld [vmem:[%s1 + $0x34] sm:$0xf]
      %v186 = vld [vmem:[%s1 + $0x38] sm:$0xf]
      %v187 = vld [vmem:[%s1 + $0x3c] sm:$0xf]
      %v188 = vld [vmem:[%s1 + $0x40] sm:$0xf]
      %v189 = vld [vmem:[%s1 + $0x44] sm:$0xf]
      %v190 = vld [vmem:[%s1 + $0x48] sm:$0xf]
      %v191 = vld [vmem:[%s1 + $0x4c] sm:$0xf]
      %v192 = vld [vmem:[%s1 + $0x50] sm:$0xf]
      %v193 = vld [vmem:[%s1 + $0x54] sm:$0xf]
      %v194 = vld [vmem:[%s1 + $0x58] sm:$0xf]
      %v195 = vld [vmem:[%s1 + $0x5c] sm:$0xf]
      %v196 = vld [vmem:[%s1 + $0x60] sm:$0xf]
      %v197 = vld [vmem:[%s1 + $0x64] sm:$0xf]
      %v198 = vld [vmem:[%s1 + $0x68] sm:$0xf]
      %v199 = vld [vmem:[%s1 + $0x6c] sm:$0xf]
      %v200 = vld [vmem:[%s1 + $0x70] sm:$0xf]
      %v201 = vld [vmem:[%s1 + $0x74] sm:$0xf]
      %v202 = vld [vmem:[%s1 + $0x78] sm:$0xf]
      %v203 = vld [vmem:[%s1 + $0x7c] sm:$0xf]
      %v204 = vld [vmem:[%s2] sm:$0x1]
      %v206 = vlaneseq
      %v207 = vshrl.u32 %v206, 7
      %v208 = vsub.s32 0, %v207
      %v209 = vrot.slane %v204, %v208
      %v211 = vld [vmem:[%s165] sm:$0xff]
      %v212 = vld [vmem:[%s165 + $0x8] sm:$0xff]
      %v213 = vld [vmem:[%s165 + $0x10] sm:$0xff]
      %v214 = vld [vmem:[%s165 + $0x18] sm:$0xff]
      %v215 = vld [vmem:[%s165 + $0x20] sm:$0xff]
      %v216 = vld [vmem:[%s165 + $0x28] sm:$0xff]
      %v217 = vld [vmem:[%s165 + $0x30] sm:$0xff]
      %v218 = vld [vmem:[%s165 + $0x38] sm:$0xff]
      %v219 = vld [vmem:[%s165 + $0x40] sm:$0xff]
      %v220 = vld [vmem:[%s165 + $0x48] sm:$0xff]
      %v221 = vld [vmem:[%s165 + $0x50] sm:$0xff]
      %v222 = vld [vmem:[%s165 + $0x58] sm:$0xff]
      %v223 = vld [vmem:[%s165 + $0x60] sm:$0x33]
      %v237 = vunpack.c.l.b16 %v211
      %v238 = vunpack.c.h.b16 %v211
      %v239 = vunpack.c.l.b16 %v212
      %v240 = vunpack.c.h.b16 %v212
      %v241 = vunpack.c.l.b16 %v213
      %v242 = vunpack.c.h.b16 %v213
      %v243 = vunpack.c.l.b16 %v214
      %v244 = vunpack.c.h.b16 %v214
      %v245 = vunpack.c.l.b16 %v215
      %v246 = vunpack.c.h.b16 %v215
      %v247 = vunpack.c.l.b16 %v216
      %v248 = vunpack.c.h.b16 %v216
      %v249 = vunpack.c.l.b16 %v217
      %v250 = vunpack.c.h.b16 %v217
      %v251 = vunpack.c.l.b16 %v218
      %v252 = vunpack.c.h.b16 %v218
      %v253 = vunpack.c.l.b16 %v219
      %v254 = vunpack.c.h.b16 %v219
      %v255 = vunpack.c.l.b16 %v220
      %v256 = vunpack.c.h.b16 %v220
      %v257 = vunpack.c.l.b16 %v221
      %v258 = vunpack.c.h.b16 %v221
      %v259 = vunpack.c.l.b16 %v222
      %v260 = vunpack.c.h.b16 %v222
      %v261 = vunpack.c.l.b16 %v223
      %v262 = vunpack.c.h.b16 %v223
      %v263 = vpack.c.b16 %v239, %v237
      %v264 = vpack.c.b16 %v240, %v238
      %v265 = vpack.c.b16 %v243, %v241
      %v266 = vpack.c.b16 %v244, %v242
      %v267 = vpack.c.b16 %v247, %v245
      %v268 = vpack.c.b16 %v248, %v246
      %v269 = vpack.c.b16 %v251, %v249
      %v270 = vpack.c.b16 %v252, %v250
      %v271 = vpack.c.b16 %v255, %v253
      %v272 = vpack.c.b16 %v256, %v254
      %v273 = vpack.c.b16 %v259, %v257
      %v274 = vpack.c.b16 %v260, %v258
      %v275 = vpack.c.b16 %v261, %v261
      %v276 = vpack.c.b16 %v262, %v262
      %v323 = vunpack.c.l.b16 %v172
      %v324 = vunpack.c.l.b16 %v173
      %v325 = vunpack.c.l.b16 %v174
      %v326 = vunpack.c.l.b16 %v175
      %v327 = vunpack.c.l.b16 %v176
      %v328 = vunpack.c.l.b16 %v177
      %v329 = vunpack.c.l.b16 %v178
      %v330 = vunpack.c.l.b16 %v179
      %v331 = vunpack.c.l.b16 %v180
      %v332 = vunpack.c.l.b16 %v181
      %v333 = vunpack.c.l.b16 %v182
      %v334 = vunpack.c.l.b16 %v183
      %v335 = vunpack.c.l.b16 %v184
      %v336 = vunpack.c.l.b16 %v185
      %v337 = vunpack.c.l.b16 %v186
      %v338 = vunpack.c.l.b16 %v187
      %v339 = vunpack.c.l.b16 %v188
      %v340 = vunpack.c.l.b16 %v189
      %v341 = vunpack.c.l.b16 %v190
      %v342 = vunpack.c.l.b16 %v191
      %v343 = vunpack.c.l.b16 %v192
      %v344 = vunpack.c.l.b16 %v193
      %v345 = vunpack.c.l.b16 %v194
      %v346 = vunpack.c.l.b16 %v195
      %v347 = vunpack.c.l.b16 %v196
      %v348 = vunpack.c.l.b16 %v197
      %v349 = vunpack.c.l.b16 %v198
      %v350 = vunpack.c.l.b16 %v199
      %v351 = vunpack.c.l.b16 %v200
      %v352 = vunpack.c.l.b16 %v201
      %v353 = vunpack.c.l.b16 %v202
      %v354 = vunpack.c.l.b16 %v203
      %v355 = vpack.c.b16 %v324, %v323
      %v356 = vpack.c.b16 %v326, %v325
      %v357 = vpack.c.b16 %v328, %v327
      %v358 = vpack.c.b16 %v330, %v329
      %v359 = vpack.c.b16 %v332, %v331
      %v360 = vpack.c.b16 %v334, %v333
      %v361 = vpack.c.b16 %v336, %v335
      %v362 = vpack.c.b16 %v338, %v337
      %v363 = vpack.c.b16 %v340, %v339
      %v364 = vpack.c.b16 %v342, %v341
      %v365 = vpack.c.b16 %v344, %v343
      %v366 = vpack.c.b16 %v346, %v345
      %v367 = vpack.c.b16 %v348, %v347
      %v368 = vpack.c.b16 %v350, %v349
      %v369 = vpack.c.b16 %v352, %v351
      %v370 = vpack.c.b16 %v354, %v353
      %387 = vmatprep.subr.bf16.mxu0 0
      %388 = vmatpush1.bf16.msra.mxu0 %v355
      %389 = vmatprep.subr.bf16.mxu0 0
      %390 = vmatpush1.bf16.msra.mxu0 %v356
      %391 = vmatprep.subr.bf16.mxu0 0
      %392 = vmatpush1.bf16.msra.mxu0 %v357
      %393 = vmatprep.subr.bf16.mxu0 0
      %394 = vmatpush1.bf16.msra.mxu0 %v358
      %395 = vmatprep.subr.bf16.mxu0 0
      %396 = vmatpush1.bf16.msra.mxu0 %v359
      %397 = vmatprep.subr.bf16.mxu0 0
      %398 = vmatpush1.bf16.msra.mxu0 %v360
      %399 = vmatprep.subr.bf16.mxu0 0
      %400 = vmatpush1.bf16.msra.mxu0 %v361
      %401 = vmatprep.subr.bf16.mxu0 0
      %402 = vmatpush1.bf16.msra.mxu0 %v362
      %403 = vmatprep.subr.bf16.mxu0 0
      %404 = vmatpush1.bf16.msra.mxu0 %v363
      %405 = vmatprep.subr.bf16.mxu0 0
      %406 = vmatpush1.bf16.msra.mxu0 %v364
      %407 = vmatprep.subr.bf16.mxu0 0
      %408 = vmatpush1.bf16.msra.mxu0 %v365
      %409 = vmatprep.subr.bf16.mxu0 0
      %410 = vmatpush1.bf16.msra.mxu0 %v366
      %411 = vmatprep.subr.bf16.mxu0 0
      %412 = vmatpush1.bf16.msra.mxu0 %v367
      %413 = vmatprep.subr.bf16.mxu0 0
      %414 = vmatpush1.bf16.msra.mxu0 %v368
      %415 = vmatprep.subr.bf16.mxu0 0
      %416 = vmatpush1.bf16.msra.mxu0 %v369
      %417 = vmatprep.subr.bf16.mxu0 0
      %418 = vmatpush1.bf16.msra.mxu0 %v370
      %419 = vmatprep.mubr.bf16.mxu0 %v264
      %420 = vmatmul.mubr.bf16.gmra.mrb[0].mxu0 %v263
      %v421 = vpop.f32.mrb[0].mxu0
      %v422 = vadd.f32 0.0, %v421
      %v423 = vpop.f32.mrb[0].mxu0
      %v424 = vpop.f32.mrb[0].mxu0
      %v425 = vadd.f32 0.0, %v424
      %v426 = vpop.f32.mrb[0].mxu0
      %427 = vmatprep.mubr.bf16.mxu0 %v266
      %428 = vmatmul.mubr.bf16.gmra.mrb[0].mxu0 %v265
      %v429 = vpop.f32.mrb[0].mxu0
      %v430 = vadd.f32 0.0, %v429
      %v431 = vpop.f32.mrb[0].mxu0
      %v432 = vpop.f32.mrb[0].mxu0
      %v433 = vadd.f32 0.0, %v432
      %v434 = vpop.f32.mrb[0].mxu0
      %435 = vmatprep.mubr.bf16.mxu0 %v268
      %436 = vmatmul.mubr.bf16.gmra.mrb[0].mxu0 %v267
      %v437 = vpop.f32.mrb[0].mxu0
      %v438 = vadd.f32 0.0, %v437
      %v439 = vpop.f32.mrb[0].mxu0
      %v440 = vpop.f32.mrb[0].mxu0
      %v441 = vadd.f32 0.0, %v440
      %v442 = vpop.f32.mrb[0].mxu0
      %443 = vmatprep.mubr.bf16.mxu0 %v270
      %444 = vmatmul.mubr.bf16.gmra.mrb[0].mxu0 %v269
      %v445 = vpop.f32.mrb[0].mxu0
      %v446 = vadd.f32 0.0, %v445
      %v447 = vpop.f32.mrb[0].mxu0
      %v448 = vpop.f32.mrb[0].mxu0
      %v449 = vadd.f32 0.0, %v448
      %v450 = vpop.f32.mrb[0].mxu0
      %451 = vmatprep.mubr.bf16.mxu0 %v272
      %452 = vmatmul.mubr.bf16.gmra.mrb[0].mxu0 %v271
      %v453 = vpop.f32.mrb[0].mxu0
      %v454 = vadd.f32 0.0, %v453
      %v455 = vpop.f32.mrb[0].mxu0
      %v456 = vpop.f32.mrb[0].mxu0
      %v457 = vadd.f32 0.0, %v456
      %v458 = vpop.f32.mrb[0].mxu0
      %459 = vmatprep.mubr.bf16.mxu0 %v274
      %460 = vmatmul.mubr.bf16.gmra.mrb[0].mxu0 %v273
      %v461 = vpop.f32.mrb[0].mxu0
      %v462 = vadd.f32 0.0, %v461
      %v463 = vpop.f32.mrb[0].mxu0
      %v464 = vpop.f32.mrb[0].mxu0
      %v465 = vadd.f32 0.0, %v464
      %v466 = vpop.f32.mrb[0].mxu0
      %467 = vmatprep.mubr.bf16.mxu0 %v276
      %468 = vmatmul.mubr.bf16.gmra.mrb[0].mxu0 %v275
      %v469 = vpop.f32.mrb[0].mxu0
      %v470 = vadd.f32 0.0, %v469
      %v471 = vpop.f32.mrb[0].mxu0
      %v472 = vpop.f32.mrb[0].mxu0
      %v473 = vpop.f32.mrb[0].mxu0
      %474 = vdwg.mxu0
      %475 = vst [vmem:[#allocation2] sm:$0xff] %v422
      %476 = vst [vmem:[#allocation2 + $0x8] sm:$0xff] %v425
      %477 = vst [vmem:[#allocation2 + $0x10] sm:$0xff] %v430
      %478 = vst [vmem:[#allocation2 + $0x18] sm:$0xff] %v433
      %479 = vst [vmem:[#allocation2 + $0x20] sm:$0xff] %v438
      %480 = vst [vmem:[#allocation2 + $0x28] sm:$0xff] %v441
      %481 = vst [vmem:[#allocation2 + $0x30] sm:$0xff] %v446
      %482 = vst [vmem:[#allocation2 + $0x38] sm:$0xff] %v449
      %483 = vst [vmem:[#allocation2 + $0x40] sm:$0xff] %v454
      %484 = vst [vmem:[#allocation2 + $0x48] sm:$0xff] %v457
      %485 = vst [vmem:[#allocation2 + $0x50] sm:$0xff] %v462
      %486 = vst [vmem:[#allocation2 + $0x58] sm:$0xff] %v465
      %487 = vst [vmem:[#allocation2 + $0x60] sm:$0xf] %v470
      %v488 = vld [vmem:[#allocation2] sm:$0xff]
      %v489 = vld [vmem:[#allocation2 + $0x8] sm:$0x3]
      %v490 = vld [vmem:[#allocation2 + $0xa] sm:$0xff]
      %v491 = vld [vmem:[#allocation2 + $0x12] sm:$0x3]
      %v492 = vmax.f32 %v488, %v490
      %v493 = vmax.f32 %v489, %v491
      %494 = vst [vmem:[#allocation3] sm:$0xff] %v492
      %495 = vst [vmem:[#allocation3 + $0x8] sm:$0x3] %v493
      %v496 = vld [vmem:[#allocation2 + $0x14] sm:$0xff]
      %v497 = vld [vmem:[#allocation2 + $0x1c] sm:$0x3]
      %v498 = vld [vmem:[#allocation2 + $0x1e] sm:$0xff]
      %v499 = vld [vmem:[#allocation2 + $0x26] sm:$0x3]
      %v500 = vmax.f32 %v496, %v498
      %v501 = vmax.f32 %v497, %v499
      %502 = vst [vmem:[#allocation3 + $0xa] sm:$0xff] %v500
      %503 = vst [vmem:[#allocation3 + $0x12] sm:$0x3] %v501
      %v504 = vld [vmem:[#allocation2 + $0x28] sm:$0xff]
      %v505 = vld [vmem:[#allocation2 + $0x30] sm:$0x3]
      %v506 = vld [vmem:[#allocation2 + $0x32] sm:$0xff]
      %v507 = vld [vmem:[#allocation2 + $0x3a] sm:$0x3]
      %v508 = vmax.f32 %v504, %v506
      %v509 = vmax.f32 %v505, %v507
      %510 = vst [vmem:[#allocation3 + $0x14] sm:$0xff] %v508
      %511 = vst [vmem:[#allocation3 + $0x1c] sm:$0x3] %v509
      %v512 = vld [vmem:[#allocation2 + $0x3c] sm:$0xff]
      %v513 = vld [vmem:[#allocation2 + $0x44] sm:$0x3]
      %v514 = vld [vmem:[#allocation2 + $0x46] sm:$0xff]
      %v515 = vld [vmem:[#allocation2 + $0x4e] sm:$0x3]
      %v516 = vmax.f32 %v512, %v514
      %v517 = vmax.f32 %v513, %v515
      %518 = vst [vmem:[#allocation3 + $0x1e] sm:$0xff] %v516
      %519 = vst [vmem:[#allocation3 + $0x26] sm:$0x3] %v517
      %v520 = vld [vmem:[#allocation2 + $0x50] sm:$0xff]
      %v521 = vld [vmem:[#allocation2 + $0x58] sm:$0x3]
      %v522 = vld [vmem:[#allocation2 + $0x5a] sm:$0xff]
      %v523 = vld [vmem:[#allocation2 + $0x62] sm:$0x3]
      %v524 = vmax.f32 %v520, %v522
      %v525 = vmax.f32 %v521, %v523
      %526 = vst [vmem:[#allocation3 + $0x28] sm:$0xff] %v524
      %527 = vst [vmem:[#allocation3 + $0x30] sm:$0x3] %v525
      %v528 = vld [vmem:[#allocation3] ss:$2 sm:$0xff]
      %s529 = scalar_lea.vmem [#allocation3], 16
      %v530 = vld [vmem:[%s529] ss:$2 sm:$0xff]
      %s531 = scalar_lea.vmem [#allocation3], 32
      %v532 = vld [vmem:[%s531] ss:$2 sm:$0xff]
      %s533 = scalar_lea.vmem [#allocation3], 48
      %v534 = vld [vmem:[%s533] ss:$2 sm:$0x1]
      %s535 = scalar_lea.vmem [#allocation3], 1
      %v536 = vld [vmem:[%s535] ss:$2 sm:$0xff]
      %s537 = scalar_lea.vmem [#allocation3], 17
      %v538 = vld [vmem:[%s537] ss:$2 sm:$0xff]
      %s539 = scalar_lea.vmem [#allocation3], 33
      %v540 = vld [vmem:[%s539] ss:$2 sm:$0xff]
      %s541 = scalar_lea.vmem [#allocation3], 49
      %v542 = vld [vmem:[%s541] ss:$2 sm:$0x1]
      %v543 = vmax.f32 %v528, %v536
      %v544 = vmax.f32 %v530, %v538
      %v545 = vmax.f32 %v532, %v540
      %v546 = vmax.f32 %v534, %v542
      %v547 = vadd.f32 %v543, %v209
      %v548 = vadd.f32 %v544, %v209
      %v549 = vadd.f32 %v545, %v209
      %v550 = vadd.f32 %v546, %v209
      %v551 = vmax.f32 %v547, 0.0
      %v552 = vmax.f32 %v548, 0.0
      %v553 = vmax.f32 %v549, 0.0
      %v554 = vmax.f32 %v550, 0.0
      %555 = vst [vmem:[%s170] sm:$0xff] %v551
      %556 = vst [vmem:[%s170 + $0x8] sm:$0xff] %v552
      %557 = vst [vmem:[%s170 + $0x10] sm:$0xff] %v553
      %558 = vst [vmem:[%s170 + $0x18] sm:$0x1] %v554
      %p559 = scmp.lt.s32.totalorder %s14, 1
      %s560 = scalar_select %p559, %s14, 1
      %s561 = smul.addr %s560, 4
      %s562 = smul.addr %s561, 8
      %s563 = scalar_lea.vmem %s3, %s562
      // Predicated region
      $region33: #{net_forward.4} parent=31 // pred_check
        %p564 = pneg %p100
      $region34: #{net_forward.4} parent=31 // pred_check_branch
        %566 = sbr.rel (%p564) target = $region36
      $region35: #{net_forward.4} parent=31 // pred_region
        _
      $region36: #{net_forward.4} parent=31 // pred_fallthru
        _
    $region32: #{net_forward.4} parent=5 // pred_fallthru
      _
    %p567 = scmp.le.s32.totalorder 2, %s9
    // Predicated region
    $region37: #{net_forward.4} parent=5 // pred_check
      %p568 = pneg %p567
    $region38: #{net_forward.4} parent=5 // pred_check_branch
      %570 = sbr.rel (%p568) target = $region40
    $region39: #{net_forward.4} parent=5 // pred_region
      %s571 = ssub.s32 %s9, 2
      // Predicated region
      $region41: #{net_forward.4} parent=39 // pred_check
        %p572 = pneg %p106
      $region42: #{net_forward.4} parent=39 // pred_check_branch
        %574 = sbr.rel (%p572) target = $region44
      $region43: #{net_forward.4} parent=39 // pred_region
        %p575 = scmp.lt.s32.totalorder %s15, 1
        %s576 = scalar_select %p575, %s15, 1
        %s577 = smul.addr %s576, 4
        %s578 = smul.addr %s577, 8
        %s579 = scalar_lea.vmem %s3, %s578
      $region44: #{net_forward.4} parent=39 // pred_fallthru
        _
    $region40: #{net_forward.4} parent=5 // pred_fallthru
      _
  $region6: #{net_forward.4} parent=0 // loop_footer
    %s13 = sadd.s32 1, %s9
  $region7: #{net_forward.4} parent=0 // loop_footer_branch
    %8 = sbr.rel target = $region3
  $region8: #{net_forward.4} parent=0 // loop_exit
    _

// kernel: net_forward.5
$region0: #{net_forward.5}
  #allocation0 [shape = 'u32[]', space=smem, size = 0x4, offset = 0x4, fixed_abs, tag = 'smem constant byte address 0x4 - core index']
  #allocation1 [shape = 'u32[144,128]{1,0:T(1,128)}', space=vmem, size = 0x12000, scoped, tag = 'internal scratch']
  %s0 = inlined_call_operand.vmem [shape: bf16[8,512], index: 0, kind: input, shape index: {}]
  %s1 = inlined_call_operand.vmem [shape: bf16[512,128], index: 1, kind: input, shape index: {}]
  %s2 = inlined_call_operand.vmem [shape: f32[1,128], index: 2, kind: input, shape index: {}]
  %s3 = inlined_call_operand.vmem [shape: bf16[128,128], index: 3, kind: input, shape index: {}]
  %s4 = inlined_call_operand.vmem [shape: f32[1,128], index: 4, kind: input, shape index: {}]
  %s5 = inlined_call_operand.vmem [shape: bf16[128,128], index: 5, kind: input, shape index: {}]
  %s6 = inlined_call_operand.vmem [shape: f32[1,128], index: 6, kind: input, shape index: {}]
  %s7 = inlined_call_operand.vmem [shape: f32[8,128], index: 7, kind: output, shape index: {}]
  %s8 = sld [smem:[#allocation0]]
  $region38: #{net_forward.5} parent=0
    _
  %s10 = ssub.s32 1, %s8
  %s11 = scalar_select 0, %s10, %s8
  // Predicated region
  $region2: #{net_forward.5} parent=0 // pred_check
    _
  $region3: #{net_forward.5} parent=0 // pred_check_branch
    %13 = sbr.rel (0) target = $region5
  $region4: #{net_forward.5} parent=0 // pred_region
    _
  $region5: #{net_forward.5} parent=0 // pred_fallthru
    _
  // Predicated region
  $region6: #{net_forward.5} parent=0 // pred_check
    _
  $region7: #{net_forward.5} parent=0 // pred_check_branch
    %15 = sbr.rel (0) target = $region9
  $region8: #{net_forward.5} parent=0 // pred_region
    _
  $region9: #{net_forward.5} parent=0 // pred_fallthru
    _
  // Predicated region
  $region10: #{net_forward.5} parent=0 // pred_check
    _
  $region11: #{net_forward.5} parent=0 // pred_check_branch
    %17 = sbr.rel (0) target = $region13
  $region12: #{net_forward.5} parent=0 // pred_region
    _
  $region13: #{net_forward.5} parent=0 // pred_fallthru
    _
  // Predicated region
  $region14: #{net_forward.5} parent=0 // pred_check
    _
  $region15: #{net_forward.5} parent=0 // pred_check_branch
    %19 = sbr.rel (0) target = $region17
  $region16: #{net_forward.5} parent=0 // pred_region
    _
  $region17: #{net_forward.5} parent=0 // pred_fallthru
    _
  // Predicated region
  $region18: #{net_forward.5} parent=0 // pred_check
    _
  $region19: #{net_forward.5} parent=0 // pred_check_branch
    %21 = sbr.rel (0) target = $region21
  $region20: #{net_forward.5} parent=0 // pred_region
    _
  $region21: #{net_forward.5} parent=0 // pred_fallthru
    _
  // Predicated region
  $region22: #{net_forward.5} parent=0 // pred_check
    _
  $region23: #{net_forward.5} parent=0 // pred_check_branch
    %23 = sbr.rel (0) target = $region25
  $region24: #{net_forward.5} parent=0 // pred_region
    _
  $region25: #{net_forward.5} parent=0 // pred_fallthru
    _
  // Predicated region
  $region26: #{net_forward.5} parent=0 // pred_check
    _
  $region27: #{net_forward.5} parent=0 // pred_check_branch
    %25 = sbr.rel (0) target = $region29
  $region28: #{net_forward.5} parent=0 // pred_region
    _
  $region29: #{net_forward.5} parent=0 // pred_fallthru
    _
  %v27 = vld [vmem:[%s0] sm:$0xff]
  %v28 = vld [vmem:[%s0 + $0x8] sm:$0xff]
  %v29 = vld [vmem:[%s1] sm:$0xf]
  %v30 = vld [vmem:[%s1 + $0x4] sm:$0xf]
  %v31 = vld [vmem:[%s1 + $0x8] sm:$0xf]
  %v32 = vld [vmem:[%s1 + $0xc] sm:$0xf]
  %v33 = vld [vmem:[%s1 + $0x10] sm:$0xf]
  %v34 = vld [vmem:[%s1 + $0x14] sm:$0xf]
  %v35 = vld [vmem:[%s1 + $0x18] sm:$0xf]
  %v36 = vld [vmem:[%s1 + $0x1c] sm:$0xf]
  %v37 = vld [vmem:[%s1 + $0x20] sm:$0xf]
  %v38 = vld [vmem:[%s1 + $0x24] sm:$0xf]
  %v39 = vld [vmem:[%s1 + $0x28] sm:$0xf]
  %v40 = vld [vmem:[%s1 + $0x2c] sm:$0xf]
  %v41 = vld [vmem:[%s1 + $0x30] sm:$0xf]
  %v42 = vld [vmem:[%s1 + $0x34] sm:$0xf]
  %v43 = vld [vmem:[%s1 + $0x38] sm:$0xf]
  %v44 = vld [vmem:[%s1 + $0x3c] sm:$0xf]
  %v45 = vld [vmem:[%s1 + $0x40] sm:$0xf]
  %v46 = vld [vmem:[%s1 + $0x44] sm:$0xf]
  %v47 = vld [vmem:[%s1 + $0x48] sm:$0xf]
  %v48 = vld [vmem:[%s1 + $0x4c] sm:$0xf]
  %v49 = vld [vmem:[%s1 + $0x50] sm:$0xf]
  %v50 = vld [vmem:[%s1 + $0x54] sm:$0xf]
  %v51 = vld [vmem:[%s1 + $0x58] sm:$0xf]
  %v52 = vld [vmem:[%s1 + $0x5c] sm:$0xf]
  %v53 = vld [vmem:[%s1 + $0x60] sm:$0xf]
  %v54 = vld [vmem:[%s1 + $0x64] sm:$0xf]
  %v55 = vld [vmem:[%s1 + $0x68] sm:$0xf]
  %v56 = vld [vmem:[%s1 + $0x6c] sm:$0xf]
  %v57 = vld [vmem:[%s1 + $0x70] sm:$0xf]
  %v58 = vld [vmem:[%s1 + $0x74] sm:$0xf]
  %v59 = vld [vmem:[%s1 + $0x78] sm:$0xf]
  %v60 = vld [vmem:[%s1 + $0x7c] sm:$0xf]
  %v61 = vld [vmem:[%s1 + $0x80] sm:$0xf]
  %v62 = vld [vmem:[%s1 + $0x84] sm:$0xf]
  %v63 = vld [vmem:[%s1 + $0x88] sm:$0xf]
  %v64 = vld [vmem:[%s1 + $0x8c] sm:$0xf]
  %v65 = vld [vmem:[%s1 + $0x90] sm:$0xf]
  %v66 = vld [vmem:[%s1 + $0x94] sm:$0xf]
  %v67 = vld [vmem:[%s1 + $0x98] sm:$0xf]
  %v68 = vld [vmem:[%s1 + $0x9c] sm:$0xf]
  %v69 = vld [vmem:[%s1 + $0xa0] sm:$0xf]
  %v70 = vld [vmem:[%s1 + $0xa4] sm:$0xf]
  %v71 = vld [vmem:[%s1 + $0xa8] sm:$0xf]
  %v72 = vld [vmem:[%s1 + $0xac] sm:$0xf]
  %v73 = vld [vmem:[%s1 + $0xb0] sm:$0xf]
  %v74 = vld [vmem:[%s1 + $0xb4] sm:$0xf]
  %v75 = vld [vmem:[%s1 + $0xb8] sm:$0xf]
  %v76 = vld [vmem:[%s1 + $0xbc] sm:$0xf]
  %v77 = vld [vmem:[%s1 + $0xc0] sm:$0xf]
  %v78 = vld [vmem:[%s1 + $0xc4] sm:$0xf]
  %v79 = vld [vmem:[%s1 + $0xc8] sm:$0xf]
  %v80 = vld [vmem:[%s1 + $0xcc] sm:$0xf]
  %v81 = vld [vmem:[%s1 + $0xd0] sm:$0xf]
  %v82 = vld [vmem:[%s1 + $0xd4] sm:$0xf]
  %v83 = vld [vmem:[%s1 + $0xd8] sm:$0xf]
  %v84 = vld [vmem:[%s1 + $0xdc] sm:$0xf]
  %v85 = vld [vmem:[%s1 + $0xe0] sm:$0xf]
  %v86 = vld [vmem:[%s1 + $0xe4] sm:$0xf]
  %v87 = vld [vmem:[%s1 + $0xe8] sm:$0xf]
  %v88 = vld [vmem:[%s1 + $0xec] sm:$0xf]
  %v89 = vld [vmem:[%s1 + $0xf0] sm:$0xf]
  %v90 = vld [vmem:[%s1 + $0xf4] sm:$0xf]
  %v91 = vld [vmem:[%s1 + $0xf8] sm:$0xf]
  %v92 = vld [vmem:[%s1 + $0xfc] sm:$0xf]
  %v93 = vld [vmem:[%s2] sm:$0x1]
  %v95 = vlaneseq
  %v96 = vshrl.u32 %v95, 7
  %v97 = vsub.s32 0, %v96
  %v98 = vrot.slane %v93, %v97
  %v102 = vunpack.c.l.b16 %v27
  %v103 = vunpack.c.h.b16 %v27
  %v104 = vunpack.c.l.b16 %v28
  %v105 = vunpack.c.h.b16 %v28
  %v106 = vpack.c.b16 %v102, %v102
  %v107 = vpack.c.b16 %v103, %v103
  %v108 = vpack.c.b16 %v104, %v104
  %v109 = vpack.c.b16 %v105, %v105
  %v178 = vunpack.c.l.b16 %v29
  %v179 = vunpack.c.l.b16 %v30
  %v180 = vunpack.c.l.b16 %v31
  %v181 = vunpack.c.l.b16 %v32
  %v182 = vunpack.c.l.b16 %v33
  %v183 = vunpack.c.l.b16 %v34
  %v184 = vunpack.c.l.b16 %v35
  %v185 = vunpack.c.l.b16 %v36
  %v186 = vunpack.c.l.b16 %v37
  %v187 = vunpack.c.l.b16 %v38
  %v188 = vunpack.c.l.b16 %v39
  %v189 = vunpack.c.l.b16 %v40
  %v190 = vunpack.c.l.b16 %v41
  %v191 = vunpack.c.l.b16 %v42
  %v192 = vunpack.c.l.b16 %v43
  %v193 = vunpack.c.l.b16 %v44
  %v194 = vunpack.c.l.b16 %v45
  %v195 = vunpack.c.l.b16 %v46
  %v196 = vunpack.c.l.b16 %v47
  %v197 = vunpack.c.l.b16 %v48
  %v198 = vunpack.c.l.b16 %v49
  %v199 = vunpack.c.l.b16 %v50
  %v200 = vunpack.c.l.b16 %v51
  %v201 = vunpack.c.l.b16 %v52
  %v202 = vunpack.c.l.b16 %v53
  %v203 = vunpack.c.l.b16 %v54
  %v204 = vunpack.c.l.b16 %v55
  %v205 = vunpack.c.l.b16 %v56
  %v206 = vunpack.c.l.b16 %v57
  %v207 = vunpack.c.l.b16 %v58
  %v208 = vunpack.c.l.b16 %v59
  %v209 = vunpack.c.l.b16 %v60
  %v210 = vunpack.c.l.b16 %v61
  %v211 = vunpack.c.l.b16 %v62
  %v212 = vunpack.c.l.b16 %v63
  %v213 = vunpack.c.l.b16 %v64
  %v214 = vunpack.c.l.b16 %v65
  %v215 = vunpack.c.l.b16 %v66
  %v216 = vunpack.c.l.b16 %v67
  %v217 = vunpack.c.l.b16 %v68
  %v218 = vunpack.c.l.b16 %v69
  %v219 = vunpack.c.l.b16 %v70
  %v220 = vunpack.c.l.b16 %v71
  %v221 = vunpack.c.l.b16 %v72
  %v222 = vunpack.c.l.b16 %v73
  %v223 = vunpack.c.l.b16 %v74
  %v224 = vunpack.c.l.b16 %v75
  %v225 = vunpack.c.l.b16 %v76
  %v226 = vunpack.c.l.b16 %v77
  %v227 = vunpack.c.l.b16 %v78
  %v228 = vunpack.c.l.b16 %v79
  %v229 = vunpack.c.l.b16 %v80
  %v230 = vunpack.c.l.b16 %v81
  %v231 = vunpack.c.l.b16 %v82
  %v232 = vunpack.c.l.b16 %v83
  %v233 = vunpack.c.l.b16 %v84
  %v234 = vunpack.c.l.b16 %v85
  %v235 = vunpack.c.l.b16 %v86
  %v236 = vunpack.c.l.b16 %v87
  %v237 = vunpack.c.l.b16 %v88
  %v238 = vunpack.c.l.b16 %v89
  %v239 = vunpack.c.l.b16 %v90
  %v240 = vunpack.c.l.b16 %v91
  %v241 = vunpack.c.l.b16 %v92
  %v242 = vpack.c.b16 %v179, %v178
  %v243 = vpack.c.b16 %v181, %v180
  %v244 = vpack.c.b16 %v183, %v182
  %v245 = vpack.c.b16 %v185, %v184
  %v246 = vpack.c.b16 %v187, %v186
  %v247 = vpack.c.b16 %v189, %v188
  %v248 = vpack.c.b16 %v191, %v190
  %v249 = vpack.c.b16 %v193, %v192
  %v250 = vpack.c.b16 %v195, %v194
  %v251 = vpack.c.b16 %v197, %v196
  %v252 = vpack.c.b16 %v199, %v198
  %v253 = vpack.c.b16 %v201, %v200
  %v254 = vpack.c.b16 %v203, %v202
  %v255 = vpack.c.b16 %v205, %v204
  %v256 = vpack.c.b16 %v207, %v206
  %v257 = vpack.c.b16 %v209, %v208
  %v258 = vpack.c.b16 %v211, %v210
  %v259 = vpack.c.b16 %v213, %v212
  %v260 = vpack.c.b16 %v215, %v214
  %v261 = vpack.c.b16 %v217, %v216
  %v262 = vpack.c.b16 %v219, %v218
  %v263 = vpack.c.b16 %v221, %v220
  %v264 = vpack.c.b16 %v223, %v222
  %v265 = vpack.c.b16 %v225, %v224
  %v266 = vpack.c.b16 %v227, %v226
  %v267 = vpack.c.b16 %v229, %v228
  %v268 = vpack.c.b16 %v231, %v230
  %v269 = vpack.c.b16 %v233, %v232
  %v270 = vpack.c.b16 %v235, %v234
  %v271 = vpack.c.b16 %v237, %v236
  %v272 = vpack.c.b16 %v239, %v238
  %v273 = vpack.c.b16 %v241, %v240
  %306 = vmatprep.subr.bf16.mxu0 0
  %307 = vmatpush1.bf16.msra.mxu0 %v242
  %308 = vmatprep.subr.bf16.mxu0 0
  %309 = vmatpush1.bf16.msra.mxu0 %v243
  %310 = vmatprep.subr.bf16.mxu0 0
  %311 = vmatpush1.bf16.msra.mxu0 %v244
  %312 = vmatprep.subr.bf16.mxu0 0
  %313 = vmatpush1.bf16.msra.mxu0 %v245
  %314 = vmatprep.subr.bf16.mxu0 0
  %315 = vmatpush1.bf16.msra.mxu0 %v246
  %316 = vmatprep.subr.bf16.mxu0 0
  %317 = vmatpush1.bf16.msra.mxu0 %v247
  %318 = vmatprep.subr.bf16.mxu0 0
  %319 = vmatpush1.bf16.msra.mxu0 %v248
  %320 = vmatprep.subr.bf16.mxu0 0
  %321 = vmatpush1.bf16.msra.mxu0 %v249
  %322 = vmatprep.subr.bf16.mxu0 0
  %323 = vmatpush1.bf16.msra.mxu0 %v250
  %324 = vmatprep.subr.bf16.mxu0 0
  %325 = vmatpush1.bf16.msra.mxu0 %v251
  %326 = vmatprep.subr.bf16.mxu0 0
  %327 = vmatpush1.bf16.msra.mxu0 %v252
  %328 = vmatprep.subr.bf16.mxu0 0
  %329 = vmatpush1.bf16.msra.mxu0 %v253
  %330 = vmatprep.subr.bf16.mxu0 0
  %331 = vmatpush1.bf16.msra.mxu0 %v254
  %332 = vmatprep.subr.bf16.mxu0 0
  %333 = vmatpush1.bf16.msra.mxu0 %v255
  %334 = vmatprep.subr.bf16.mxu0 0
  %335 = vmatpush1.bf16.msra.mxu0 %v256
  %336 = vmatprep.subr.bf16.mxu0 0
  %337 = vmatpush1.bf16.msra.mxu0 %v257
  %338 = vmatprep.mubr.bf16.mxu0 %v107
  %339 = vmatmul.mubr.bf16.gmra.mrb[0].mxu0 %v106
  %v340 = vpop.f32.mrb[0].mxu0
  %v341 = vadd.f32 %v98, %v340
  %v342 = vpop.f32.mrb[0].mxu0
  %v343 = vpop.f32.mrb[0].mxu0
  %v344 = vpop.f32.mrb[0].mxu0
  %345 = vdwg.mxu0
  %346 = vmatprep.subr.bf16.mxu0 0
  %347 = vmatpush1.bf16.msra.mxu0 %v258
  %348 = vmatprep.subr.bf16.mxu0 0
  %349 = vmatpush1.bf16.msra.mxu0 %v259
  %350 = vmatprep.subr.bf16.mxu0 0
  %351 = vmatpush1.bf16.msra.mxu0 %v260
  %352 = vmatprep.subr.bf16.mxu0 0
  %353 = vmatpush1.bf16.msra.mxu0 %v261
  %354 = vmatprep.subr.bf16.mxu0 0
  %355 = vmatpush1.bf16.msra.mxu0 %v262
  %356 = vmatprep.subr.bf16.mxu0 0
  %357 = vmatpush1.bf16.msra.mxu0 %v263
  %358 = vmatprep.subr.bf16.mxu0 0
  %359 = vmatpush1.bf16.msra.mxu0 %v264
  %360 = vmatprep.subr.bf16.mxu0 0
  %361 = vmatpush1.bf16.msra.mxu0 %v265
  %362 = vmatprep.subr.bf16.mxu0 0
  %363 = vmatpush1.bf16.msra.mxu0 %v266
  %364 = vmatprep.subr.bf16.mxu0 0
  %365 = vmatpush1.bf16.msra.mxu0 %v267
  %366 = vmatprep.subr.bf16.mxu0 0
  %367 = vmatpush1.bf16.msra.mxu0 %v268
  %368 = vmatprep.subr.bf16.mxu0 0
  %369 = vmatpush1.bf16.msra.mxu0 %v269
  %370 = vmatprep.subr.bf16.mxu0 0
  %371 = vmatpush1.bf16.msra.mxu0 %v270
  %372 = vmatprep.subr.bf16.mxu0 0
  %373 = vmatpush1.bf16.msra.mxu0 %v271
  %374 = vmatprep.subr.bf16.mxu0 0
  %375 = vmatpush1.bf16.msra.mxu0 %v272
  %376 = vmatprep.subr.bf16.mxu0 0
  %377 = vmatpush1.bf16.msra.mxu0 %v273
  %378 = vmatprep.mubr.bf16.mxu0 %v109
  %379 = vmatmul.mubr.bf16.gmra.mrb[0].mxu0 %v108
  %v380 = vpop.f32.mrb[0].mxu0
  %v381 = vadd.f32 %v341, %v380
  %v382 = vpop.f32.mrb[0].mxu0
  %v383 = vpop.f32.mrb[0].mxu0
  %v384 = vpop.f32.mrb[0].mxu0
  %385 = vdwg.mxu0
  %v386 = vmax.f32 %v381, 0.0
  %v387 = vpack.c.bf16 %v386, %v386
  %v388 = vld [vmem:[%s3] sm:$0xf]
  %v389 = vld [vmem:[%s3 + $0x4] sm:$0xf]
  %v390 = vld [vmem:[%s3 + $0x8] sm:$0xf]
  %v391 = vld [vmem:[%s3 + $0xc] sm:$0xf]
  %v392 = vld [vmem:[%s3 + $0x10] sm:$0xf]
  %v393 = vld [vmem:[%s3 + $0x14] sm:$0xf]
  %v394 = vld [vmem:[%s3 + $0x18] sm:$0xf]
  %v395 = vld [vmem:[%s3 + $0x1c] sm:$0xf]
  %v396 = vld [vmem:[%s3 + $0x20] sm:$0xf]
  %v397 = vld [vmem:[%s3 + $0x24] sm:$0xf]
  %v398 = vld [vmem:[%s3 + $0x28] sm:$0xf]
  %v399 = vld [vmem:[%s3 + $0x2c] sm:$0xf]
  %v400 = vld [vmem:[%s3 + $0x30] sm:$0xf]
  %v401 = vld [vmem:[%s3 + $0x34] sm:$0xf]
  %v402 = vld [vmem:[%s3 + $0x38] sm:$0xf]
  %v403 = vld [vmem:[%s3 + $0x3c] sm:$0xf]
  %v404 = vld [vmem:[%s4] sm:$0x1]
  %v406 = vlaneseq
  %v407 = vshrl.u32 %v406, 7
  %v408 = vsub.s32 0, %v407
  %v409 = vrot.slane %v404, %v408
  %v427 = vunpack.c.l.b16 %v388
  %v428 = vunpack.c.l.b16 %v389
  %v429 = vunpack.c.l.b16 %v390
  %v430 = vunpack.c.l.b16 %v391
  %v431 = vunpack.c.l.b16 %v392
  %v432 = vunpack.c.l.b16 %v393
  %v433 = vunpack.c.l.b16 %v394
  %v434 = vunpack.c.l.b16 %v395
  %v435 = vunpack.c.l.b16 %v396
  %v436 = vunpack.c.l.b16 %v397
  %v437 = vunpack.c.l.b16 %v398
  %v438 = vunpack.c.l.b16 %v399
  %v439 = vunpack.c.l.b16 %v400
  %v440 = vunpack.c.l.b16 %v401
  %v441 = vunpack.c.l.b16 %v402
  %v442 = vunpack.c.l.b16 %v403
  %v443 = vpack.c.b16 %v428, %v427
  %v444 = vpack.c.b16 %v430, %v429
  %v445 = vpack.c.b16 %v432, %v431
  %v446 = vpack.c.b16 %v434, %v433
  %v447 = vpack.c.b16 %v436, %v435
  %v448 = vpack.c.b16 %v438, %v437
  %v449 = vpack.c.b16 %v440, %v439
  %v450 = vpack.c.b16 %v442, %v441
  %459 = vmatprep.subr.bf16.mxu0 0
  %460 = vmatpush1.bf16.msra.mxu0 %v443
  %461 = vmatprep.subr.bf16.mxu0 0
  %462 = vmatpush1.bf16.msra.mxu0 %v444
  %463 = vmatprep.subr.bf16.mxu0 0
  %464 = vmatpush1.bf16.msra.mxu0 %v445
  %465 = vmatprep.subr.bf16.mxu0 0
  %466 = vmatpush1.bf16.msra.mxu0 %v446
  %467 = vmatprep.subr.bf16.mxu0 0
  %468 = vmatpush1.bf16.msra.mxu0 %v447
  %469 = vmatprep.subr.bf16.mxu0 0
  %470 = vmatpush1.bf16.msra.mxu0 %v448
  %471 = vmatprep.subr.bf16.mxu0 0
  %472 = vmatpush1.bf16.msra.mxu0 %v449
  %473 = vmatprep.subr.bf16.mxu0 0
  %474 = vmatpush1.bf16.msra.mxu0 %v450
  %475 = vmatprep.subr.bf16.mxu0 0
  %476 = vmatpush1.bf16.msra.mxu0 0
  %477 = vmatprep.subr.bf16.mxu0 0
  %478 = vmatpush1.bf16.msra.mxu0 0
  %479 = vmatprep.subr.bf16.mxu0 0
  %480 = vmatpush1.bf16.msra.mxu0 0
  %481 = vmatprep.subr.bf16.mxu0 0
  %482 = vmatpush1.bf16.msra.mxu0 0
  %483 = vmatprep.subr.bf16.mxu0 0
  %484 = vmatpush1.bf16.msra.mxu0 0
  %485 = vmatprep.subr.bf16.mxu0 0
  %486 = vmatpush1.bf16.msra.mxu0 0
  %487 = vmatprep.subr.bf16.mxu0 0
  %488 = vmatpush1.bf16.msra.mxu0 0
  %489 = vmatprep.subr.bf16.mxu0 0
  %490 = vmatpush1.bf16.msra.mxu0 0
  %491 = vmatprep.mubr.bf16.mxu0 0
  %492 = vmatmul.mubr.bf16.gmra.mrb[0].mxu0 %v387
  %v493 = vpop.f32.mrb[0].mxu0
  %v494 = vadd.f32 %v409, %v493
  %v495 = vpop.f32.mrb[0].mxu0
  %v496 = vpop.f32.mrb[0].mxu0
  %v497 = vpop.f32.mrb[0].mxu0
  %498 = vdwg.mxu0
  %v499 = vmax.f32 %v494, 0.0
  %v500 = vpack.c.bf16 %v499, %v499
  %v501 = vld [vmem:[%s5] sm:$0xf]
  %v502 = vld [vmem:[%s5 + $0x4] sm:$0xf]
  %v503 = vld [vmem:[%s5 + $0x8] sm:$0xf]
  %v504 = vld [vmem:[%s5 + $0xc] sm:$0xf]
  %v505 = vld [vmem:[%s5 + $0x10] sm:$0xf]
  %v506 = vld [vmem:[%s5 + $0x14] sm:$0xf]
  %v507 = vld [vmem:[%s5 + $0x18] sm:$0xf]
  %v508 = vld [vmem:[%s5 + $0x1c] sm:$0xf]
  %v509 = vld [vmem:[%s5 + $0x20] sm:$0xf]
  %v510 = vld [vmem:[%s5 + $0x24] sm:$0xf]
  %v511 = vld [vmem:[%s5 + $0x28] sm:$0xf]
  %v512 = vld [vmem:[%s5 + $0x2c] sm:$0xf]
  %v513 = vld [vmem:[%s5 + $0x30] sm:$0xf]
  %v514 = vld [vmem:[%s5 + $0x34] sm:$0xf]
  %v515 = vld [vmem:[%s5 + $0x38] sm:$0xf]
  %v516 = vld [vmem:[%s5 + $0x3c] sm:$0xf]
  %v517 = vld [vmem:[%s6] sm:$0x1]
  %v519 = vlaneseq
  %v520 = vshrl.u32 %v519, 7
  %v521 = vsub.s32 0, %v520
  %v522 = vrot.slane %v517, %v521
  %v540 = vunpack.c.l.b16 %v501
  %v541 = vunpack.c.l.b16 %v502
  %v542 = vunpack.c.l.b16 %v503
  %v543 = vunpack.c.l.b16 %v504
  %v544 = vunpack.c.l.b16 %v505
  %v545 = vunpack.c.l.b16 %v506
  %v546 = vunpack.c.l.b16 %v507
  %v547 = vunpack.c.l.b16 %v508
  %v548 = vunpack.c.l.b16 %v509
  %v549 = vunpack.c.l.b16 %v510
  %v550 = vunpack.c.l.b16 %v511
  %v551 = vunpack.c.l.b16 %v512
  %v552 = vunpack.c.l.b16 %v513
  %v553 = vunpack.c.l.b16 %v514
  %v554 = vunpack.c.l.b16 %v515
  %v555 = vunpack.c.l.b16 %v516
  %v556 = vpack.c.b16 %v541, %v540
  %v557 = vpack.c.b16 %v543, %v542
  %v558 = vpack.c.b16 %v545, %v544
  %v559 = vpack.c.b16 %v547, %v546
  %v560 = vpack.c.b16 %v549, %v548
  %v561 = vpack.c.b16 %v551, %v550
  %v562 = vpack.c.b16 %v553, %v552
  %v563 = vpack.c.b16 %v555, %v554
  %572 = vmatprep.subr.bf16.mxu0 0
  %573 = vmatpush1.bf16.msra.mxu0 %v556
  %574 = vmatprep.subr.bf16.mxu0 0
  %575 = vmatpush1.bf16.msra.mxu0 %v557
  %576 = vmatprep.subr.bf16.mxu0 0
  %577 = vmatpush1.bf16.msra.mxu0 %v558
  %578 = vmatprep.subr.bf16.mxu0 0
  %579 = vmatpush1.bf16.msra.mxu0 %v559
  %580 = vmatprep.subr.bf16.mxu0 0
  %581 = vmatpush1.bf16.msra.mxu0 %v560
  %582 = vmatprep.subr.bf16.mxu0 0
  %583 = vmatpush1.bf16.msra.mxu0 %v561
  %584 = vmatprep.subr.bf16.mxu0 0
  %585 = vmatpush1.bf16.msra.mxu0 %v562
  %586 = vmatprep.subr.bf16.mxu0 0
  %587 = vmatpush1.bf16.msra.mxu0 %v563
  %588 = vmatprep.subr.bf16.mxu0 0
  %589 = vmatpush1.bf16.msra.mxu0 0
  %590 = vmatprep.subr.bf16.mxu0 0
  %591 = vmatpush1.bf16.msra.mxu0 0
  %592 = vmatprep.subr.bf16.mxu0 0
  %593 = vmatpush1.bf16.msra.mxu0 0
  %594 = vmatprep.subr.bf16.mxu0 0
  %595 = vmatpush1.bf16.msra.mxu0 0
  %596 = vmatprep.subr.bf16.mxu0 0
  %597 = vmatpush1.bf16.msra.mxu0 0
  %598 = vmatprep.subr.bf16.mxu0 0
  %599 = vmatpush1.bf16.msra.mxu0 0
  %600 = vmatprep.subr.bf16.mxu0 0
  %601 = vmatpush1.bf16.msra.mxu0 0
  %602 = vmatprep.subr.bf16.mxu0 0
  %603 = vmatpush1.bf16.msra.mxu0 0
  %604 = vmatprep.mubr.bf16.mxu0 0
  %605 = vmatmul.mubr.bf16.gmra.mrb[0].mxu0 %v500
  %v606 = vpop.f32.mrb[0].mxu0
  %v607 = vadd.f32 %v522, %v606
  %v608 = vpop.f32.mrb[0].mxu0
  %v609 = vpop.f32.mrb[0].mxu0
  %v610 = vpop.f32.mrb[0].mxu0
  %611 = vdwg.mxu0
  %612 = vst [vmem:[%s7] sm:$0xff] %v607
  // Predicated region
  $region30: #{net_forward.5} parent=0 // pred_check
    _
  $region31: #{net_forward.5} parent=0 // pred_check_branch
    %614 = sbr.rel (0) target = $region33
  $region32: #{net_forward.5} parent=0 // pred_region
    _
  $region33: #{net_forward.5} parent=0 // pred_fallthru
    _
  // Predicated region
  $region34: #{net_forward.5} parent=0 // pred_check
    _
  $region35: #{net_forward.5} parent=0 // pred_check_branch
    %616 = sbr.rel (0) target = $region37
  $region36: #{net_forward.5} parent=0 // pred_region
    _
  $region37: #{net_forward.5} parent=0 // pred_fallthru
    _

</llo_original>
